<compile_context>
chip_gen: v6e
topology: v6e:2x2x1
jax: 0.10.0
libtpu: 0.0.40
codegen_flags: <defaults>
</compile_context>

<pallas_src>
import functools

import jax
import jax.numpy as jnp
from jax.experimental import pallas as pl
from jax.experimental.pallas import tpu as pltpu

_LANE = 128


def _spec(block_shape, index_map, buffer_count=None):
    """BlockSpec with optional pipeline_mode=pl.Buffered(n) (single-buffering
    when there is nothing to pipeline).  Falls back to a plain BlockSpec if the
    running JAX version does not expose the kwarg."""
    if buffer_count is None:
        return pl.BlockSpec(block_shape, index_map)
    try:
        return pl.BlockSpec(block_shape, index_map,
                            pipeline_mode=pl.Buffered(buffer_count))
    except TypeError:
        return pl.BlockSpec(block_shape, index_map)


# ---------------------------------------------------------------------------
# One-time preparation (hoisted out of the hot path).
# ---------------------------------------------------------------------------
def prepare_graph(a_hat):
    """Store the normalized adjacency persistently in bf16 (halves the N^2
    HBM bytes of the dominant operand; done once, not per forward call)."""
    return a_hat.astype(jnp.bfloat16)


def prepare_params(w1, b1, w2, b2):
    """bf16 weights (MXU-native) + zero-pad the class dim to 128 lanes so the
    epilogue store is an unmasked, lane-dense vst."""
    num_classes = w2.shape[1]
    o_pad = max(_LANE, ((num_classes + _LANE - 1) // _LANE) * _LANE)
    w2p = jnp.pad(w2.astype(jnp.float32), ((0, 0), (0, o_pad - num_classes)))
    b2p = jnp.pad(b2.reshape(1, -1).astype(jnp.float32),
                  ((0, 0), (0, o_pad - num_classes)))
    return (w1.astype(jnp.bfloat16),
            b1.reshape(1, -1).astype(jnp.float32),
            w2p.astype(jnp.bfloat16),
            b2p.astype(jnp.float32))


# ---------------------------------------------------------------------------
# Path 1: whole-graph fused kernel (A_hat read once, h never leaves VMEM).
# Used when the graph comfortably fits VMEM.
# ---------------------------------------------------------------------------
def _gcn_fused_kernel(a_ref, x_ref, w1_ref, b1_ref, w2_ref, b2_ref, o_ref):
    a = a_ref[...]                                                  # (N, N) bf16
    # layer 1: aggregate -> transform (in_feats < h_feats)
    ax = jnp.dot(a, x_ref[...], preferred_element_type=jnp.float32)
    h = jnp.dot(ax.astype(jnp.bfloat16), w1_ref[...],
                preferred_element_type=jnp.float32) + b1_ref[...]
    h = jnp.maximum(h, 0.0)                                         # ReLU
    # TODO(synk): nn.Dropout(p=0.5) is identity in eval mode; training-mode
    # dropout would use pltpu.prng_seed / pltpu.prng_random_bits here.
    # layer 2: aggregate -> transform (only the N x H tensor is cast to bf16)
    ah = jnp.dot(a, h.astype(jnp.bfloat16), preferred_element_type=jnp.float32)
    out = jnp.dot(ah.astype(jnp.bfloat16), w2_ref[...],
                  preferred_element_type=jnp.float32) + b2_ref[...]
    o_ref[...] = out.astype(o_ref.dtype)


def _gcn_fused(a_bf, x_bf, w1_bf, b1, w2p_bf, b2p):
    n, f = x_bf.shape
    h_feats = w1_bf.shape[1]
    o_pad = w2p_bf.shape[1]
    flops = 2 * n * n * (f + h_feats) + 2 * n * f * h_feats + 2 * n * h_feats * o_pad
    bytes_accessed = 2 * (n * n + n * f + n * o_pad) + 2 * (f * h_feats + h_feats * o_pad)
    return pl.pallas_call(
        _gcn_fused_kernel,
        out_shape=jax.ShapeDtypeStruct((n, o_pad), jnp.bfloat16),
        grid_spec=pltpu.PrefetchScalarGridSpec(
            num_scalar_prefetch=0,
            grid=(1,),
            # grid=(1,): nothing to pipeline, so single-buffer every input
            # (halves the VMEM footprint, A_hat being the big one).
            in_specs=[
                _spec((n, n), lambda i: (0, 0), 1),            # A_hat bf16
                _spec((n, f), lambda i: (0, 0), 1),            # X bf16
                _spec((f, h_feats), lambda i: (0, 0), 1),      # W1 bf16
                _spec((1, h_feats), lambda i: (0, 0), 1),      # b1 f32
                _spec((h_feats, o_pad), lambda i: (0, 0), 1),  # W2 (padded) bf16
                _spec((1, o_pad), lambda i: (0, 0), 1),        # b2 (padded) f32
            ],
            out_specs=pl.BlockSpec((n, o_pad), lambda i: (0, 0)),
        ),
        compiler_params=pltpu.CompilerParams(
            dimension_semantics=("arbitrary",),
            vmem_limit_bytes=48 * 1024 * 1024,
        ),
        cost_estimate=pl.CostEstimate(flops=flops, transcendentals=0,
                                      bytes_accessed=bytes_accessed),
    )(a_bf, x_bf, w1_bf, b1, w2p_bf, b2p)


# ---------------------------------------------------------------------------
# Path 2: row/K-tiled GraphConv kernel (scalable; parallel row axis for the
# two v7x TensorCores, bounded VMEM).  y = maybe_relu((A @ X) @ W + b).
# ---------------------------------------------------------------------------
def _graphconv_tiled_kernel(a_ref, x_ref, w_ref, b_ref, o_ref, acc_ref, *, relu):
    k = pl.program_id(1)

    @pl.when(k == 0)
    def _():
        acc_ref[...] = jnp.zeros_like(acc_ref)

    # Aggregate: accumulate A[i_tile, k_tile] @ X[k_tile] in f32.
    acc_ref[...] += jnp.dot(a_ref[...], x_ref[...],
                            preferred_element_type=jnp.float32)

    @pl.when(k == pl.num_programs(1) - 1)
    def _():
        # Transform once per row tile (bf16 operands, f32 accumulation).
        y = jnp.dot(acc_ref[...].astype(jnp.bfloat16), w_ref[...],
                    preferred_element_type=jnp.float32) + b_ref[...]
        if relu:
            y = jnp.maximum(y, 0.0)
        # TODO(synk): training-mode dropout (p=0.5) would mask `y` here for
        # layer 1; identity in eval mode.
        o_ref[...] = y.astype(o_ref.dtype)


def _graphconv_tiled(a_bf, x_bf, w_bf, b_f32, *, relu, tm, tk):
    n = a_bf.shape[0]
    f = x_bf.shape[1]
    o = w_bf.shape[1]
    assert n % tm == 0 and n % tk == 0
    grid = (n // tm, n // tk)
    flops = 2 * n * n * f + 2 * n * f * o
    bytes_accessed = 2 * (n * n + n * f + n * o + f * o)
    return pl.pallas_call(
        functools.partial(_graphconv_tiled_kernel, relu=relu),
        out_shape=jax.ShapeDtypeStruct((n, o), jnp.bfloat16),
        grid_spec=pltpu.PrefetchScalarGridSpec(
            num_scalar_prefetch=0,
            grid=grid,
            in_specs=[
                pl.BlockSpec((tm, tk), lambda i, k: (i, k)),   # A row/K tile
                pl.BlockSpec((tk, f), lambda i, k: (k, 0)),    # X K tile
                _spec((f, o), lambda i, k: (0, 0), 1),         # W resident
                _spec((1, o), lambda i, k: (0, 0), 1),         # b resident
            ],
            out_specs=pl.BlockSpec((tm, o), lambda i, k: (i, 0)),
            scratch_shapes=[pltpu.VMEM((tm, f), jnp.float32)],
        ),
        compiler_params=pltpu.CompilerParams(
            dimension_semantics=("parallel", "arbitrary"),
            vmem_limit_bytes=32 * 1024 * 1024,
        ),
        cost_estimate=pl.CostEstimate(flops=flops, transcendentals=0,
                                      bytes_accessed=bytes_accessed),
    )(a_bf, x_bf, w_bf, b_f32)


def _pick_tiles(n):
    """Row tile (MXU M) and adjacency-column tile (K).  256-wide tiles match
    the v6e/v7x 256x256 MXU; 128 is the natural fallback (and fine on v5e)."""
    def pick(cands):
        for t in cands:
            if n % t == 0 and n > t:
                return t
        for t in cands:
            if n % t == 0:
                return t
        return n
    return pick((256, 128, 8)), pick((512, 256, 128, 8))


# ---------------------------------------------------------------------------
# Public forward.
# ---------------------------------------------------------------------------
@functools.partial(jax.jit, static_argnames=("num_classes", "force_tiled"))
def gcn_forward(a_bf, x, params, *, num_classes, force_tiled=False):
    """GCN forward: conv1 -> relu -> dropout(eval) -> conv2."""
    w1_bf, b1, w2p_bf, b2p = params
    n, f = x.shape
    h_feats = w1_bf.shape[1]
    o_pad = w2p_bf.shape[1]
    x_bf = x.astype(jnp.bfloat16)

    # Rough single-buffered VMEM footprint of the whole-graph-resident path:
    # A_hat + X + (ax/h/ah f32 intermediates) + padded output.
    fused_bytes = 2 * n * n + 2 * n * f + 4 * n * (f + 2 * h_feats) + 4 * n * o_pad
    use_fused = (not force_tiled) and fused_bytes <= 20 * 1024 * 1024

    if use_fused:
        out = _gcn_fused(a_bf, x_bf, w1_bf, b1, w2p_bf, b2p)
    else:
        tm, tk = _pick_tiles(n)
        h = _graphconv_tiled(a_bf, x_bf, w1_bf, b1, relu=True, tm=tm, tk=tk)
        out = _graphconv_tiled(a_bf, h, w2p_bf, b2p, relu=False, tm=tm, tk=tk)
    return out[:, :num_classes].astype(jnp.float32)


if __name__ == "__main__":
    N, IN_FEATS, H_FEATS, NUM_CLASSES = 512, 16, 32, 8

    key = jax.random.PRNGKey(0)
    k_adj, k_x, k_w1, k_b1, k_w2, k_b2 = jax.random.split(key, 6)

    # Synthetic undirected graph with self-loops; DGL 'both' normalization.
    u = jax.random.uniform(k_adj, (N, N))
    adj = ((u + u.T) > 1.4).astype(jnp.float32)
    adj = jnp.maximum(adj, jnp.eye(N, dtype=jnp.float32))
    deg = adj.sum(axis=1)
    d_inv_sqrt = 1.0 / jnp.sqrt(deg)
    a_hat = adj * d_inv_sqrt[:, None] * d_inv_sqrt[None, :]    # D^-1/2 A D^-1/2

    # Node features and GraphConv parameters.
    x = jax.random.normal(k_x, (N, IN_FEATS), jnp.float32)
    w1 = jax.random.normal(k_w1, (IN_FEATS, H_FEATS), jnp.float32) / jnp.sqrt(IN_FEATS)
    b1 = 0.1 * jax.random.normal(k_b1, (H_FEATS,), jnp.float32)
    w2 = jax.random.normal(k_w2, (H_FEATS, NUM_CLASSES), jnp.float32) / jnp.sqrt(H_FEATS)
    b2 = 0.1 * jax.random.normal(k_b2, (NUM_CLASSES,), jnp.float32)

    # One-time prep, outside the hot path (bf16 adjacency, bf16 / padded params).
    a_bf = prepare_graph(a_hat)
    params = prepare_params(w1, b1, w2, b2)

    # Run both the fused (VMEM-resident) and the tiled (scalable) paths.
    out_fused = jax.block_until_ready(
        gcn_forward(a_bf, x, params, num_classes=NUM_CLASSES, force_tiled=False))
    out_tiled = jax.block_until_ready(
        gcn_forward(a_bf, x, params, num_classes=NUM_CLASSES, force_tiled=True))

    # Plain-JAX f32 reference mirroring the kernel's bf16 operand casts.
    hi = jax.lax.Precision.HIGHEST
    f32 = lambda t: t.astype(jnp.float32)
    w1_bf, b1p, w2p_bf, b2p = params
    ab, xb = f32(a_bf), f32(x.astype(jnp.bfloat16))
    ax = jnp.dot(ab, xb, precision=hi)
    h_ref = jnp.maximum(
        jnp.dot(f32(ax.astype(jnp.bfloat16)), f32(w1_bf), precision=hi) + b1p, 0.0)
    ah = jnp.dot(ab, f32(h_ref.astype(jnp.bfloat16)), precision=hi)
    ref = (jnp.dot(f32(ah.astype(jnp.bfloat16)), f32(w2p_bf), precision=hi)
           + b2p)[:, :NUM_CLASSES]

    for name, out in (("fused", out_fused), ("tiled", out_tiled)):
        assert out.shape == (N, NUM_CLASSES), (name, out.shape)
        err = float(jnp.max(jnp.abs(out - ref)))
        assert jnp.allclose(out, ref, atol=1e-2, rtol=1e-2), f"{name}: max abs err {err}"

    print("KERNEL_OK")
</pallas_src>

<mosaic_0001>
module attributes {stable_mosaic.version = 11 : i64} {
  func.func @_gcn_fused_kernel(%arg0: i32, %arg1: memref<512x512xbf16, #tpu.memory_space<vmem>>, %arg2: memref<512x16xbf16, #tpu.memory_space<vmem>>, %arg3: memref<16x32xbf16, #tpu.memory_space<vmem>>, %arg4: memref<1x32xf32, #tpu.memory_space<vmem>>, %arg5: memref<32x128xbf16, #tpu.memory_space<vmem>>, %arg6: memref<1x128xf32, #tpu.memory_space<vmem>>, %arg7: memref<512x128xbf16, #tpu.memory_space<vmem>>) attributes {dimension_semantics = [#tpu.dimension_semantics<arbitrary>], iteration_bounds = array<i64: 1>, scalar_prefetch = 0 : i64, scratch_operands = 0 : i64, tpu.core_type = #tpu.core_type<tc>, window_params = [{pipeline_mode = #tpu.pipeline_mode<synchronous>, transform_indices = @transform_0, window_bounds = array<i64: 512, 512>}, {pipeline_mode = #tpu.pipeline_mode<synchronous>, transform_indices = @transform_1, window_bounds = array<i64: 512, 16>}, {pipeline_mode = #tpu.pipeline_mode<synchronous>, transform_indices = @transform_2, window_bounds = array<i64: 16, 32>}, {pipeline_mode = #tpu.pipeline_mode<synchronous>, transform_indices = @transform_3, window_bounds = array<i64: 1, 32>}, {pipeline_mode = #tpu.pipeline_mode<synchronous>, transform_indices = @transform_4, window_bounds = array<i64: 32, 128>}, {pipeline_mode = #tpu.pipeline_mode<synchronous>, transform_indices = @transform_5, window_bounds = array<i64: 1, 128>}, {pipeline_mode = #tpu.pipeline_mode<synchronous>, transform_indices = @transform_6, window_bounds = array<i64: 512, 128>}]} {
    %c0 = arith.constant 0 : index
    %c0_0 = arith.constant 0 : index
    %0 = vector.load %arg1[%c0, %c0_0] : memref<512x512xbf16, #tpu.memory_space<vmem>>, vector<512x512xbf16>
    %c0_1 = arith.constant 0 : index
    %c0_2 = arith.constant 0 : index
    %1 = vector.load %arg2[%c0_1, %c0_2] : memref<512x16xbf16, #tpu.memory_space<vmem>>, vector<512x16xbf16>
    %cst = arith.constant dense<0.000000e+00> : vector<512x16xf32>
    %2 = tpu.matmul %0, %1, %cst {dimension_numbers = #tpu.dot_dimension_numbers<[1], [0], [0], [1], [0, 0, 1, 1], [], []>} : vector<512x512xbf16>, vector<512x16xbf16>, vector<512x16xf32> -> vector<512x16xf32>
    %3 = arith.truncf %2 : vector<512x16xf32> to vector<512x16xbf16>
    %c0_3 = arith.constant 0 : index
    %c0_4 = arith.constant 0 : index
    %4 = vector.load %arg3[%c0_3, %c0_4] : memref<16x32xbf16, #tpu.memory_space<vmem>>, vector<16x32xbf16>
    %cst_5 = arith.constant dense<0.000000e+00> : vector<512x32xf32>
    %5 = tpu.matmul %3, %4, %cst_5 {dimension_numbers = #tpu.dot_dimension_numbers<[1], [0], [0], [1], [0, 0, 1, 1], [], []>} : vector<512x16xbf16>, vector<16x32xbf16>, vector<512x32xf32> -> vector<512x32xf32>
    %c0_6 = arith.constant 0 : index
    %c0_7 = arith.constant 0 : index
    %6 = vector.load %arg4[%c0_6, %c0_7] : memref<1x32xf32, #tpu.memory_space<vmem>>, vector<1x32xf32>
    %7 = vector.broadcast %6 : vector<1x32xf32> to vector<512x32xf32>
    %8 = arith.addf %5, %7 : vector<512x32xf32>
    %cst_8 = arith.constant 0.000000e+00 : f32
    %9 = vector.broadcast %cst_8 : f32 to vector<512x32xf32>
    %10 = arith.maximumf %8, %9 : vector<512x32xf32>
    %11 = arith.truncf %10 : vector<512x32xf32> to vector<512x32xbf16>
    %cst_9 = arith.constant dense<0.000000e+00> : vector<512x32xf32>
    %12 = tpu.matmul %0, %11, %cst_9 {dimension_numbers = #tpu.dot_dimension_numbers<[1], [0], [0], [1], [0, 0, 1, 1], [], []>} : vector<512x512xbf16>, vector<512x32xbf16>, vector<512x32xf32> -> vector<512x32xf32>
    %13 = arith.truncf %12 : vector<512x32xf32> to vector<512x32xbf16>
    %c0_10 = arith.constant 0 : index
    %c0_11 = arith.constant 0 : index
    %14 = vector.load %arg5[%c0_10, %c0_11] : memref<32x128xbf16, #tpu.memory_space<vmem>>, vector<32x128xbf16>
    %cst_12 = arith.constant dense<0.000000e+00> : vector<512x128xf32>
    %15 = tpu.matmul %13, %14, %cst_12 {dimension_numbers = #tpu.dot_dimension_numbers<[1], [0], [0], [1], [0, 0, 1, 1], [], []>} : vector<512x32xbf16>, vector<32x128xbf16>, vector<512x128xf32> -> vector<512x128xf32>
    %c0_13 = arith.constant 0 : index
    %c0_14 = arith.constant 0 : index
    %16 = vector.load %arg6[%c0_13, %c0_14] : memref<1x128xf32, #tpu.memory_space<vmem>>, vector<1x128xf32>
    %17 = vector.broadcast %16 : vector<1x128xf32> to vector<512x128xf32>
    %18 = arith.addf %15, %17 : vector<512x128xf32>
    %19 = arith.truncf %18 : vector<512x128xf32> to vector<512x128xbf16>
    %c0_15 = arith.constant 0 : index
    %c0_16 = arith.constant 0 : index
    %20 = vector.load %arg7[%c0_15, %c0_16] : memref<512x128xbf16, #tpu.memory_space<vmem>>, vector<512x128xbf16>
    tpu.vector_store %arg7[%c0_15, %c0_16], %19 {strides = array<i32>} : memref<512x128xbf16, #tpu.memory_space<vmem>>, vector<512x128xbf16>,
    return
  }
  func.func @transform_0(%arg0: i32) -> (i32, i32) {
    %c0_i32 = arith.constant 0 : i32
    %c0_i32_0 = arith.constant 0 : i32
    %c0_i32_1 = arith.constant 0 : i32
    return %c0_i32, %c0_i32_0 : i32, i32
  }
  func.func @transform_1(%arg0: i32) -> (i32, i32) {
    %c0_i32 = arith.constant 0 : i32
    %c0_i32_0 = arith.constant 0 : i32
    %c0_i32_1 = arith.constant 0 : i32
    return %c0_i32, %c0_i32_0 : i32, i32
  }
  func.func @transform_2(%arg0: i32) -> (i32, i32) {
    %c0_i32 = arith.constant 0 : i32
    %c0_i32_0 = arith.constant 0 : i32
    %c0_i32_1 = arith.constant 0 : i32
    return %c0_i32, %c0_i32_0 : i32, i32
  }
  func.func @transform_3(%arg0: i32) -> (i32, i32) {
    %c0_i32 = arith.constant 0 : i32
    %c0_i32_0 = arith.constant 0 : i32
    %c0_i32_1 = arith.constant 0 : i32
    return %c0_i32, %c0_i32_0 : i32, i32
  }
  func.func @transform_4(%arg0: i32) -> (i32, i32) {
    %c0_i32 = arith.constant 0 : i32
    %c0_i32_0 = arith.constant 0 : i32
    %c0_i32_1 = arith.constant 0 : i32
    return %c0_i32, %c0_i32_0 : i32, i32
  }
  func.func @transform_5(%arg0: i32) -> (i32, i32) {
    %c0_i32 = arith.constant 0 : i32
    %c0_i32_0 = arith.constant 0 : i32
    %c0_i32_1 = arith.constant 0 : i32
    return %c0_i32, %c0_i32_0 : i32, i32
  }
  func.func @transform_6(%arg0: i32) -> (i32, i32) {
    %c0_i32 = arith.constant 0 : i32
    %c0_i32_0 = arith.constant 0 : i32
    %c0_i32_1 = arith.constant 0 : i32
    return %c0_i32, %c0_i32_0 : i32, i32
  }
}

</mosaic_0001>

<llo_original>
// kernel: gcn_forward.1
$region0: #{gcn_forward.1}
  #allocation0 [shape = 'u32[]', space=smem, size = 0x4, offset = 0x4, fixed_abs, tag = 'smem constant byte address 0x4 - core index']
  #allocation1 [shape = 'u32[144,128]{1,0:T(1,128)}', space=vmem, size = 0x12000, scoped, tag = 'internal scratch']
  %s0 = inlined_call_operand.hbm [shape: bf16[512,512], index: 0, kind: input, shape index: {}]
  %s1 = inlined_call_operand.vmem [shape: bf16[512,16], index: 1, kind: input, shape index: {}]
  %s2 = inlined_call_operand.vmem [shape: bf16[16,32], index: 2, kind: input, shape index: {}]
  %s3 = inlined_call_operand.vmem [shape: f32[1,32], index: 3, kind: input, shape index: {}]
  %s4 = inlined_call_operand.vmem [shape: bf16[32,128], index: 4, kind: input, shape index: {}]
  %s5 = inlined_call_operand.vmem [shape: f32[1,128], index: 5, kind: input, shape index: {}]
  %s6 = inlined_call_operand.vmem [shape: bf16[512,128], index: 6, kind: output, shape index: {}]
  %s7 = sld [smem:[#allocation0]]
  $region38: #{gcn_forward.1} parent=0
    _
  %s9 = ssub.s32 1, %s7
  %s10 = scalar_select 0, %s9, %s7
  $region1: #{gcn_forward.1} parent=0
    #allocation2 [shape = 'u8[524288]{0}', space=vmem, size = 0x80000, scoped, tag = 'input window, operand 0, single buffered']
    #allocation3 [shape = 's32[1]{0}', space=sflag, size = 0x4, scoped, tag = 'scoped memory for gcn_forward.1']
    %11 = vsyncpa [#allocation3], 0
    // Predicated region
    $region2: #{gcn_forward.1} parent=1 // pred_check
      _
    $region3: #{gcn_forward.1} parent=1 // pred_check_branch
      %13 = sbr.rel (0) target = $region5
    $region4: #{gcn_forward.1} parent=1 // pred_region
      %s15 = ssub.s32 16384, 16384
      %16 = vsyncadd [#allocation3], %s15
      %s17 = sshll.u32 [#allocation2], 4
      %s18 = int_to_ptr.vmem [resolvable:$true] %s17
      %23 = dma.hbm_to_vmem [thread:$0]  %s0, 16384, %s18, [#allocation3], 256, 256, 16
    $region5: #{gcn_forward.1} parent=1 // pred_fallthru
      _
    // Predicated region
    $region6: #{gcn_forward.1} parent=1 // pred_check
      _
    $region7: #{gcn_forward.1} parent=1 // pred_check_branch
      %25 = sbr.rel (0) target = $region9
    $region8: #{gcn_forward.1} parent=1 // pred_region
      _
    $region9: #{gcn_forward.1} parent=1 // pred_fallthru
      _
    // Predicated region
    $region10: #{gcn_forward.1} parent=1 // pred_check
      _
    $region11: #{gcn_forward.1} parent=1 // pred_check_branch
      %27 = sbr.rel (0) target = $region13
    $region12: #{gcn_forward.1} parent=1 // pred_region
      _
    $region13: #{gcn_forward.1} parent=1 // pred_fallthru
      _
    // Predicated region
    $region14: #{gcn_forward.1} parent=1 // pred_check
      _
    $region15: #{gcn_forward.1} parent=1 // pred_check_branch
      %29 = sbr.rel (0) target = $region17
    $region16: #{gcn_forward.1} parent=1 // pred_region
      _
    $region17: #{gcn_forward.1} parent=1 // pred_fallthru
      _
    // Predicated region
    $region18: #{gcn_forward.1} parent=1 // pred_check
      _
    $region19: #{gcn_forward.1} parent=1 // pred_check_branch
      %31 = sbr.rel (0) target = $region21
    $region20: #{gcn_forward.1} parent=1 // pred_region
      _
    $region21: #{gcn_forward.1} parent=1 // pred_fallthru
      _
    // Predicated region
    $region22: #{gcn_forward.1} parent=1 // pred_check
      _
    $region23: #{gcn_forward.1} parent=1 // pred_check_branch
      %33 = sbr.rel (0) target = $region25
    $region24: #{gcn_forward.1} parent=1 // pred_region
      _
    $region25: #{gcn_forward.1} parent=1 // pred_fallthru
      _
    // Predicated region
    $region26: #{gcn_forward.1} parent=1 // pred_check
      _
    $region27: #{gcn_forward.1} parent=1 // pred_check_branch
      %35 = sbr.rel (0) target = $region29
    $region28: #{gcn_forward.1} parent=1 // pred_region
      %36 = dma.done [#allocation3], 16384
    $region29: #{gcn_forward.1} parent=1 // pred_fallthru
      _
    %v38 = vld [vmem:[#allocation2] sm:$0xff]
    %v39 = vld [vmem:[#allocation2 + $0x8] sm:$0xff]
    %v40 = vld [vmem:[#allocation2 + $0x10] sm:$0xff]
    %v41 = vld [vmem:[#allocation2 + $0x18] sm:$0xff]
    %v42 = vld [vmem:[#allocation2 + $0x20] sm:$0xff]
    %v43 = vld [vmem:[#allocation2 + $0x28] sm:$0xff]
    %v44 = vld [vmem:[#allocation2 + $0x30] sm:$0xff]
    %v45 = vld [vmem:[#allocation2 + $0x38] sm:$0xff]
    %v46 = vld [vmem:[#allocation2 + $0x40] sm:$0xff]
    %v47 = vld [vmem:[#allocation2 + $0x48] sm:$0xff]
    %v48 = vld [vmem:[#allocation2 + $0x50] sm:$0xff]
    %v49 = vld [vmem:[#allocation2 + $0x58] sm:$0xff]
    %v50 = vld [vmem:[#allocation2 + $0x60] sm:$0xff]
    %v51 = vld [vmem:[#allocation2 + $0x68] sm:$0xff]
    %v52 = vld [vmem:[#allocation2 + $0x70] sm:$0xff]
    %v53 = vld [vmem:[#allocation2 + $0x78] sm:$0xff]
    %v54 = vld [vmem:[#allocation2 + $0x80] sm:$0xff]
    %v55 = vld [vmem:[#allocation2 + $0x88] sm:$0xff]
    %v56 = vld [vmem:[#allocation2 + $0x90] sm:$0xff]
    %v57 = vld [vmem:[#allocation2 + $0x98] sm:$0xff]
    %v58 = vld [vmem:[#allocation2 + $0xa0] sm:$0xff]
    %v59 = vld [vmem:[#allocation2 + $0xa8] sm:$0xff]
    %v60 = vld [vmem:[#allocation2 + $0xb0] sm:$0xff]
    %v61 = vld [vmem:[#allocation2 + $0xb8] sm:$0xff]
    %v62 = vld [vmem:[#allocation2 + $0xc0] sm:$0xff]
    %v63 = vld [vmem:[#allocation2 + $0xc8] sm:$0xff]
    %v64 = vld [vmem:[#allocation2 + $0xd0] sm:$0xff]
    %v65 = vld [vmem:[#allocation2 + $0xd8] sm:$0xff]
    %v66 = vld [vmem:[#allocation2 + $0xe0] sm:$0xff]
    %v67 = vld [vmem:[#allocation2 + $0xe8] sm:$0xff]
    %v68 = vld [vmem:[#allocation2 + $0xf0] sm:$0xff]
    %v69 = vld [vmem:[#allocation2 + $0xf8] sm:$0xff]
    %v70 = vld [vmem:[#allocation2 + $0x100] sm:$0xff]
    %v71 = vld [vmem:[#allocation2 + $0x108] sm:$0xff]
    %v72 = vld [vmem:[#allocation2 + $0x110] sm:$0xff]
    %v73 = vld [vmem:[#allocation2 + $0x118] sm:$0xff]
    %v74 = vld [vmem:[#allocation2 + $0x120] sm:$0xff]
    %v75 = vld [vmem:[#allocation2 + $0x128] sm:$0xff]
    %v76 = vld [vmem:[#allocation2 + $0x130] sm:$0xff]
    %v77 = vld [vmem:[#allocation2 + $0x138] sm:$0xff]
    %v78 = vld [vmem:[#allocation2 + $0x140] sm:$0xff]
    %v79 = vld [vmem:[#allocation2 + $0x148] sm:$0xff]
    %v80 = vld [vmem:[#allocation2 + $0x150] sm:$0xff]
    %v81 = vld [vmem:[#allocation2 + $0x158] sm:$0xff]
    %v82 = vld [vmem:[#allocation2 + $0x160] sm:$0xff]
    %v83 = vld [vmem:[#allocation2 + $0x168] sm:$0xff]
    %v84 = vld [vmem:[#allocation2 + $0x170] sm:$0xff]
    %v85 = vld [vmem:[#allocation2 + $0x178] sm:$0xff]
    %v86 = vld [vmem:[#allocation2 + $0x180] sm:$0xff]
    %v87 = vld [vmem:[#allocation2 + $0x188] sm:$0xff]
    %v88 = vld [vmem:[#allocation2 + $0x190] sm:$0xff]
    %v89 = vld [vmem:[#allocation2 + $0x198] sm:$0xff]
    %v90 = vld [vmem:[#allocation2 + $0x1a0] sm:$0xff]
    %v91 = vld [vmem:[#allocation2 + $0x1a8] sm:$0xff]
    %v92 = vld [vmem:[#allocation2 + $0x1b0] sm:$0xff]
    %v93 = vld [vmem:[#allocation2 + $0x1b8] sm:$0xff]
    %v94 = vld [vmem:[#allocation2 + $0x1c0] sm:$0xff]
    %v95 = vld [vmem:[#allocation2 + $0x1c8] sm:$0xff]
    %v96 = vld [vmem:[#allocation2 + $0x1d0] sm:$0xff]
    %v97 = vld [vmem:[#allocation2 + $0x1d8] sm:$0xff]
    %v98 = vld [vmem:[#allocation2 + $0x1e0] sm:$0xff]
    %v99 = vld [vmem:[#allocation2 + $0x1e8] sm:$0xff]
    %v100 = vld [vmem:[#allocation2 + $0x1f0] sm:$0xff]
    %v101 = vld [vmem:[#allocation2 + $0x1f8] sm:$0xff]
    %v102 = vld [vmem:[#allocation2 + $0x200] sm:$0xff]
    %v103 = vld [vmem:[#allocation2 + $0x208] sm:$0xff]
    %v104 = vld [vmem:[#allocation2 + $0x210] sm:$0xff]
    %v105 = vld [vmem:[#allocation2 + $0x218] sm:$0xff]
    %v106 = vld [vmem:[#allocation2 + $0x220] sm:$0xff]
    %v107 = vld [vmem:[#allocation2 + $0x228] sm:$0xff]
    %v108 = vld [vmem:[#allocation2 + $0x230] sm:$0xff]
    %v109 = vld [vmem:[#allocation2 + $0x238] sm:$0xff]
    %v110 = vld [vmem:[#allocation2 + $0x240] sm:$0xff]
    %v111 = vld [vmem:[#allocation2 + $0x248] sm:$0xff]
    %v112 = vld [vmem:[#allocation2 + $0x250] sm:$0xff]
    %v113 = vld [vmem:[#allocation2 + $0x258] sm:$0xff]
    %v114 = vld [vmem:[#allocation2 + $0x260] sm:$0xff]
    %v115 = vld [vmem:[#allocation2 + $0x268] sm:$0xff]
    %v116 = vld [vmem:[#allocation2 + $0x270] sm:$0xff]
    %v117 = vld [vmem:[#allocation2 + $0x278] sm:$0xff]
    %v118 = vld [vmem:[#allocation2 + $0x280] sm:$0xff]
    %v119 = vld [vmem:[#allocation2 + $0x288] sm:$0xff]
    %v120 = vld [vmem:[#allocation2 + $0x290] sm:$0xff]
    %v121 = vld [vmem:[#allocation2 + $0x298] sm:$0xff]
    %v122 = vld [vmem:[#allocation2 + $0x2a0] sm:$0xff]
    %v123 = vld [vmem:[#allocation2 + $0x2a8] sm:$0xff]
    %v124 = vld [vmem:[#allocation2 + $0x2b0] sm:$0xff]
    %v125 = vld [vmem:[#allocation2 + $0x2b8] sm:$0xff]
    %v126 = vld [vmem:[#allocation2 + $0x2c0] sm:$0xff]
    %v127 = vld [vmem:[#allocation2 + $0x2c8] sm:$0xff]
    %v128 = vld [vmem:[#allocation2 + $0x2d0] sm:$0xff]
    %v129 = vld [vmem:[#allocation2 + $0x2d8] sm:$0xff]
    %v130 = vld [vmem:[#allocation2 + $0x2e0] sm:$0xff]
    %v131 = vld [vmem:[#allocation2 + $0x2e8] sm:$0xff]
    %v132 = vld [vmem:[#allocation2 + $0x2f0] sm:$0xff]
    %v133 = vld [vmem:[#allocation2 + $0x2f8] sm:$0xff]
    %v134 = vld [vmem:[#allocation2 + $0x300] sm:$0xff]
    %v135 = vld [vmem:[#allocation2 + $0x308] sm:$0xff]
    %v136 = vld [vmem:[#allocation2 + $0x310] sm:$0xff]
    %v137 = vld [vmem:[#allocation2 + $0x318] sm:$0xff]
    %v138 = vld [vmem:[#allocation2 + $0x320] sm:$0xff]
    %v139 = vld [vmem:[#allocation2 + $0x328] sm:$0xff]
    %v140 = vld [vmem:[#allocation2 + $0x330] sm:$0xff]
    %v141 = vld [vmem:[#allocation2 + $0x338] sm:$0xff]
    %v142 = vld [vmem:[#allocation2 + $0x340] sm:$0xff]
    %v143 = vld [vmem:[#allocation2 + $0x348] sm:$0xff]
    %v144 = vld [vmem:[#allocation2 + $0x350] sm:$0xff]
    %v145 = vld [vmem:[#allocation2 + $0x358] sm:$0xff]
    %v146 = vld [vmem:[#allocation2 + $0x360] sm:$0xff]
    %v147 = vld [vmem:[#allocation2 + $0x368] sm:$0xff]
    %v148 = vld [vmem:[#allocation2 + $0x370] sm:$0xff]
    %v149 = vld [vmem:[#allocation2 + $0x378] sm:$0xff]
    %v150 = vld [vmem:[#allocation2 + $0x380] sm:$0xff]
    %v151 = vld [vmem:[#allocation2 + $0x388] sm:$0xff]
    %v152 = vld [vmem:[#allocation2 + $0x390] sm:$0xff]
    %v153 = vld [vmem:[#allocation2 + $0x398] sm:$0xff]
    %v154 = vld [vmem:[#allocation2 + $0x3a0] sm:$0xff]
    %v155 = vld [vmem:[#allocation2 + $0x3a8] sm:$0xff]
    %v156 = vld [vmem:[#allocation2 + $0x3b0] sm:$0xff]
    %v157 = vld [vmem:[#allocation2 + $0x3b8] sm:$0xff]
    %v158 = vld [vmem:[#allocation2 + $0x3c0] sm:$0xff]
    %v159 = vld [vmem:[#allocation2 + $0x3c8] sm:$0xff]
    %v160 = vld [vmem:[#allocation2 + $0x3d0] sm:$0xff]
    %v161 = vld [vmem:[#allocation2 + $0x3d8] sm:$0xff]
    %v162 = vld [vmem:[#allocation2 + $0x3e0] sm:$0xff]
    %v163 = vld [vmem:[#allocation2 + $0x3e8] sm:$0xff]
    %v164 = vld [vmem:[#allocation2 + $0x3f0] sm:$0xff]
    %v165 = vld [vmem:[#allocation2 + $0x3f8] sm:$0xff]
    %v166 = vld [vmem:[%s1] sm:$0xf]
    %v167 = vld [vmem:[%s1 + $0x4] sm:$0xf]
    %v168 = vld [vmem:[%s1 + $0x8] sm:$0xf]
    %v169 = vld [vmem:[%s1 + $0xc] sm:$0xf]
    %v170 = vld [vmem:[%s1 + $0x10] sm:$0xf]
    %v171 = vld [vmem:[%s1 + $0x14] sm:$0xf]
    %v172 = vld [vmem:[%s1 + $0x18] sm:$0xf]
    %v173 = vld [vmem:[%s1 + $0x1c] sm:$0xf]
    %v174 = vld [vmem:[%s1 + $0x20] sm:$0xf]
    %v175 = vld [vmem:[%s1 + $0x24] sm:$0xf]
    %v176 = vld [vmem:[%s1 + $0x28] sm:$0xf]
    %v177 = vld [vmem:[%s1 + $0x2c] sm:$0xf]
    %v178 = vld [vmem:[%s1 + $0x30] sm:$0xf]
    %v179 = vld [vmem:[%s1 + $0x34] sm:$0xf]
    %v180 = vld [vmem:[%s1 + $0x38] sm:$0xf]
    %v181 = vld [vmem:[%s1 + $0x3c] sm:$0xf]
    %v182 = vld [vmem:[%s1 + $0x40] sm:$0xf]
    %v183 = vld [vmem:[%s1 + $0x44] sm:$0xf]
    %v184 = vld [vmem:[%s1 + $0x48] sm:$0xf]
    %v185 = vld [vmem:[%s1 + $0x4c] sm:$0xf]
    %v186 = vld [vmem:[%s1 + $0x50] sm:$0xf]
    %v187 = vld [vmem:[%s1 + $0x54] sm:$0xf]
    %v188 = vld [vmem:[%s1 + $0x58] sm:$0xf]
    %v189 = vld [vmem:[%s1 + $0x5c] sm:$0xf]
    %v190 = vld [vmem:[%s1 + $0x60] sm:$0xf]
    %v191 = vld [vmem:[%s1 + $0x64] sm:$0xf]
    %v192 = vld [vmem:[%s1 + $0x68] sm:$0xf]
    %v193 = vld [vmem:[%s1 + $0x6c] sm:$0xf]
    %v194 = vld [vmem:[%s1 + $0x70] sm:$0xf]
    %v195 = vld [vmem:[%s1 + $0x74] sm:$0xf]
    %v196 = vld [vmem:[%s1 + $0x78] sm:$0xf]
    %v197 = vld [vmem:[%s1 + $0x7c] sm:$0xf]
    %v198 = vld [vmem:[%s1 + $0x80] sm:$0xf]
    %v199 = vld [vmem:[%s1 + $0x84] sm:$0xf]
    %v200 = vld [vmem:[%s1 + $0x88] sm:$0xf]
    %v201 = vld [vmem:[%s1 + $0x8c] sm:$0xf]
    %v202 = vld [vmem:[%s1 + $0x90] sm:$0xf]
    %v203 = vld [vmem:[%s1 + $0x94] sm:$0xf]
    %v204 = vld [vmem:[%s1 + $0x98] sm:$0xf]
    %v205 = vld [vmem:[%s1 + $0x9c] sm:$0xf]
    %v206 = vld [vmem:[%s1 + $0xa0] sm:$0xf]
    %v207 = vld [vmem:[%s1 + $0xa4] sm:$0xf]
    %v208 = vld [vmem:[%s1 + $0xa8] sm:$0xf]
    %v209 = vld [vmem:[%s1 + $0xac] sm:$0xf]
    %v210 = vld [vmem:[%s1 + $0xb0] sm:$0xf]
    %v211 = vld [vmem:[%s1 + $0xb4] sm:$0xf]
    %v212 = vld [vmem:[%s1 + $0xb8] sm:$0xf]
    %v213 = vld [vmem:[%s1 + $0xbc] sm:$0xf]
    %v214 = vld [vmem:[%s1 + $0xc0] sm:$0xf]
    %v215 = vld [vmem:[%s1 + $0xc4] sm:$0xf]
    %v216 = vld [vmem:[%s1 + $0xc8] sm:$0xf]
    %v217 = vld [vmem:[%s1 + $0xcc] sm:$0xf]
    %v218 = vld [vmem:[%s1 + $0xd0] sm:$0xf]
    %v219 = vld [vmem:[%s1 + $0xd4] sm:$0xf]
    %v220 = vld [vmem:[%s1 + $0xd8] sm:$0xf]
    %v221 = vld [vmem:[%s1 + $0xdc] sm:$0xf]
    %v222 = vld [vmem:[%s1 + $0xe0] sm:$0xf]
    %v223 = vld [vmem:[%s1 + $0xe4] sm:$0xf]
    %v224 = vld [vmem:[%s1 + $0xe8] sm:$0xf]
    %v225 = vld [vmem:[%s1 + $0xec] sm:$0xf]
    %v226 = vld [vmem:[%s1 + $0xf0] sm:$0xf]
    %v227 = vld [vmem:[%s1 + $0xf4] sm:$0xf]
    %v228 = vld [vmem:[%s1 + $0xf8] sm:$0xf]
    %v229 = vld [vmem:[%s1 + $0xfc] sm:$0xf]
    %v358 = vunpack.c.l.b16 %v38
    %v359 = vunpack.c.h.b16 %v38
    %v360 = vunpack.c.l.b16 %v39
    %v361 = vunpack.c.h.b16 %v39
    %v362 = vunpack.c.l.b16 %v40
    %v363 = vunpack.c.h.b16 %v40
    %v364 = vunpack.c.l.b16 %v41
    %v365 = vunpack.c.h.b16 %v41
    %v366 = vunpack.c.l.b16 %v42
    %v367 = vunpack.c.h.b16 %v42
    %v368 = vunpack.c.l.b16 %v43
    %v369 = vunpack.c.h.b16 %v43
    %v370 = vunpack.c.l.b16 %v44
    %v371 = vunpack.c.h.b16 %v44
    %v372 = vunpack.c.l.b16 %v45
    %v373 = vunpack.c.h.b16 %v45
    %v374 = vunpack.c.l.b16 %v46
    %v375 = vunpack.c.h.b16 %v46
    %v376 = vunpack.c.l.b16 %v47
    %v377 = vunpack.c.h.b16 %v47
    %v378 = vunpack.c.l.b16 %v48
    %v379 = vunpack.c.h.b16 %v48
    %v380 = vunpack.c.l.b16 %v49
    %v381 = vunpack.c.h.b16 %v49
    %v382 = vunpack.c.l.b16 %v50
    %v383 = vunpack.c.h.b16 %v50
    %v384 = vunpack.c.l.b16 %v51
    %v385 = vunpack.c.h.b16 %v51
    %v386 = vunpack.c.l.b16 %v52
    %v387 = vunpack.c.h.b16 %v52
    %v388 = vunpack.c.l.b16 %v53
    %v389 = vunpack.c.h.b16 %v53
    %v390 = vunpack.c.l.b16 %v54
    %v391 = vunpack.c.h.b16 %v54
    %v392 = vunpack.c.l.b16 %v55
    %v393 = vunpack.c.h.b16 %v55
    %v394 = vunpack.c.l.b16 %v56
    %v395 = vunpack.c.h.b16 %v56
    %v396 = vunpack.c.l.b16 %v57
    %v397 = vunpack.c.h.b16 %v57
    %v398 = vunpack.c.l.b16 %v58
    %v399 = vunpack.c.h.b16 %v58
    %v400 = vunpack.c.l.b16 %v59
    %v401 = vunpack.c.h.b16 %v59
    %v402 = vunpack.c.l.b16 %v60
    %v403 = vunpack.c.h.b16 %v60
    %v404 = vunpack.c.l.b16 %v61
    %v405 = vunpack.c.h.b16 %v61
    %v406 = vunpack.c.l.b16 %v62
    %v407 = vunpack.c.h.b16 %v62
    %v408 = vunpack.c.l.b16 %v63
    %v409 = vunpack.c.h.b16 %v63
    %v410 = vunpack.c.l.b16 %v64
    %v411 = vunpack.c.h.b16 %v64
    %v412 = vunpack.c.l.b16 %v65
    %v413 = vunpack.c.h.b16 %v65
    %v414 = vunpack.c.l.b16 %v66
    %v415 = vunpack.c.h.b16 %v66
    %v416 = vunpack.c.l.b16 %v67
    %v417 = vunpack.c.h.b16 %v67
    %v418 = vunpack.c.l.b16 %v68
    %v419 = vunpack.c.h.b16 %v68
    %v420 = vunpack.c.l.b16 %v69
    %v421 = vunpack.c.h.b16 %v69
    %v422 = vunpack.c.l.b16 %v70
    %v423 = vunpack.c.h.b16 %v70
    %v424 = vunpack.c.l.b16 %v71
    %v425 = vunpack.c.h.b16 %v71
    %v426 = vunpack.c.l.b16 %v72
    %v427 = vunpack.c.h.b16 %v72
    %v428 = vunpack.c.l.b16 %v73
    %v429 = vunpack.c.h.b16 %v73
    %v430 = vunpack.c.l.b16 %v74
    %v431 = vunpack.c.h.b16 %v74
    %v432 = vunpack.c.l.b16 %v75
    %v433 = vunpack.c.h.b16 %v75
    %v434 = vunpack.c.l.b16 %v76
    %v435 = vunpack.c.h.b16 %v76
    %v436 = vunpack.c.l.b16 %v77
    %v437 = vunpack.c.h.b16 %v77
    %v438 = vunpack.c.l.b16 %v78
    %v439 = vunpack.c.h.b16 %v78
    %v440 = vunpack.c.l.b16 %v79
    %v441 = vunpack.c.h.b16 %v79
    %v442 = vunpack.c.l.b16 %v80
    %v443 = vunpack.c.h.b16 %v80
    %v444 = vunpack.c.l.b16 %v81
    %v445 = vunpack.c.h.b16 %v81
    %v446 = vunpack.c.l.b16 %v82
    %v447 = vunpack.c.h.b16 %v82
    %v448 = vunpack.c.l.b16 %v83
    %v449 = vunpack.c.h.b16 %v83
    %v450 = vunpack.c.l.b16 %v84
    %v451 = vunpack.c.h.b16 %v84
    %v452 = vunpack.c.l.b16 %v85
    %v453 = vunpack.c.h.b16 %v85
    %v454 = vunpack.c.l.b16 %v86
    %v455 = vunpack.c.h.b16 %v86
    %v456 = vunpack.c.l.b16 %v87
    %v457 = vunpack.c.h.b16 %v87
    %v458 = vunpack.c.l.b16 %v88
    %v459 = vunpack.c.h.b16 %v88
    %v460 = vunpack.c.l.b16 %v89
    %v461 = vunpack.c.h.b16 %v89
    %v462 = vunpack.c.l.b16 %v90
    %v463 = vunpack.c.h.b16 %v90
    %v464 = vunpack.c.l.b16 %v91
    %v465 = vunpack.c.h.b16 %v91
    %v466 = vunpack.c.l.b16 %v92
    %v467 = vunpack.c.h.b16 %v92
    %v468 = vunpack.c.l.b16 %v93
    %v469 = vunpack.c.h.b16 %v93
    %v470 = vunpack.c.l.b16 %v94
    %v471 = vunpack.c.h.b16 %v94
    %v472 = vunpack.c.l.b16 %v95
    %v473 = vunpack.c.h.b16 %v95
    %v474 = vunpack.c.l.b16 %v96
    %v475 = vunpack.c.h.b16 %v96
    %v476 = vunpack.c.l.b16 %v97
    %v477 = vunpack.c.h.b16 %v97
    %v478 = vunpack.c.l.b16 %v98
    %v479 = vunpack.c.h.b16 %v98
    %v480 = vunpack.c.l.b16 %v99
    %v481 = vunpack.c.h.b16 %v99
    %v482 = vunpack.c.l.b16 %v100
    %v483 = vunpack.c.h.b16 %v100
    %v484 = vunpack.c.l.b16 %v101
    %v485 = vunpack.c.h.b16 %v101
    %v486 = vunpack.c.l.b16 %v102
    %v487 = vunpack.c.h.b16 %v102
    %v488 = vunpack.c.l.b16 %v103
    %v489 = vunpack.c.h.b16 %v103
    %v490 = vunpack.c.l.b16 %v104
    %v491 = vunpack.c.h.b16 %v104
    %v492 = vunpack.c.l.b16 %v105
    %v493 = vunpack.c.h.b16 %v105
    %v494 = vunpack.c.l.b16 %v106
    %v495 = vunpack.c.h.b16 %v106
    %v496 = vunpack.c.l.b16 %v107
    %v497 = vunpack.c.h.b16 %v107
    %v498 = vunpack.c.l.b16 %v108
    %v499 = vunpack.c.h.b16 %v108
    %v500 = vunpack.c.l.b16 %v109
    %v501 = vunpack.c.h.b16 %v109
    %v502 = vunpack.c.l.b16 %v110
    %v503 = vunpack.c.h.b16 %v110
    %v504 = vunpack.c.l.b16 %v111
    %v505 = vunpack.c.h.b16 %v111
    %v506 = vunpack.c.l.b16 %v112
    %v507 = vunpack.c.h.b16 %v112
    %v508 = vunpack.c.l.b16 %v113
    %v509 = vunpack.c.h.b16 %v113
    %v510 = vunpack.c.l.b16 %v114
    %v511 = vunpack.c.h.b16 %v114
    %v512 = vunpack.c.l.b16 %v115
    %v513 = vunpack.c.h.b16 %v115
    %v514 = vunpack.c.l.b16 %v116
    %v515 = vunpack.c.h.b16 %v116
    %v516 = vunpack.c.l.b16 %v117
    %v517 = vunpack.c.h.b16 %v117
    %v518 = vunpack.c.l.b16 %v118
    %v519 = vunpack.c.h.b16 %v118
    %v520 = vunpack.c.l.b16 %v119
    %v521 = vunpack.c.h.b16 %v119
    %v522 = vunpack.c.l.b16 %v120
    %v523 = vunpack.c.h.b16 %v120
    %v524 = vunpack.c.l.b16 %v121
    %v525 = vunpack.c.h.b16 %v121
    %v526 = vunpack.c.l.b16 %v122
    %v527 = vunpack.c.h.b16 %v122
    %v528 = vunpack.c.l.b16 %v123
    %v529 = vunpack.c.h.b16 %v123
    %v530 = vunpack.c.l.b16 %v124
    %v531 = vunpack.c.h.b16 %v124
    %v532 = vunpack.c.l.b16 %v125
    %v533 = vunpack.c.h.b16 %v125
    %v534 = vunpack.c.l.b16 %v126
    %v535 = vunpack.c.h.b16 %v126
    %v536 = vunpack.c.l.b16 %v127
    %v537 = vunpack.c.h.b16 %v127
    %v538 = vunpack.c.l.b16 %v128
    %v539 = vunpack.c.h.b16 %v128
    %v540 = vunpack.c.l.b16 %v129
    %v541 = vunpack.c.h.b16 %v129
    %v542 = vunpack.c.l.b16 %v130
    %v543 = vunpack.c.h.b16 %v130
    %v544 = vunpack.c.l.b16 %v131
    %v545 = vunpack.c.h.b16 %v131
    %v546 = vunpack.c.l.b16 %v132
    %v547 = vunpack.c.h.b16 %v132
    %v548 = vunpack.c.l.b16 %v133
    %v549 = vunpack.c.h.b16 %v133
    %v550 = vunpack.c.l.b16 %v134
    %v551 = vunpack.c.h.b16 %v134
    %v552 = vunpack.c.l.b16 %v135
    %v553 = vunpack.c.h.b16 %v135
    %v554 = vunpack.c.l.b16 %v136
    %v555 = vunpack.c.h.b16 %v136
    %v556 = vunpack.c.l.b16 %v137
    %v557 = vunpack.c.h.b16 %v137
    %v558 = vunpack.c.l.b16 %v138
    %v559 = vunpack.c.h.b16 %v138
    %v560 = vunpack.c.l.b16 %v139
    %v561 = vunpack.c.h.b16 %v139
    %v562 = vunpack.c.l.b16 %v140
    %v563 = vunpack.c.h.b16 %v140
    %v564 = vunpack.c.l.b16 %v141
    %v565 = vunpack.c.h.b16 %v141
    %v566 = vunpack.c.l.b16 %v142
    %v567 = vunpack.c.h.b16 %v142
    %v568 = vunpack.c.l.b16 %v143
    %v569 = vunpack.c.h.b16 %v143
    %v570 = vunpack.c.l.b16 %v144
    %v571 = vunpack.c.h.b16 %v144
    %v572 = vunpack.c.l.b16 %v145
    %v573 = vunpack.c.h.b16 %v145
    %v574 = vunpack.c.l.b16 %v146
    %v575 = vunpack.c.h.b16 %v146
    %v576 = vunpack.c.l.b16 %v147
    %v577 = vunpack.c.h.b16 %v147
    %v578 = vunpack.c.l.b16 %v148
    %v579 = vunpack.c.h.b16 %v148
    %v580 = vunpack.c.l.b16 %v149
    %v581 = vunpack.c.h.b16 %v149
    %v582 = vunpack.c.l.b16 %v150
    %v583 = vunpack.c.h.b16 %v150
    %v584 = vunpack.c.l.b16 %v151
    %v585 = vunpack.c.h.b16 %v151
    %v586 = vunpack.c.l.b16 %v152
    %v587 = vunpack.c.h.b16 %v152
    %v588 = vunpack.c.l.b16 %v153
    %v589 = vunpack.c.h.b16 %v153
    %v590 = vunpack.c.l.b16 %v154
    %v591 = vunpack.c.h.b16 %v154
    %v592 = vunpack.c.l.b16 %v155
    %v593 = vunpack.c.h.b16 %v155
    %v594 = vunpack.c.l.b16 %v156
    %v595 = vunpack.c.h.b16 %v156
    %v596 = vunpack.c.l.b16 %v157
    %v597 = vunpack.c.h.b16 %v157
    %v598 = vunpack.c.l.b16 %v158
    %v599 = vunpack.c.h.b16 %v158
    %v600 = vunpack.c.l.b16 %v159
    %v601 = vunpack.c.h.b16 %v159
    %v602 = vunpack.c.l.b16 %v160
    %v603 = vunpack.c.h.b16 %v160
    %v604 = vunpack.c.l.b16 %v161
    %v605 = vunpack.c.h.b16 %v161
    %v606 = vunpack.c.l.b16 %v162
    %v607 = vunpack.c.h.b16 %v162
    %v608 = vunpack.c.l.b16 %v163
    %v609 = vunpack.c.h.b16 %v163
    %v610 = vunpack.c.l.b16 %v164
    %v611 = vunpack.c.h.b16 %v164
    %v612 = vunpack.c.l.b16 %v165
    %v613 = vunpack.c.h.b16 %v165
    %v614 = vpack.c.b16 %v362, %v358
    %v615 = vpack.c.b16 %v363, %v359
    %v616 = vpack.c.b16 %v364, %v360
    %v617 = vpack.c.b16 %v365, %v361
    %v618 = vpack.c.b16 %v370, %v366
    %v619 = vpack.c.b16 %v371, %v367
    %v620 = vpack.c.b16 %v372, %v368
    %v621 = vpack.c.b16 %v373, %v369
    %v622 = vpack.c.b16 %v378, %v374
    %v623 = vpack.c.b16 %v379, %v375
    %v624 = vpack.c.b16 %v380, %v376
    %v625 = vpack.c.b16 %v381, %v377
    %v626 = vpack.c.b16 %v386, %v382
    %v627 = vpack.c.b16 %v387, %v383
    %v628 = vpack.c.b16 %v388, %v384
    %v629 = vpack.c.b16 %v389, %v385
    %v630 = vpack.c.b16 %v394, %v390
    %v631 = vpack.c.b16 %v395, %v391
    %v632 = vpack.c.b16 %v396, %v392
    %v633 = vpack.c.b16 %v397, %v393
    %v634 = vpack.c.b16 %v402, %v398
    %v635 = vpack.c.b16 %v403, %v399
    %v636 = vpack.c.b16 %v404, %v400
    %v637 = vpack.c.b16 %v405, %v401
    %v638 = vpack.c.b16 %v410, %v406
    %v639 = vpack.c.b16 %v411, %v407
    %v640 = vpack.c.b16 %v412, %v408
    %v641 = vpack.c.b16 %v413, %v409
    %v642 = vpack.c.b16 %v418, %v414
    %v643 = vpack.c.b16 %v419, %v415
    %v644 = vpack.c.b16 %v420, %v416
    %v645 = vpack.c.b16 %v421, %v417
    %v646 = vpack.c.b16 %v426, %v422
    %v647 = vpack.c.b16 %v427, %v423
    %v648 = vpack.c.b16 %v428, %v424
    %v649 = vpack.c.b16 %v429, %v425
    %v650 = vpack.c.b16 %v434, %v430
    %v651 = vpack.c.b16 %v435, %v431
    %v652 = vpack.c.b16 %v436, %v432
    %v653 = vpack.c.b16 %v437, %v433
    %v654 = vpack.c.b16 %v442, %v438
    %v655 = vpack.c.b16 %v443, %v439
    %v656 = vpack.c.b16 %v444, %v440
    %v657 = vpack.c.b16 %v445, %v441
    %v658 = vpack.c.b16 %v450, %v446
    %v659 = vpack.c.b16 %v451, %v447
    %v660 = vpack.c.b16 %v452, %v448
    %v661 = vpack.c.b16 %v453, %v449
    %v662 = vpack.c.b16 %v458, %v454
    %v663 = vpack.c.b16 %v459, %v455
    %v664 = vpack.c.b16 %v460, %v456
    %v665 = vpack.c.b16 %v461, %v457
    %v666 = vpack.c.b16 %v466, %v462
    %v667 = vpack.c.b16 %v467, %v463
    %v668 = vpack.c.b16 %v468, %v464
    %v669 = vpack.c.b16 %v469, %v465
    %v670 = vpack.c.b16 %v474, %v470
    %v671 = vpack.c.b16 %v475, %v471
    %v672 = vpack.c.b16 %v476, %v472
    %v673 = vpack.c.b16 %v477, %v473
    %v674 = vpack.c.b16 %v482, %v478
    %v675 = vpack.c.b16 %v483, %v479
    %v676 = vpack.c.b16 %v484, %v480
    %v677 = vpack.c.b16 %v485, %v481
    %v678 = vpack.c.b16 %v490, %v486
    %v679 = vpack.c.b16 %v491, %v487
    %v680 = vpack.c.b16 %v492, %v488
    %v681 = vpack.c.b16 %v493, %v489
    %v682 = vpack.c.b16 %v498, %v494
    %v683 = vpack.c.b16 %v499, %v495
    %v684 = vpack.c.b16 %v500, %v496
    %v685 = vpack.c.b16 %v501, %v497
    %v686 = vpack.c.b16 %v506, %v502
    %v687 = vpack.c.b16 %v507, %v503
    %v688 = vpack.c.b16 %v508, %v504
    %v689 = vpack.c.b16 %v509, %v505
    %v690 = vpack.c.b16 %v514, %v510
    %v691 = vpack.c.b16 %v515, %v511
    %v692 = vpack.c.b16 %v516, %v512
    %v693 = vpack.c.b16 %v517, %v513
    %v694 = vpack.c.b16 %v522, %v518
    %v695 = vpack.c.b16 %v523, %v519
    %v696 = vpack.c.b16 %v524, %v520
    %v697 = vpack.c.b16 %v525, %v521
    %v698 = vpack.c.b16 %v530, %v526
    %v699 = vpack.c.b16 %v531, %v527
    %v700 = vpack.c.b16 %v532, %v528
    %v701 = vpack.c.b16 %v533, %v529
    %v702 = vpack.c.b16 %v538, %v534
    %v703 = vpack.c.b16 %v539, %v535
    %v704 = vpack.c.b16 %v540, %v536
    %v705 = vpack.c.b16 %v541, %v537
    %v706 = vpack.c.b16 %v546, %v542
    %v707 = vpack.c.b16 %v547, %v543
    %v708 = vpack.c.b16 %v548, %v544
    %v709 = vpack.c.b16 %v549, %v545
    %v710 = vpack.c.b16 %v554, %v550
    %v711 = vpack.c.b16 %v555, %v551
    %v712 = vpack.c.b16 %v556, %v552
    %v713 = vpack.c.b16 %v557, %v553
    %v714 = vpack.c.b16 %v562, %v558
    %v715 = vpack.c.b16 %v563, %v559
    %v716 = vpack.c.b16 %v564, %v560
    %v717 = vpack.c.b16 %v565, %v561
    %v718 = vpack.c.b16 %v570, %v566
    %v719 = vpack.c.b16 %v571, %v567
    %v720 = vpack.c.b16 %v572, %v568
    %v721 = vpack.c.b16 %v573, %v569
    %v722 = vpack.c.b16 %v578, %v574
    %v723 = vpack.c.b16 %v579, %v575
    %v724 = vpack.c.b16 %v580, %v576
    %v725 = vpack.c.b16 %v581, %v577
    %v726 = vpack.c.b16 %v586, %v582
    %v727 = vpack.c.b16 %v587, %v583
    %v728 = vpack.c.b16 %v588, %v584
    %v729 = vpack.c.b16 %v589, %v585
    %v730 = vpack.c.b16 %v594, %v590
    %v731 = vpack.c.b16 %v595, %v591
    %v732 = vpack.c.b16 %v596, %v592
    %v733 = vpack.c.b16 %v597, %v593
    %v734 = vpack.c.b16 %v602, %v598
    %v735 = vpack.c.b16 %v603, %v599
    %v736 = vpack.c.b16 %v604, %v600
    %v737 = vpack.c.b16 %v605, %v601
    %v738 = vpack.c.b16 %v610, %v606
    %v739 = vpack.c.b16 %v611, %v607
    %v740 = vpack.c.b16 %v612, %v608
    %v741 = vpack.c.b16 %v613, %v609
    %v934 = vunpack.c.l.b16 %v166
    %v935 = vunpack.c.l.b16 %v167
    %v936 = vunpack.c.l.b16 %v168
    %v937 = vunpack.c.l.b16 %v169
    %v938 = vunpack.c.l.b16 %v170
    %v939 = vunpack.c.l.b16 %v171
    %v940 = vunpack.c.l.b16 %v172
    %v941 = vunpack.c.l.b16 %v173
    %v942 = vunpack.c.l.b16 %v174
    %v943 = vunpack.c.l.b16 %v175
    %v944 = vunpack.c.l.b16 %v176
    %v945 = vunpack.c.l.b16 %v177
    %v946 = vunpack.c.l.b16 %v178
    %v947 = vunpack.c.l.b16 %v179
    %v948 = vunpack.c.l.b16 %v180
    %v949 = vunpack.c.l.b16 %v181
    %v950 = vunpack.c.l.b16 %v182
    %v951 = vunpack.c.l.b16 %v183
    %v952 = vunpack.c.l.b16 %v184
    %v953 = vunpack.c.l.b16 %v185
    %v954 = vunpack.c.l.b16 %v186
    %v955 = vunpack.c.l.b16 %v187
    %v956 = vunpack.c.l.b16 %v188
    %v957 = vunpack.c.l.b16 %v189
    %v958 = vunpack.c.l.b16 %v190
    %v959 = vunpack.c.l.b16 %v191
    %v960 = vunpack.c.l.b16 %v192
    %v961 = vunpack.c.l.b16 %v193
    %v962 = vunpack.c.l.b16 %v194
    %v963 = vunpack.c.l.b16 %v195
    %v964 = vunpack.c.l.b16 %v196
    %v965 = vunpack.c.l.b16 %v197
    %v966 = vunpack.c.l.b16 %v198
    %v967 = vunpack.c.l.b16 %v199
    %v968 = vunpack.c.l.b16 %v200
    %v969 = vunpack.c.l.b16 %v201
    %v970 = vunpack.c.l.b16 %v202
    %v971 = vunpack.c.l.b16 %v203
    %v972 = vunpack.c.l.b16 %v204
    %v973 = vunpack.c.l.b16 %v205
    %v974 = vunpack.c.l.b16 %v206
    %v975 = vunpack.c.l.b16 %v207
    %v976 = vunpack.c.l.b16 %v208
    %v977 = vunpack.c.l.b16 %v209
    %v978 = vunpack.c.l.b16 %v210
    %v979 = vunpack.c.l.b16 %v211
    %v980 = vunpack.c.l.b16 %v212
    %v981 = vunpack.c.l.b16 %v213
    %v982 = vunpack.c.l.b16 %v214
    %v983 = vunpack.c.l.b16 %v215
    %v984 = vunpack.c.l.b16 %v216
    %v985 = vunpack.c.l.b16 %v217
    %v986 = vunpack.c.l.b16 %v218
    %v987 = vunpack.c.l.b16 %v219
    %v988 = vunpack.c.l.b16 %v220
    %v989 = vunpack.c.l.b16 %v221
    %v990 = vunpack.c.l.b16 %v222
    %v991 = vunpack.c.l.b16 %v223
    %v992 = vunpack.c.l.b16 %v224
    %v993 = vunpack.c.l.b16 %v225
    %v994 = vunpack.c.l.b16 %v226
    %v995 = vunpack.c.l.b16 %v227
    %v996 = vunpack.c.l.b16 %v228
    %v997 = vunpack.c.l.b16 %v229
    %v998 = vpack.c.b16 %v935, %v934
    %v999 = vpack.c.b16 %v937, %v936
    %v1000 = vpack.c.b16 %v939, %v938
    %v1001 = vpack.c.b16 %v941, %v940
    %v1002 = vpack.c.b16 %v943, %v942
    %v1003 = vpack.c.b16 %v945, %v944
    %v1004 = vpack.c.b16 %v947, %v946
    %v1005 = vpack.c.b16 %v949, %v948
    %v1006 = vpack.c.b16 %v951, %v950
    %v1007 = vpack.c.b16 %v953, %v952
    %v1008 = vpack.c.b16 %v955, %v954
    %v1009 = vpack.c.b16 %v957, %v956
    %v1010 = vpack.c.b16 %v959, %v958
    %v1011 = vpack.c.b16 %v961, %v960
    %v1012 = vpack.c.b16 %v963, %v962
    %v1013 = vpack.c.b16 %v965, %v964
    %v1014 = vpack.c.b16 %v967, %v966
    %v1015 = vpack.c.b16 %v969, %v968
    %v1016 = vpack.c.b16 %v971, %v970
    %v1017 = vpack.c.b16 %v973, %v972
    %v1018 = vpack.c.b16 %v975, %v974
    %v1019 = vpack.c.b16 %v977, %v976
    %v1020 = vpack.c.b16 %v979, %v978
    %v1021 = vpack.c.b16 %v981, %v980
    %v1022 = vpack.c.b16 %v983, %v982
    %v1023 = vpack.c.b16 %v985, %v984
    %v1024 = vpack.c.b16 %v987, %v986
    %v1025 = vpack.c.b16 %v989, %v988
    %v1026 = vpack.c.b16 %v991, %v990
    %v1027 = vpack.c.b16 %v993, %v992
    %v1028 = vpack.c.b16 %v995, %v994
    %v1029 = vpack.c.b16 %v997, %v996
    %1062 = vmatprep.subr.bf16.mxu0 0
    %1063 = vmatpush1.bf16.msra.mxu0 %v1005
    %1064 = vmatprep.subr.bf16.mxu0 0
    %1065 = vmatpush1.bf16.msra.mxu0 %v1004
    %1066 = vmatprep.subr.bf16.mxu0 0
    %1067 = vmatpush1.bf16.msra.mxu0 %v1003
    %1068 = vmatprep.subr.bf16.mxu0 0
    %1069 = vmatpush1.bf16.msra.mxu0 %v1002
    %1070 = vmatprep.subr.bf16.mxu0 0
    %1071 = vmatpush1.bf16.msra.mxu0 %v1001
    %1072 = vmatprep.subr.bf16.mxu0 0
    %1073 = vmatpush1.bf16.msra.mxu0 %v1000
    %1074 = vmatprep.subr.bf16.mxu0 0
    %1075 = vmatpush1.bf16.msra.mxu0 %v999
    %1076 = vmatprep.subr.bf16.mxu0 0
    %1077 = vmatpush1.bf16.msra.mxu0 %v998
    %1078 = vmatprep.subr.bf16.mxu0 0
    %1079 = vmatpush2.bf16.msra.mxu0 %v1013
    %1080 = vmatprep.subr.bf16.mxu0 0
    %1081 = vmatpush2.bf16.msra.mxu0 %v1012
    %1082 = vmatprep.subr.bf16.mxu0 0
    %1083 = vmatpush2.bf16.msra.mxu0 %v1011
    %1084 = vmatprep.subr.bf16.mxu0 0
    %1085 = vmatpush2.bf16.msra.mxu0 %v1010
    %1086 = vmatprep.subr.bf16.mxu0 0
    %1087 = vmatpush2.bf16.msra.mxu0 %v1009
    %1088 = vmatprep.subr.bf16.mxu0 0
    %1089 = vmatpush2.bf16.msra.mxu0 %v1008
    %1090 = vmatprep.subr.bf16.mxu0 0
    %1091 = vmatpush2.bf16.msra.mxu0 %v1007
    %1092 = vmatprep.subr.bf16.mxu0 0
    %1093 = vmatpush2.bf16.msra.mxu0 %v1006
    %1094 = vmatprep.mubr.bf16.mxu0 %v615
    %1095 = vmatmul.mubr.bf16.gmra.mxu0 %v614
    %v1096 = vpop.f32.mrf.mxu0
    %v1097 = vadd.f32 0.0, %v1096
    %v1098 = vpop.f32.mrf.mxu0
    %v1099 = vpop.f32.mrf.mxu0
    %v1100 = vadd.f32 0.0, %v1099
    %v1101 = vpop.f32.mrf.mxu0
    %1102 = vmatprep.mubr.bf16.mxu0 %v619
    %1103 = vmatmul.mubr.bf16.gmra.mxu0 %v618
    %v1104 = vpop.f32.mrf.mxu0
    %v1105 = vadd.f32 0.0, %v1104
    %v1106 = vpop.f32.mrf.mxu0
    %v1107 = vpop.f32.mrf.mxu0
    %v1108 = vadd.f32 0.0, %v1107
    %v1109 = vpop.f32.mrf.mxu0
    %1110 = vmatprep.mubr.bf16.mxu0 %v623
    %1111 = vmatmul.mubr.bf16.gmra.mxu0 %v622
    %v1112 = vpop.f32.mrf.mxu0
    %v1113 = vadd.f32 0.0, %v1112
    %v1114 = vpop.f32.mrf.mxu0
    %v1115 = vpop.f32.mrf.mxu0
    %v1116 = vadd.f32 0.0, %v1115
    %v1117 = vpop.f32.mrf.mxu0
    %1118 = vmatprep.mubr.bf16.mxu0 %v627
    %1119 = vmatmul.mubr.bf16.gmra.mxu0 %v626
    %v1120 = vpop.f32.mrf.mxu0
    %v1121 = vadd.f32 0.0, %v1120
    %v1122 = vpop.f32.mrf.mxu0
    %v1123 = vpop.f32.mrf.mxu0
    %v1124 = vadd.f32 0.0, %v1123
    %v1125 = vpop.f32.mrf.mxu0
    %1126 = vmatprep.mubr.bf16.mxu0 %v631
    %1127 = vmatmul.mubr.bf16.gmra.mxu0 %v630
    %v1128 = vpop.f32.mrf.mxu0
    %v1129 = vadd.f32 0.0, %v1128
    %v1130 = vpop.f32.mrf.mxu0
    %v1131 = vpop.f32.mrf.mxu0
    %v1132 = vadd.f32 0.0, %v1131
    %v1133 = vpop.f32.mrf.mxu0
    %1134 = vmatprep.mubr.bf16.mxu0 %v635
    %1135 = vmatmul.mubr.bf16.gmra.mxu0 %v634
    %v1136 = vpop.f32.mrf.mxu0
    %v1137 = vadd.f32 0.0, %v1136
    %v1138 = vpop.f32.mrf.mxu0
    %v1139 = vpop.f32.mrf.mxu0
    %v1140 = vadd.f32 0.0, %v1139
    %v1141 = vpop.f32.mrf.mxu0
    %1142 = vmatprep.mubr.bf16.mxu0 %v639
    %1143 = vmatmul.mubr.bf16.gmra.mxu0 %v638
    %v1144 = vpop.f32.mrf.mxu0
    %v1145 = vadd.f32 0.0, %v1144
    %v1146 = vpop.f32.mrf.mxu0
    %v1147 = vpop.f32.mrf.mxu0
    %v1148 = vadd.f32 0.0, %v1147
    %v1149 = vpop.f32.mrf.mxu0
    %1150 = vmatprep.mubr.bf16.mxu0 %v643
    %1151 = vmatmul.mubr.bf16.gmra.mxu0 %v642
    %v1152 = vpop.f32.mrf.mxu0
    %v1153 = vadd.f32 0.0, %v1152
    %v1154 = vpop.f32.mrf.mxu0
    %v1155 = vpop.f32.mrf.mxu0
    %v1156 = vadd.f32 0.0, %v1155
    %v1157 = vpop.f32.mrf.mxu0
    %1158 = vmatprep.mubr.bf16.mxu0 %v647
    %1159 = vmatmul.mubr.bf16.gmra.mxu0 %v646
    %v1160 = vpop.f32.mrf.mxu0
    %v1161 = vadd.f32 0.0, %v1160
    %v1162 = vpop.f32.mrf.mxu0
    %v1163 = vpop.f32.mrf.mxu0
    %v1164 = vadd.f32 0.0, %v1163
    %v1165 = vpop.f32.mrf.mxu0
    %1166 = vmatprep.mubr.bf16.mxu0 %v651
    %1167 = vmatmul.mubr.bf16.gmra.mxu0 %v650
    %v1168 = vpop.f32.mrf.mxu0
    %v1169 = vadd.f32 0.0, %v1168
    %v1170 = vpop.f32.mrf.mxu0
    %v1171 = vpop.f32.mrf.mxu0
    %v1172 = vadd.f32 0.0, %v1171
    %v1173 = vpop.f32.mrf.mxu0
    %1174 = vmatprep.mubr.bf16.mxu0 %v655
    %1175 = vmatmul.mubr.bf16.gmra.mxu0 %v654
    %v1176 = vpop.f32.mrf.mxu0
    %v1177 = vadd.f32 0.0, %v1176
    %v1178 = vpop.f32.mrf.mxu0
    %v1179 = vpop.f32.mrf.mxu0
    %v1180 = vadd.f32 0.0, %v1179
    %v1181 = vpop.f32.mrf.mxu0
    %1182 = vmatprep.mubr.bf16.mxu0 %v659
    %1183 = vmatmul.mubr.bf16.gmra.mxu0 %v658
    %v1184 = vpop.f32.mrf.mxu0
    %v1185 = vadd.f32 0.0, %v1184
    %v1186 = vpop.f32.mrf.mxu0
    %v1187 = vpop.f32.mrf.mxu0
    %v1188 = vadd.f32 0.0, %v1187
    %v1189 = vpop.f32.mrf.mxu0
    %1190 = vmatprep.mubr.bf16.mxu0 %v663
    %1191 = vmatmul.mubr.bf16.gmra.mxu0 %v662
    %v1192 = vpop.f32.mrf.mxu0
    %v1193 = vadd.f32 0.0, %v1192
    %v1194 = vpop.f32.mrf.mxu0
    %v1195 = vpop.f32.mrf.mxu0
    %v1196 = vadd.f32 0.0, %v1195
    %v1197 = vpop.f32.mrf.mxu0
    %1198 = vmatprep.mubr.bf16.mxu0 %v667
    %1199 = vmatmul.mubr.bf16.gmra.mxu0 %v666
    %v1200 = vpop.f32.mrf.mxu0
    %v1201 = vadd.f32 0.0, %v1200
    %v1202 = vpop.f32.mrf.mxu0
    %v1203 = vpop.f32.mrf.mxu0
    %v1204 = vadd.f32 0.0, %v1203
    %v1205 = vpop.f32.mrf.mxu0
    %1206 = vmatprep.mubr.bf16.mxu0 %v671
    %1207 = vmatmul.mubr.bf16.gmra.mxu0 %v670
    %v1208 = vpop.f32.mrf.mxu0
    %v1209 = vadd.f32 0.0, %v1208
    %v1210 = vpop.f32.mrf.mxu0
    %v1211 = vpop.f32.mrf.mxu0
    %v1212 = vadd.f32 0.0, %v1211
    %v1213 = vpop.f32.mrf.mxu0
    %1214 = vmatprep.mubr.bf16.mxu0 %v675
    %1215 = vmatmul.mubr.bf16.gmra.mxu0 %v674
    %v1216 = vpop.f32.mrf.mxu0
    %v1217 = vadd.f32 0.0, %v1216
    %v1218 = vpop.f32.mrf.mxu0
    %v1219 = vpop.f32.mrf.mxu0
    %v1220 = vadd.f32 0.0, %v1219
    %v1221 = vpop.f32.mrf.mxu0
    %1222 = vmatprep.mubr.bf16.mxu0 %v679
    %1223 = vmatmul.mubr.bf16.gmra.mxu0 %v678
    %v1224 = vpop.f32.mrf.mxu0
    %v1225 = vadd.f32 0.0, %v1224
    %v1226 = vpop.f32.mrf.mxu0
    %v1227 = vpop.f32.mrf.mxu0
    %v1228 = vadd.f32 0.0, %v1227
    %v1229 = vpop.f32.mrf.mxu0
    %1230 = vmatprep.mubr.bf16.mxu0 %v683
    %1231 = vmatmul.mubr.bf16.gmra.mxu0 %v682
    %v1232 = vpop.f32.mrf.mxu0
    %v1233 = vadd.f32 0.0, %v1232
    %v1234 = vpop.f32.mrf.mxu0
    %v1235 = vpop.f32.mrf.mxu0
    %v1236 = vadd.f32 0.0, %v1235
    %v1237 = vpop.f32.mrf.mxu0
    %1238 = vmatprep.mubr.bf16.mxu0 %v687
    %1239 = vmatmul.mubr.bf16.gmra.mxu0 %v686
    %v1240 = vpop.f32.mrf.mxu0
    %v1241 = vadd.f32 0.0, %v1240
    %v1242 = vpop.f32.mrf.mxu0
    %v1243 = vpop.f32.mrf.mxu0
    %v1244 = vadd.f32 0.0, %v1243
    %v1245 = vpop.f32.mrf.mxu0
    %1246 = vmatprep.mubr.bf16.mxu0 %v691
    %1247 = vmatmul.mubr.bf16.gmra.mxu0 %v690
    %v1248 = vpop.f32.mrf.mxu0
    %v1249 = vadd.f32 0.0, %v1248
    %v1250 = vpop.f32.mrf.mxu0
    %v1251 = vpop.f32.mrf.mxu0
    %v1252 = vadd.f32 0.0, %v1251
    %v1253 = vpop.f32.mrf.mxu0
    %1254 = vmatprep.mubr.bf16.mxu0 %v695
    %1255 = vmatmul.mubr.bf16.gmra.mxu0 %v694
    %v1256 = vpop.f32.mrf.mxu0
    %v1257 = vadd.f32 0.0, %v1256
    %v1258 = vpop.f32.mrf.mxu0
    %v1259 = vpop.f32.mrf.mxu0
    %v1260 = vadd.f32 0.0, %v1259
    %v1261 = vpop.f32.mrf.mxu0
    %1262 = vmatprep.mubr.bf16.mxu0 %v699
    %1263 = vmatmul.mubr.bf16.gmra.mxu0 %v698
    %v1264 = vpop.f32.mrf.mxu0
    %v1265 = vadd.f32 0.0, %v1264
    %v1266 = vpop.f32.mrf.mxu0
    %v1267 = vpop.f32.mrf.mxu0
    %v1268 = vadd.f32 0.0, %v1267
    %v1269 = vpop.f32.mrf.mxu0
    %1270 = vmatprep.mubr.bf16.mxu0 %v703
    %1271 = vmatmul.mubr.bf16.gmra.mxu0 %v702
    %v1272 = vpop.f32.mrf.mxu0
    %v1273 = vadd.f32 0.0, %v1272
    %v1274 = vpop.f32.mrf.mxu0
    %v1275 = vpop.f32.mrf.mxu0
    %v1276 = vadd.f32 0.0, %v1275
    %v1277 = vpop.f32.mrf.mxu0
    %1278 = vmatprep.mubr.bf16.mxu0 %v707
    %1279 = vmatmul.mubr.bf16.gmra.mxu0 %v706
    %v1280 = vpop.f32.mrf.mxu0
    %v1281 = vadd.f32 0.0, %v1280
    %v1282 = vpop.f32.mrf.mxu0
    %v1283 = vpop.f32.mrf.mxu0
    %v1284 = vadd.f32 0.0, %v1283
    %v1285 = vpop.f32.mrf.mxu0
    %1286 = vmatprep.mubr.bf16.mxu0 %v711
    %1287 = vmatmul.mubr.bf16.gmra.mxu0 %v710
    %v1288 = vpop.f32.mrf.mxu0
    %v1289 = vadd.f32 0.0, %v1288
    %v1290 = vpop.f32.mrf.mxu0
    %v1291 = vpop.f32.mrf.mxu0
    %v1292 = vadd.f32 0.0, %v1291
    %v1293 = vpop.f32.mrf.mxu0
    %1294 = vmatprep.mubr.bf16.mxu0 %v715
    %1295 = vmatmul.mubr.bf16.gmra.mxu0 %v714
    %v1296 = vpop.f32.mrf.mxu0
    %v1297 = vadd.f32 0.0, %v1296
    %v1298 = vpop.f32.mrf.mxu0
    %v1299 = vpop.f32.mrf.mxu0
    %v1300 = vadd.f32 0.0, %v1299
    %v1301 = vpop.f32.mrf.mxu0
    %1302 = vmatprep.mubr.bf16.mxu0 %v719
    %1303 = vmatmul.mubr.bf16.gmra.mxu0 %v718
    %v1304 = vpop.f32.mrf.mxu0
    %v1305 = vadd.f32 0.0, %v1304
    %v1306 = vpop.f32.mrf.mxu0
    %v1307 = vpop.f32.mrf.mxu0
    %v1308 = vadd.f32 0.0, %v1307
    %v1309 = vpop.f32.mrf.mxu0
    %1310 = vmatprep.mubr.bf16.mxu0 %v723
    %1311 = vmatmul.mubr.bf16.gmra.mxu0 %v722
    %v1312 = vpop.f32.mrf.mxu0
    %v1313 = vadd.f32 0.0, %v1312
    %v1314 = vpop.f32.mrf.mxu0
    %v1315 = vpop.f32.mrf.mxu0
    %v1316 = vadd.f32 0.0, %v1315
    %v1317 = vpop.f32.mrf.mxu0
    %1318 = vmatprep.mubr.bf16.mxu0 %v727
    %1319 = vmatmul.mubr.bf16.gmra.mxu0 %v726
    %v1320 = vpop.f32.mrf.mxu0
    %v1321 = vadd.f32 0.0, %v1320
    %v1322 = vpop.f32.mrf.mxu0
    %v1323 = vpop.f32.mrf.mxu0
    %v1324 = vadd.f32 0.0, %v1323
    %v1325 = vpop.f32.mrf.mxu0
    %1326 = vmatprep.mubr.bf16.mxu0 %v731
    %1327 = vmatmul.mubr.bf16.gmra.mxu0 %v730
    %v1328 = vpop.f32.mrf.mxu0
    %v1329 = vadd.f32 0.0, %v1328
    %v1330 = vpop.f32.mrf.mxu0
    %v1331 = vpop.f32.mrf.mxu0
    %v1332 = vadd.f32 0.0, %v1331
    %v1333 = vpop.f32.mrf.mxu0
    %1334 = vmatprep.mubr.bf16.mxu0 %v735
    %1335 = vmatmul.mubr.bf16.gmra.mxu0 %v734
    %v1336 = vpop.f32.mrf.mxu0
    %v1337 = vadd.f32 0.0, %v1336
    %v1338 = vpop.f32.mrf.mxu0
    %v1339 = vpop.f32.mrf.mxu0
    %v1340 = vadd.f32 0.0, %v1339
    %v1341 = vpop.f32.mrf.mxu0
    %1342 = vmatprep.mubr.bf16.mxu0 %v739
    %1343 = vmatmul.mubr.bf16.gmra.mxu0 %v738
    %v1344 = vpop.f32.mrf.mxu0
    %v1345 = vadd.f32 0.0, %v1344
    %v1346 = vpop.f32.mrf.mxu0
    %v1347 = vpop.f32.mrf.mxu0
    %v1348 = vadd.f32 0.0, %v1347
    %v1349 = vpop.f32.mrf.mxu0
    %1350 = vdwg.mxu0
    %1351 = vmatprep.subr.bf16.mxu0 0
    %1352 = vmatpush1.bf16.msra.mxu0 %v1021
    %1353 = vmatprep.subr.bf16.mxu0 0
    %1354 = vmatpush1.bf16.msra.mxu0 %v1020
    %1355 = vmatprep.subr.bf16.mxu0 0
    %1356 = vmatpush1.bf16.msra.mxu0 %v1019
    %1357 = vmatprep.subr.bf16.mxu0 0
    %1358 = vmatpush1.bf16.msra.mxu0 %v1018
    %1359 = vmatprep.subr.bf16.mxu0 0
    %1360 = vmatpush1.bf16.msra.mxu0 %v1017
    %1361 = vmatprep.subr.bf16.mxu0 0
    %1362 = vmatpush1.bf16.msra.mxu0 %v1016
    %1363 = vmatprep.subr.bf16.mxu0 0
    %1364 = vmatpush1.bf16.msra.mxu0 %v1015
    %1365 = vmatprep.subr.bf16.mxu0 0
    %1366 = vmatpush1.bf16.msra.mxu0 %v1014
    %1367 = vmatprep.subr.bf16.mxu0 0
    %1368 = vmatpush2.bf16.msra.mxu0 %v1029
    %1369 = vmatprep.subr.bf16.mxu0 0
    %1370 = vmatpush2.bf16.msra.mxu0 %v1028
    %1371 = vmatprep.subr.bf16.mxu0 0
    %1372 = vmatpush2.bf16.msra.mxu0 %v1027
    %1373 = vmatprep.subr.bf16.mxu0 0
    %1374 = vmatpush2.bf16.msra.mxu0 %v1026
    %1375 = vmatprep.subr.bf16.mxu0 0
    %1376 = vmatpush2.bf16.msra.mxu0 %v1025
    %1377 = vmatprep.subr.bf16.mxu0 0
    %1378 = vmatpush2.bf16.msra.mxu0 %v1024
    %1379 = vmatprep.subr.bf16.mxu0 0
    %1380 = vmatpush2.bf16.msra.mxu0 %v1023
    %1381 = vmatprep.subr.bf16.mxu0 0
    %1382 = vmatpush2.bf16.msra.mxu0 %v1022
    %1383 = vmatprep.mubr.bf16.mxu0 %v617
    %1384 = vmatmul.mubr.bf16.gmra.mxu0 %v616
    %v1385 = vpop.f32.mrf.mxu0
    %v1386 = vadd.f32 %v1097, %v1385
    %v1387 = vpop.f32.mrf.mxu0
    %v1388 = vpop.f32.mrf.mxu0
    %v1389 = vadd.f32 %v1100, %v1388
    %v1390 = vpop.f32.mrf.mxu0
    %1391 = vmatprep.mubr.bf16.mxu0 %v621
    %1392 = vmatmul.mubr.bf16.gmra.mxu0 %v620
    %v1393 = vpop.f32.mrf.mxu0
    %v1394 = vadd.f32 %v1105, %v1393
    %v1395 = vpop.f32.mrf.mxu0
    %v1396 = vpop.f32.mrf.mxu0
    %v1397 = vadd.f32 %v1108, %v1396
    %v1398 = vpop.f32.mrf.mxu0
    %1399 = vmatprep.mubr.bf16.mxu0 %v625
    %1400 = vmatmul.mubr.bf16.gmra.mxu0 %v624
    %v1401 = vpop.f32.mrf.mxu0
    %v1402 = vadd.f32 %v1113, %v1401
    %v1403 = vpop.f32.mrf.mxu0
    %v1404 = vpop.f32.mrf.mxu0
    %v1405 = vadd.f32 %v1116, %v1404
    %v1406 = vpop.f32.mrf.mxu0
    %1407 = vmatprep.mubr.bf16.mxu0 %v629
    %1408 = vmatmul.mubr.bf16.gmra.mxu0 %v628
    %v1409 = vpop.f32.mrf.mxu0
    %v1410 = vadd.f32 %v1121, %v1409
    %v1411 = vpop.f32.mrf.mxu0
    %v1412 = vpop.f32.mrf.mxu0
    %v1413 = vadd.f32 %v1124, %v1412
    %v1414 = vpop.f32.mrf.mxu0
    %1415 = vmatprep.mubr.bf16.mxu0 %v633
    %1416 = vmatmul.mubr.bf16.gmra.mxu0 %v632
    %v1417 = vpop.f32.mrf.mxu0
    %v1418 = vadd.f32 %v1129, %v1417
    %v1419 = vpop.f32.mrf.mxu0
    %v1420 = vpop.f32.mrf.mxu0
    %v1421 = vadd.f32 %v1132, %v1420
    %v1422 = vpop.f32.mrf.mxu0
    %1423 = vmatprep.mubr.bf16.mxu0 %v637
    %1424 = vmatmul.mubr.bf16.gmra.mxu0 %v636
    %v1425 = vpop.f32.mrf.mxu0
    %v1426 = vadd.f32 %v1137, %v1425
    %v1427 = vpop.f32.mrf.mxu0
    %v1428 = vpop.f32.mrf.mxu0
    %v1429 = vadd.f32 %v1140, %v1428
    %v1430 = vpop.f32.mrf.mxu0
    %1431 = vmatprep.mubr.bf16.mxu0 %v641
    %1432 = vmatmul.mubr.bf16.gmra.mxu0 %v640
    %v1433 = vpop.f32.mrf.mxu0
    %v1434 = vadd.f32 %v1145, %v1433
    %v1435 = vpop.f32.mrf.mxu0
    %v1436 = vpop.f32.mrf.mxu0
    %v1437 = vadd.f32 %v1148, %v1436
    %v1438 = vpop.f32.mrf.mxu0
    %1439 = vmatprep.mubr.bf16.mxu0 %v645
    %1440 = vmatmul.mubr.bf16.gmra.mxu0 %v644
    %v1441 = vpop.f32.mrf.mxu0
    %v1442 = vadd.f32 %v1153, %v1441
    %v1443 = vpop.f32.mrf.mxu0
    %v1444 = vpop.f32.mrf.mxu0
    %v1445 = vadd.f32 %v1156, %v1444
    %v1446 = vpop.f32.mrf.mxu0
    %1447 = vmatprep.mubr.bf16.mxu0 %v649
    %1448 = vmatmul.mubr.bf16.gmra.mxu0 %v648
    %v1449 = vpop.f32.mrf.mxu0
    %v1450 = vadd.f32 %v1161, %v1449
    %v1451 = vpop.f32.mrf.mxu0
    %v1452 = vpop.f32.mrf.mxu0
    %v1453 = vadd.f32 %v1164, %v1452
    %v1454 = vpop.f32.mrf.mxu0
    %1455 = vmatprep.mubr.bf16.mxu0 %v653
    %1456 = vmatmul.mubr.bf16.gmra.mxu0 %v652
    %v1457 = vpop.f32.mrf.mxu0
    %v1458 = vadd.f32 %v1169, %v1457
    %v1459 = vpop.f32.mrf.mxu0
    %v1460 = vpop.f32.mrf.mxu0
    %v1461 = vadd.f32 %v1172, %v1460
    %v1462 = vpop.f32.mrf.mxu0
    %1463 = vmatprep.mubr.bf16.mxu0 %v657
    %1464 = vmatmul.mubr.bf16.gmra.mxu0 %v656
    %v1465 = vpop.f32.mrf.mxu0
    %v1466 = vadd.f32 %v1177, %v1465
    %v1467 = vpop.f32.mrf.mxu0
    %v1468 = vpop.f32.mrf.mxu0
    %v1469 = vadd.f32 %v1180, %v1468
    %v1470 = vpop.f32.mrf.mxu0
    %1471 = vmatprep.mubr.bf16.mxu0 %v661
    %1472 = vmatmul.mubr.bf16.gmra.mxu0 %v660
    %v1473 = vpop.f32.mrf.mxu0
    %v1474 = vadd.f32 %v1185, %v1473
    %v1475 = vpop.f32.mrf.mxu0
    %v1476 = vpop.f32.mrf.mxu0
    %v1477 = vadd.f32 %v1188, %v1476
    %v1478 = vpop.f32.mrf.mxu0
    %1479 = vmatprep.mubr.bf16.mxu0 %v665
    %1480 = vmatmul.mubr.bf16.gmra.mxu0 %v664
    %v1481 = vpop.f32.mrf.mxu0
    %v1482 = vadd.f32 %v1193, %v1481
    %v1483 = vpop.f32.mrf.mxu0
    %v1484 = vpop.f32.mrf.mxu0
    %v1485 = vadd.f32 %v1196, %v1484
    %v1486 = vpop.f32.mrf.mxu0
    %1487 = vmatprep.mubr.bf16.mxu0 %v669
    %1488 = vmatmul.mubr.bf16.gmra.mxu0 %v668
    %v1489 = vpop.f32.mrf.mxu0
    %v1490 = vadd.f32 %v1201, %v1489
    %v1491 = vpop.f32.mrf.mxu0
    %v1492 = vpop.f32.mrf.mxu0
    %v1493 = vadd.f32 %v1204, %v1492
    %v1494 = vpop.f32.mrf.mxu0
    %1495 = vmatprep.mubr.bf16.mxu0 %v673
    %1496 = vmatmul.mubr.bf16.gmra.mxu0 %v672
    %v1497 = vpop.f32.mrf.mxu0
    %v1498 = vadd.f32 %v1209, %v1497
    %v1499 = vpop.f32.mrf.mxu0
    %v1500 = vpop.f32.mrf.mxu0
    %v1501 = vadd.f32 %v1212, %v1500
    %v1502 = vpop.f32.mrf.mxu0
    %1503 = vmatprep.mubr.bf16.mxu0 %v677
    %1504 = vmatmul.mubr.bf16.gmra.mxu0 %v676
    %v1505 = vpop.f32.mrf.mxu0
    %v1506 = vadd.f32 %v1217, %v1505
    %v1507 = vpop.f32.mrf.mxu0
    %v1508 = vpop.f32.mrf.mxu0
    %v1509 = vadd.f32 %v1220, %v1508
    %v1510 = vpop.f32.mrf.mxu0
    %1511 = vmatprep.mubr.bf16.mxu0 %v681
    %1512 = vmatmul.mubr.bf16.gmra.mxu0 %v680
    %v1513 = vpop.f32.mrf.mxu0
    %v1514 = vadd.f32 %v1225, %v1513
    %v1515 = vpop.f32.mrf.mxu0
    %v1516 = vpop.f32.mrf.mxu0
    %v1517 = vadd.f32 %v1228, %v1516
    %v1518 = vpop.f32.mrf.mxu0
    %1519 = vmatprep.mubr.bf16.mxu0 %v685
    %1520 = vmatmul.mubr.bf16.gmra.mxu0 %v684
    %v1521 = vpop.f32.mrf.mxu0
    %v1522 = vadd.f32 %v1233, %v1521
    %v1523 = vpop.f32.mrf.mxu0
    %v1524 = vpop.f32.mrf.mxu0
    %v1525 = vadd.f32 %v1236, %v1524
    %v1526 = vpop.f32.mrf.mxu0
    %1527 = vmatprep.mubr.bf16.mxu0 %v689
    %1528 = vmatmul.mubr.bf16.gmra.mxu0 %v688
    %v1529 = vpop.f32.mrf.mxu0
    %v1530 = vadd.f32 %v1241, %v1529
    %v1531 = vpop.f32.mrf.mxu0
    %v1532 = vpop.f32.mrf.mxu0
    %v1533 = vadd.f32 %v1244, %v1532
    %v1534 = vpop.f32.mrf.mxu0
    %1535 = vmatprep.mubr.bf16.mxu0 %v693
    %1536 = vmatmul.mubr.bf16.gmra.mxu0 %v692
    %v1537 = vpop.f32.mrf.mxu0
    %v1538 = vadd.f32 %v1249, %v1537
    %v1539 = vpop.f32.mrf.mxu0
    %v1540 = vpop.f32.mrf.mxu0
    %v1541 = vadd.f32 %v1252, %v1540
    %v1542 = vpop.f32.mrf.mxu0
    %1543 = vmatprep.mubr.bf16.mxu0 %v697
    %1544 = vmatmul.mubr.bf16.gmra.mxu0 %v696
    %v1545 = vpop.f32.mrf.mxu0
    %v1546 = vadd.f32 %v1257, %v1545
    %v1547 = vpop.f32.mrf.mxu0
    %v1548 = vpop.f32.mrf.mxu0
    %v1549 = vadd.f32 %v1260, %v1548
    %v1550 = vpop.f32.mrf.mxu0
    %1551 = vmatprep.mubr.bf16.mxu0 %v701
    %1552 = vmatmul.mubr.bf16.gmra.mxu0 %v700
    %v1553 = vpop.f32.mrf.mxu0
    %v1554 = vadd.f32 %v1265, %v1553
    %v1555 = vpop.f32.mrf.mxu0
    %v1556 = vpop.f32.mrf.mxu0
    %v1557 = vadd.f32 %v1268, %v1556
    %v1558 = vpop.f32.mrf.mxu0
    %1559 = vmatprep.mubr.bf16.mxu0 %v705
    %1560 = vmatmul.mubr.bf16.gmra.mxu0 %v704
    %v1561 = vpop.f32.mrf.mxu0
    %v1562 = vadd.f32 %v1273, %v1561
    %v1563 = vpop.f32.mrf.mxu0
    %v1564 = vpop.f32.mrf.mxu0
    %v1565 = vadd.f32 %v1276, %v1564
    %v1566 = vpop.f32.mrf.mxu0
    %1567 = vmatprep.mubr.bf16.mxu0 %v709
    %1568 = vmatmul.mubr.bf16.gmra.mxu0 %v708
    %v1569 = vpop.f32.mrf.mxu0
    %v1570 = vadd.f32 %v1281, %v1569
    %v1571 = vpop.f32.mrf.mxu0
    %v1572 = vpop.f32.mrf.mxu0
    %v1573 = vadd.f32 %v1284, %v1572
    %v1574 = vpop.f32.mrf.mxu0
    %1575 = vmatprep.mubr.bf16.mxu0 %v713
    %1576 = vmatmul.mubr.bf16.gmra.mxu0 %v712
    %v1577 = vpop.f32.mrf.mxu0
    %v1578 = vadd.f32 %v1289, %v1577
    %v1579 = vpop.f32.mrf.mxu0
    %v1580 = vpop.f32.mrf.mxu0
    %v1581 = vadd.f32 %v1292, %v1580
    %v1582 = vpop.f32.mrf.mxu0
    %1583 = vmatprep.mubr.bf16.mxu0 %v717
    %1584 = vmatmul.mubr.bf16.gmra.mxu0 %v716
    %v1585 = vpop.f32.mrf.mxu0
    %v1586 = vadd.f32 %v1297, %v1585
    %v1587 = vpop.f32.mrf.mxu0
    %v1588 = vpop.f32.mrf.mxu0
    %v1589 = vadd.f32 %v1300, %v1588
    %v1590 = vpop.f32.mrf.mxu0
    %1591 = vmatprep.mubr.bf16.mxu0 %v721
    %1592 = vmatmul.mubr.bf16.gmra.mxu0 %v720
    %v1593 = vpop.f32.mrf.mxu0
    %v1594 = vadd.f32 %v1305, %v1593
    %v1595 = vpop.f32.mrf.mxu0
    %v1596 = vpop.f32.mrf.mxu0
    %v1597 = vadd.f32 %v1308, %v1596
    %v1598 = vpop.f32.mrf.mxu0
    %1599 = vmatprep.mubr.bf16.mxu0 %v725
    %1600 = vmatmul.mubr.bf16.gmra.mxu0 %v724
    %v1601 = vpop.f32.mrf.mxu0
    %v1602 = vadd.f32 %v1313, %v1601
    %v1603 = vpop.f32.mrf.mxu0
    %v1604 = vpop.f32.mrf.mxu0
    %v1605 = vadd.f32 %v1316, %v1604
    %v1606 = vpop.f32.mrf.mxu0
    %1607 = vmatprep.mubr.bf16.mxu0 %v729
    %1608 = vmatmul.mubr.bf16.gmra.mxu0 %v728
    %v1609 = vpop.f32.mrf.mxu0
    %v1610 = vadd.f32 %v1321, %v1609
    %v1611 = vpop.f32.mrf.mxu0
    %v1612 = vpop.f32.mrf.mxu0
    %v1613 = vadd.f32 %v1324, %v1612
    %v1614 = vpop.f32.mrf.mxu0
    %1615 = vmatprep.mubr.bf16.mxu0 %v733
    %1616 = vmatmul.mubr.bf16.gmra.mxu0 %v732
    %v1617 = vpop.f32.mrf.mxu0
    %v1618 = vadd.f32 %v1329, %v1617
    %v1619 = vpop.f32.mrf.mxu0
    %v1620 = vpop.f32.mrf.mxu0
    %v1621 = vadd.f32 %v1332, %v1620
    %v1622 = vpop.f32.mrf.mxu0
    %1623 = vmatprep.mubr.bf16.mxu0 %v737
    %1624 = vmatmul.mubr.bf16.gmra.mxu0 %v736
    %v1625 = vpop.f32.mrf.mxu0
    %v1626 = vadd.f32 %v1337, %v1625
    %v1627 = vpop.f32.mrf.mxu0
    %v1628 = vpop.f32.mrf.mxu0
    %v1629 = vadd.f32 %v1340, %v1628
    %v1630 = vpop.f32.mrf.mxu0
    %1631 = vmatprep.mubr.bf16.mxu0 %v741
    %1632 = vmatmul.mubr.bf16.gmra.mxu0 %v740
    %v1633 = vpop.f32.mrf.mxu0
    %v1634 = vadd.f32 %v1345, %v1633
    %v1635 = vpop.f32.mrf.mxu0
    %v1636 = vpop.f32.mrf.mxu0
    %v1637 = vadd.f32 %v1348, %v1636
    %v1638 = vpop.f32.mrf.mxu0
    %1639 = vdwg.mxu0
    %v1640 = vpack.c.bf16 %v1389, %v1386
    %v1641 = vpack.c.bf16 %v1397, %v1394
    %v1642 = vpack.c.bf16 %v1405, %v1402
    %v1643 = vpack.c.bf16 %v1413, %v1410
    %v1644 = vpack.c.bf16 %v1421, %v1418
    %v1645 = vpack.c.bf16 %v1429, %v1426
    %v1646 = vpack.c.bf16 %v1437, %v1434
    %v1647 = vpack.c.bf16 %v1445, %v1442
    %v1648 = vpack.c.bf16 %v1453, %v1450
    %v1649 = vpack.c.bf16 %v1461, %v1458
    %v1650 = vpack.c.bf16 %v1469, %v1466
    %v1651 = vpack.c.bf16 %v1477, %v1474
    %v1652 = vpack.c.bf16 %v1485, %v1482
    %v1653 = vpack.c.bf16 %v1493, %v1490
    %v1654 = vpack.c.bf16 %v1501, %v1498
    %v1655 = vpack.c.bf16 %v1509, %v1506
    %v1656 = vpack.c.bf16 %v1517, %v1514
    %v1657 = vpack.c.bf16 %v1525, %v1522
    %v1658 = vpack.c.bf16 %v1533, %v1530
    %v1659 = vpack.c.bf16 %v1541, %v1538
    %v1660 = vpack.c.bf16 %v1549, %v1546
    %v1661 = vpack.c.bf16 %v1557, %v1554
    %v1662 = vpack.c.bf16 %v1565, %v1562
    %v1663 = vpack.c.bf16 %v1573, %v1570
    %v1664 = vpack.c.bf16 %v1581, %v1578
    %v1665 = vpack.c.bf16 %v1589, %v1586
    %v1666 = vpack.c.bf16 %v1597, %v1594
    %v1667 = vpack.c.bf16 %v1605, %v1602
    %v1668 = vpack.c.bf16 %v1613, %v1610
    %v1669 = vpack.c.bf16 %v1621, %v1618
    %v1670 = vpack.c.bf16 %v1629, %v1626
    %v1671 = vpack.c.bf16 %v1637, %v1634
    %v1672 = vld [vmem:[%s2] sm:$0xf]
    %v1673 = vld [vmem:[%s2 + $0x4] sm:$0xf]
    %v1674 = vld [vmem:[%s3] sm:$0x1]
    %v1676 = vlaneseq
    %v1677 = vshrl.u32 %v1676, 7
    %v1678 = vsub.s32 0, %v1677
    %v1679 = vrot.slane %v1674, %v1678
    %v1683 = vunpack.c.l.b16 %v1672
    %v1684 = vunpack.c.l.b16 %v1673
    %v1685 = vpack.c.b16 %v1684, %v1683
    %vm1687 = vcmask 130048
    %v1689 = vsel %vm1687, %v1640, 0
    %v1692 = vsel %vm1687, %v1641, 0
    %v1695 = vsel %vm1687, %v1642, 0
    %v1698 = vsel %vm1687, %v1643, 0
    %v1701 = vsel %vm1687, %v1644, 0
    %v1704 = vsel %vm1687, %v1645, 0
    %v1707 = vsel %vm1687, %v1646, 0
    %v1710 = vsel %vm1687, %v1647, 0
    %v1713 = vsel %vm1687, %v1648, 0
    %v1716 = vsel %vm1687, %v1649, 0
    %v1719 = vsel %vm1687, %v1650, 0
    %v1722 = vsel %vm1687, %v1651, 0
    %v1725 = vsel %vm1687, %v1652, 0
    %v1728 = vsel %vm1687, %v1653, 0
    %v1731 = vsel %vm1687, %v1654, 0
    %v1734 = vsel %vm1687, %v1655, 0
    %v1737 = vsel %vm1687, %v1656, 0
    %v1740 = vsel %vm1687, %v1657, 0
    %v1743 = vsel %vm1687, %v1658, 0
    %v1746 = vsel %vm1687, %v1659, 0
    %v1749 = vsel %vm1687, %v1660, 0
    %v1752 = vsel %vm1687, %v1661, 0
    %v1755 = vsel %vm1687, %v1662, 0
    %v1758 = vsel %vm1687, %v1663, 0
    %v1761 = vsel %vm1687, %v1664, 0
    %v1764 = vsel %vm1687, %v1665, 0
    %v1767 = vsel %vm1687, %v1666, 0
    %v1770 = vsel %vm1687, %v1667, 0
    %v1773 = vsel %vm1687, %v1668, 0
    %v1776 = vsel %vm1687, %v1669, 0
    %v1779 = vsel %vm1687, %v1670, 0
    %v1782 = vsel %vm1687, %v1671, 0
    %1784 = vmatprep.subr.bf16.mxu0 0
    %1785 = vmatpush1.bf16.msra.mxu0 0
    %1786 = vmatprep.subr.bf16.mxu0 0
    %1787 = vmatpush1.bf16.msra.mxu0 0
    %1788 = vmatprep.subr.bf16.mxu0 0
    %1789 = vmatpush1.bf16.msra.mxu0 0
    %1790 = vmatprep.subr.bf16.mxu0 0
    %1791 = vmatpush1.bf16.msra.mxu0 0
    %1792 = vmatprep.subr.bf16.mxu0 0
    %1793 = vmatpush1.bf16.msra.mxu0 0
    %1794 = vmatprep.subr.bf16.mxu0 0
    %1795 = vmatpush1.bf16.msra.mxu0 0
    %1796 = vmatprep.subr.bf16.mxu0 0
    %1797 = vmatpush1.bf16.msra.mxu0 0
    %1798 = vmatprep.subr.bf16.mxu0 0
    %1799 = vmatpush1.bf16.msra.mxu0 %v1685
    %1800 = vmatprep.subr.bf16.mxu0 0
    %1801 = vmatpush2.bf16.msra.mxu0 0
    %1802 = vmatprep.subr.bf16.mxu0 0
    %1803 = vmatpush2.bf16.msra.mxu0 0
    %1804 = vmatprep.subr.bf16.mxu0 0
    %1805 = vmatpush2.bf16.msra.mxu0 0
    %1806 = vmatprep.subr.bf16.mxu0 0
    %1807 = vmatpush2.bf16.msra.mxu0 0
    %1808 = vmatprep.subr.bf16.mxu0 0
    %1809 = vmatpush2.bf16.msra.mxu0 0
    %1810 = vmatprep.subr.bf16.mxu0 0
    %1811 = vmatpush2.bf16.msra.mxu0 0
    %1812 = vmatprep.subr.bf16.mxu0 0
    %1813 = vmatpush2.bf16.msra.mxu0 0
    %1814 = vmatprep.subr.bf16.mxu0 0
    %1815 = vmatpush2.bf16.msra.mxu0 0
    %1816 = vmatprep.mubr.bf16.mxu0 0
    %1817 = vmatmul.mubr.bf16.gmra.mxu0 %v1689
    %v1818 = vpop.f32.mrf.mxu0
    %v1819 = vadd.f32 %v1679, %v1818
    %v1820 = vpop.f32.mrf.mxu0
    %v1821 = vpop.f32.mrf.mxu0
    %v1822 = vadd.f32 %v1679, %v1821
    %v1823 = vpop.f32.mrf.mxu0
    %1824 = vmatprep.mubr.bf16.mxu0 0
    %1825 = vmatmul.mubr.bf16.gmra.mxu0 %v1692
    %v1826 = vpop.f32.mrf.mxu0
    %v1827 = vadd.f32 %v1679, %v1826
    %v1828 = vpop.f32.mrf.mxu0
    %v1829 = vpop.f32.mrf.mxu0
    %v1830 = vadd.f32 %v1679, %v1829
    %v1831 = vpop.f32.mrf.mxu0
    %1832 = vmatprep.mubr.bf16.mxu0 0
    %1833 = vmatmul.mubr.bf16.gmra.mxu0 %v1695
    %v1834 = vpop.f32.mrf.mxu0
    %v1835 = vadd.f32 %v1679, %v1834
    %v1836 = vpop.f32.mrf.mxu0
    %v1837 = vpop.f32.mrf.mxu0
    %v1838 = vadd.f32 %v1679, %v1837
    %v1839 = vpop.f32.mrf.mxu0
    %1840 = vmatprep.mubr.bf16.mxu0 0
    %1841 = vmatmul.mubr.bf16.gmra.mxu0 %v1698
    %v1842 = vpop.f32.mrf.mxu0
    %v1843 = vadd.f32 %v1679, %v1842
    %v1844 = vpop.f32.mrf.mxu0
    %v1845 = vpop.f32.mrf.mxu0
    %v1846 = vadd.f32 %v1679, %v1845
    %v1847 = vpop.f32.mrf.mxu0
    %1848 = vmatprep.mubr.bf16.mxu0 0
    %1849 = vmatmul.mubr.bf16.gmra.mxu0 %v1701
    %v1850 = vpop.f32.mrf.mxu0
    %v1851 = vadd.f32 %v1679, %v1850
    %v1852 = vpop.f32.mrf.mxu0
    %v1853 = vpop.f32.mrf.mxu0
    %v1854 = vadd.f32 %v1679, %v1853
    %v1855 = vpop.f32.mrf.mxu0
    %1856 = vmatprep.mubr.bf16.mxu0 0
    %1857 = vmatmul.mubr.bf16.gmra.mxu0 %v1704
    %v1858 = vpop.f32.mrf.mxu0
    %v1859 = vadd.f32 %v1679, %v1858
    %v1860 = vpop.f32.mrf.mxu0
    %v1861 = vpop.f32.mrf.mxu0
    %v1862 = vadd.f32 %v1679, %v1861
    %v1863 = vpop.f32.mrf.mxu0
    %1864 = vmatprep.mubr.bf16.mxu0 0
    %1865 = vmatmul.mubr.bf16.gmra.mxu0 %v1707
    %v1866 = vpop.f32.mrf.mxu0
    %v1867 = vadd.f32 %v1679, %v1866
    %v1868 = vpop.f32.mrf.mxu0
    %v1869 = vpop.f32.mrf.mxu0
    %v1870 = vadd.f32 %v1679, %v1869
    %v1871 = vpop.f32.mrf.mxu0
    %1872 = vmatprep.mubr.bf16.mxu0 0
    %1873 = vmatmul.mubr.bf16.gmra.mxu0 %v1710
    %v1874 = vpop.f32.mrf.mxu0
    %v1875 = vadd.f32 %v1679, %v1874
    %v1876 = vpop.f32.mrf.mxu0
    %v1877 = vpop.f32.mrf.mxu0
    %v1878 = vadd.f32 %v1679, %v1877
    %v1879 = vpop.f32.mrf.mxu0
    %1880 = vmatprep.mubr.bf16.mxu0 0
    %1881 = vmatmul.mubr.bf16.gmra.mxu0 %v1713
    %v1882 = vpop.f32.mrf.mxu0
    %v1883 = vadd.f32 %v1679, %v1882
    %v1884 = vpop.f32.mrf.mxu0
    %v1885 = vpop.f32.mrf.mxu0
    %v1886 = vadd.f32 %v1679, %v1885
    %v1887 = vpop.f32.mrf.mxu0
    %1888 = vmatprep.mubr.bf16.mxu0 0
    %1889 = vmatmul.mubr.bf16.gmra.mxu0 %v1716
    %v1890 = vpop.f32.mrf.mxu0
    %v1891 = vadd.f32 %v1679, %v1890
    %v1892 = vpop.f32.mrf.mxu0
    %v1893 = vpop.f32.mrf.mxu0
    %v1894 = vadd.f32 %v1679, %v1893
    %v1895 = vpop.f32.mrf.mxu0
    %1896 = vmatprep.mubr.bf16.mxu0 0
    %1897 = vmatmul.mubr.bf16.gmra.mxu0 %v1719
    %v1898 = vpop.f32.mrf.mxu0
    %v1899 = vadd.f32 %v1679, %v1898
    %v1900 = vpop.f32.mrf.mxu0
    %v1901 = vpop.f32.mrf.mxu0
    %v1902 = vadd.f32 %v1679, %v1901
    %v1903 = vpop.f32.mrf.mxu0
    %1904 = vmatprep.mubr.bf16.mxu0 0
    %1905 = vmatmul.mubr.bf16.gmra.mxu0 %v1722
    %v1906 = vpop.f32.mrf.mxu0
    %v1907 = vadd.f32 %v1679, %v1906
    %v1908 = vpop.f32.mrf.mxu0
    %v1909 = vpop.f32.mrf.mxu0
    %v1910 = vadd.f32 %v1679, %v1909
    %v1911 = vpop.f32.mrf.mxu0
    %1912 = vmatprep.mubr.bf16.mxu0 0
    %1913 = vmatmul.mubr.bf16.gmra.mxu0 %v1725
    %v1914 = vpop.f32.mrf.mxu0
    %v1915 = vadd.f32 %v1679, %v1914
    %v1916 = vpop.f32.mrf.mxu0
    %v1917 = vpop.f32.mrf.mxu0
    %v1918 = vadd.f32 %v1679, %v1917
    %v1919 = vpop.f32.mrf.mxu0
    %1920 = vmatprep.mubr.bf16.mxu0 0
    %1921 = vmatmul.mubr.bf16.gmra.mxu0 %v1728
    %v1922 = vpop.f32.mrf.mxu0
    %v1923 = vadd.f32 %v1679, %v1922
    %v1924 = vpop.f32.mrf.mxu0
    %v1925 = vpop.f32.mrf.mxu0
    %v1926 = vadd.f32 %v1679, %v1925
    %v1927 = vpop.f32.mrf.mxu0
    %1928 = vmatprep.mubr.bf16.mxu0 0
    %1929 = vmatmul.mubr.bf16.gmra.mxu0 %v1731
    %v1930 = vpop.f32.mrf.mxu0
    %v1931 = vadd.f32 %v1679, %v1930
    %v1932 = vpop.f32.mrf.mxu0
    %v1933 = vpop.f32.mrf.mxu0
    %v1934 = vadd.f32 %v1679, %v1933
    %v1935 = vpop.f32.mrf.mxu0
    %1936 = vmatprep.mubr.bf16.mxu0 0
    %1937 = vmatmul.mubr.bf16.gmra.mxu0 %v1734
    %v1938 = vpop.f32.mrf.mxu0
    %v1939 = vadd.f32 %v1679, %v1938
    %v1940 = vpop.f32.mrf.mxu0
    %v1941 = vpop.f32.mrf.mxu0
    %v1942 = vadd.f32 %v1679, %v1941
    %v1943 = vpop.f32.mrf.mxu0
    %1944 = vmatprep.mubr.bf16.mxu0 0
    %1945 = vmatmul.mubr.bf16.gmra.mxu0 %v1737
    %v1946 = vpop.f32.mrf.mxu0
    %v1947 = vadd.f32 %v1679, %v1946
    %v1948 = vpop.f32.mrf.mxu0
    %v1949 = vpop.f32.mrf.mxu0
    %v1950 = vadd.f32 %v1679, %v1949
    %v1951 = vpop.f32.mrf.mxu0
    %1952 = vmatprep.mubr.bf16.mxu0 0
    %1953 = vmatmul.mubr.bf16.gmra.mxu0 %v1740
    %v1954 = vpop.f32.mrf.mxu0
    %v1955 = vadd.f32 %v1679, %v1954
    %v1956 = vpop.f32.mrf.mxu0
    %v1957 = vpop.f32.mrf.mxu0
    %v1958 = vadd.f32 %v1679, %v1957
    %v1959 = vpop.f32.mrf.mxu0
    %1960 = vmatprep.mubr.bf16.mxu0 0
    %1961 = vmatmul.mubr.bf16.gmra.mxu0 %v1743
    %v1962 = vpop.f32.mrf.mxu0
    %v1963 = vadd.f32 %v1679, %v1962
    %v1964 = vpop.f32.mrf.mxu0
    %v1965 = vpop.f32.mrf.mxu0
    %v1966 = vadd.f32 %v1679, %v1965
    %v1967 = vpop.f32.mrf.mxu0
    %1968 = vmatprep.mubr.bf16.mxu0 0
    %1969 = vmatmul.mubr.bf16.gmra.mxu0 %v1746
    %v1970 = vpop.f32.mrf.mxu0
    %v1971 = vadd.f32 %v1679, %v1970
    %v1972 = vpop.f32.mrf.mxu0
    %v1973 = vpop.f32.mrf.mxu0
    %v1974 = vadd.f32 %v1679, %v1973
    %v1975 = vpop.f32.mrf.mxu0
    %1976 = vmatprep.mubr.bf16.mxu0 0
    %1977 = vmatmul.mubr.bf16.gmra.mxu0 %v1749
    %v1978 = vpop.f32.mrf.mxu0
    %v1979 = vadd.f32 %v1679, %v1978
    %v1980 = vpop.f32.mrf.mxu0
    %v1981 = vpop.f32.mrf.mxu0
    %v1982 = vadd.f32 %v1679, %v1981
    %v1983 = vpop.f32.mrf.mxu0
    %1984 = vmatprep.mubr.bf16.mxu0 0
    %1985 = vmatmul.mubr.bf16.gmra.mxu0 %v1752
    %v1986 = vpop.f32.mrf.mxu0
    %v1987 = vadd.f32 %v1679, %v1986
    %v1988 = vpop.f32.mrf.mxu0
    %v1989 = vpop.f32.mrf.mxu0
    %v1990 = vadd.f32 %v1679, %v1989
    %v1991 = vpop.f32.mrf.mxu0
    %1992 = vmatprep.mubr.bf16.mxu0 0
    %1993 = vmatmul.mubr.bf16.gmra.mxu0 %v1755
    %v1994 = vpop.f32.mrf.mxu0
    %v1995 = vadd.f32 %v1679, %v1994
    %v1996 = vpop.f32.mrf.mxu0
    %v1997 = vpop.f32.mrf.mxu0
    %v1998 = vadd.f32 %v1679, %v1997
    %v1999 = vpop.f32.mrf.mxu0
    %2000 = vmatprep.mubr.bf16.mxu0 0
    %2001 = vmatmul.mubr.bf16.gmra.mxu0 %v1758
    %v2002 = vpop.f32.mrf.mxu0
    %v2003 = vadd.f32 %v1679, %v2002
    %v2004 = vpop.f32.mrf.mxu0
    %v2005 = vpop.f32.mrf.mxu0
    %v2006 = vadd.f32 %v1679, %v2005
    %v2007 = vpop.f32.mrf.mxu0
    %2008 = vmatprep.mubr.bf16.mxu0 0
    %2009 = vmatmul.mubr.bf16.gmra.mxu0 %v1761
    %v2010 = vpop.f32.mrf.mxu0
    %v2011 = vadd.f32 %v1679, %v2010
    %v2012 = vpop.f32.mrf.mxu0
    %v2013 = vpop.f32.mrf.mxu0
    %v2014 = vadd.f32 %v1679, %v2013
    %v2015 = vpop.f32.mrf.mxu0
    %2016 = vmatprep.mubr.bf16.mxu0 0
    %2017 = vmatmul.mubr.bf16.gmra.mxu0 %v1764
    %v2018 = vpop.f32.mrf.mxu0
    %v2019 = vadd.f32 %v1679, %v2018
    %v2020 = vpop.f32.mrf.mxu0
    %v2021 = vpop.f32.mrf.mxu0
    %v2022 = vadd.f32 %v1679, %v2021
    %v2023 = vpop.f32.mrf.mxu0
    %2024 = vmatprep.mubr.bf16.mxu0 0
    %2025 = vmatmul.mubr.bf16.gmra.mxu0 %v1767
    %v2026 = vpop.f32.mrf.mxu0
    %v2027 = vadd.f32 %v1679, %v2026
    %v2028 = vpop.f32.mrf.mxu0
    %v2029 = vpop.f32.mrf.mxu0
    %v2030 = vadd.f32 %v1679, %v2029
    %v2031 = vpop.f32.mrf.mxu0
    %2032 = vmatprep.mubr.bf16.mxu0 0
    %2033 = vmatmul.mubr.bf16.gmra.mxu0 %v1770
    %v2034 = vpop.f32.mrf.mxu0
    %v2035 = vadd.f32 %v1679, %v2034
    %v2036 = vpop.f32.mrf.mxu0
    %v2037 = vpop.f32.mrf.mxu0
    %v2038 = vadd.f32 %v1679, %v2037
    %v2039 = vpop.f32.mrf.mxu0
    %2040 = vmatprep.mubr.bf16.mxu0 0
    %2041 = vmatmul.mubr.bf16.gmra.mxu0 %v1773
    %v2042 = vpop.f32.mrf.mxu0
    %v2043 = vadd.f32 %v1679, %v2042
    %v2044 = vpop.f32.mrf.mxu0
    %v2045 = vpop.f32.mrf.mxu0
    %v2046 = vadd.f32 %v1679, %v2045
    %v2047 = vpop.f32.mrf.mxu0
    %2048 = vmatprep.mubr.bf16.mxu0 0
    %2049 = vmatmul.mubr.bf16.gmra.mxu0 %v1776
    %v2050 = vpop.f32.mrf.mxu0
    %v2051 = vadd.f32 %v1679, %v2050
    %v2052 = vpop.f32.mrf.mxu0
    %v2053 = vpop.f32.mrf.mxu0
    %v2054 = vadd.f32 %v1679, %v2053
    %v2055 = vpop.f32.mrf.mxu0
    %2056 = vmatprep.mubr.bf16.mxu0 0
    %2057 = vmatmul.mubr.bf16.gmra.mxu0 %v1779
    %v2058 = vpop.f32.mrf.mxu0
    %v2059 = vadd.f32 %v1679, %v2058
    %v2060 = vpop.f32.mrf.mxu0
    %v2061 = vpop.f32.mrf.mxu0
    %v2062 = vadd.f32 %v1679, %v2061
    %v2063 = vpop.f32.mrf.mxu0
    %2064 = vmatprep.mubr.bf16.mxu0 0
    %2065 = vmatmul.mubr.bf16.gmra.mxu0 %v1782
    %v2066 = vpop.f32.mrf.mxu0
    %v2067 = vadd.f32 %v1679, %v2066
    %v2068 = vpop.f32.mrf.mxu0
    %v2069 = vpop.f32.mrf.mxu0
    %v2070 = vadd.f32 %v1679, %v2069
    %v2071 = vpop.f32.mrf.mxu0
    %2072 = vdwg.mxu0
    %v2073 = vmax.f32 %v1819, 0.0
    %v2074 = vmax.f32 %v1822, 0.0
    %v2075 = vmax.f32 %v1827, 0.0
    %v2076 = vmax.f32 %v1830, 0.0
    %v2077 = vmax.f32 %v1835, 0.0
    %v2078 = vmax.f32 %v1838, 0.0
    %v2079 = vmax.f32 %v1843, 0.0
    %v2080 = vmax.f32 %v1846, 0.0
    %v2081 = vmax.f32 %v1851, 0.0
    %v2082 = vmax.f32 %v1854, 0.0
    %v2083 = vmax.f32 %v1859, 0.0
    %v2084 = vmax.f32 %v1862, 0.0
    %v2085 = vmax.f32 %v1867, 0.0
    %v2086 = vmax.f32 %v1870, 0.0
    %v2087 = vmax.f32 %v1875, 0.0
    %v2088 = vmax.f32 %v1878, 0.0
    %v2089 = vmax.f32 %v1883, 0.0
    %v2090 = vmax.f32 %v1886, 0.0
    %v2091 = vmax.f32 %v1891, 0.0
    %v2092 = vmax.f32 %v1894, 0.0
    %v2093 = vmax.f32 %v1899, 0.0
    %v2094 = vmax.f32 %v1902, 0.0
    %v2095 = vmax.f32 %v1907, 0.0
    %v2096 = vmax.f32 %v1910, 0.0
    %v2097 = vmax.f32 %v1915, 0.0
    %v2098 = vmax.f32 %v1918, 0.0
    %v2099 = vmax.f32 %v1923, 0.0
    %v2100 = vmax.f32 %v1926, 0.0
    %v2101 = vmax.f32 %v1931, 0.0
    %v2102 = vmax.f32 %v1934, 0.0
    %v2103 = vmax.f32 %v1939, 0.0
    %v2104 = vmax.f32 %v1942, 0.0
    %v2105 = vmax.f32 %v1947, 0.0
    %v2106 = vmax.f32 %v1950, 0.0
    %v2107 = vmax.f32 %v1955, 0.0
    %v2108 = vmax.f32 %v1958, 0.0
    %v2109 = vmax.f32 %v1963, 0.0
    %v2110 = vmax.f32 %v1966, 0.0
    %v2111 = vmax.f32 %v1971, 0.0
    %v2112 = vmax.f32 %v1974, 0.0
    %v2113 = vmax.f32 %v1979, 0.0
    %v2114 = vmax.f32 %v1982, 0.0
    %v2115 = vmax.f32 %v1987, 0.0
    %v2116 = vmax.f32 %v1990, 0.0
    %v2117 = vmax.f32 %v1995, 0.0
    %v2118 = vmax.f32 %v1998, 0.0
    %v2119 = vmax.f32 %v2003, 0.0
    %v2120 = vmax.f32 %v2006, 0.0
    %v2121 = vmax.f32 %v2011, 0.0
    %v2122 = vmax.f32 %v2014, 0.0
    %v2123 = vmax.f32 %v2019, 0.0
    %v2124 = vmax.f32 %v2022, 0.0
    %v2125 = vmax.f32 %v2027, 0.0
    %v2126 = vmax.f32 %v2030, 0.0
    %v2127 = vmax.f32 %v2035, 0.0
    %v2128 = vmax.f32 %v2038, 0.0
    %v2129 = vmax.f32 %v2043, 0.0
    %v2130 = vmax.f32 %v2046, 0.0
    %v2131 = vmax.f32 %v2051, 0.0
    %v2132 = vmax.f32 %v2054, 0.0
    %v2133 = vmax.f32 %v2059, 0.0
    %v2134 = vmax.f32 %v2062, 0.0
    %v2135 = vmax.f32 %v2067, 0.0
    %v2136 = vmax.f32 %v2070, 0.0
    %v2137 = vpack.c.bf16 %v2074, %v2073
    %v2138 = vpack.c.bf16 %v2076, %v2075
    %v2139 = vpack.c.bf16 %v2078, %v2077
    %v2140 = vpack.c.bf16 %v2080, %v2079
    %v2141 = vpack.c.bf16 %v2082, %v2081
    %v2142 = vpack.c.bf16 %v2084, %v2083
    %v2143 = vpack.c.bf16 %v2086, %v2085
    %v2144 = vpack.c.bf16 %v2088, %v2087
    %v2145 = vpack.c.bf16 %v2090, %v2089
    %v2146 = vpack.c.bf16 %v2092, %v2091
    %v2147 = vpack.c.bf16 %v2094, %v2093
    %v2148 = vpack.c.bf16 %v2096, %v2095
    %v2149 = vpack.c.bf16 %v2098, %v2097
    %v2150 = vpack.c.bf16 %v2100, %v2099
    %v2151 = vpack.c.bf16 %v2102, %v2101
    %v2152 = vpack.c.bf16 %v2104, %v2103
    %v2153 = vpack.c.bf16 %v2106, %v2105
    %v2154 = vpack.c.bf16 %v2108, %v2107
    %v2155 = vpack.c.bf16 %v2110, %v2109
    %v2156 = vpack.c.bf16 %v2112, %v2111
    %v2157 = vpack.c.bf16 %v2114, %v2113
    %v2158 = vpack.c.bf16 %v2116, %v2115
    %v2159 = vpack.c.bf16 %v2118, %v2117
    %v2160 = vpack.c.bf16 %v2120, %v2119
    %v2161 = vpack.c.bf16 %v2122, %v2121
    %v2162 = vpack.c.bf16 %v2124, %v2123
    %v2163 = vpack.c.bf16 %v2126, %v2125
    %v2164 = vpack.c.bf16 %v2128, %v2127
    %v2165 = vpack.c.bf16 %v2130, %v2129
    %v2166 = vpack.c.bf16 %v2132, %v2131
    %v2167 = vpack.c.bf16 %v2134, %v2133
    %v2168 = vpack.c.bf16 %v2136, %v2135
    %2169 = vmatprep.subr.bf16.mxu0 0
    %2170 = vmatpush1.bf16.msra.mxu0 %v2144
    %2171 = vmatprep.subr.bf16.mxu0 0
    %2172 = vmatpush1.bf16.msra.mxu0 %v2143
    %2173 = vmatprep.subr.bf16.mxu0 0
    %2174 = vmatpush1.bf16.msra.mxu0 %v2142
    %2175 = vmatprep.subr.bf16.mxu0 0
    %2176 = vmatpush1.bf16.msra.mxu0 %v2141
    %2177 = vmatprep.subr.bf16.mxu0 0
    %2178 = vmatpush1.bf16.msra.mxu0 %v2140
    %2179 = vmatprep.subr.bf16.mxu0 0
    %2180 = vmatpush1.bf16.msra.mxu0 %v2139
    %2181 = vmatprep.subr.bf16.mxu0 0
    %2182 = vmatpush1.bf16.msra.mxu0 %v2138
    %2183 = vmatprep.subr.bf16.mxu0 0
    %2184 = vmatpush1.bf16.msra.mxu0 %v2137
    %2185 = vmatprep.subr.bf16.mxu0 0
    %2186 = vmatpush2.bf16.msra.mxu0 %v2152
    %2187 = vmatprep.subr.bf16.mxu0 0
    %2188 = vmatpush2.bf16.msra.mxu0 %v2151
    %2189 = vmatprep.subr.bf16.mxu0 0
    %2190 = vmatpush2.bf16.msra.mxu0 %v2150
    %2191 = vmatprep.subr.bf16.mxu0 0
    %2192 = vmatpush2.bf16.msra.mxu0 %v2149
    %2193 = vmatprep.subr.bf16.mxu0 0
    %2194 = vmatpush2.bf16.msra.mxu0 %v2148
    %2195 = vmatprep.subr.bf16.mxu0 0
    %2196 = vmatpush2.bf16.msra.mxu0 %v2147
    %2197 = vmatprep.subr.bf16.mxu0 0
    %2198 = vmatpush2.bf16.msra.mxu0 %v2146
    %2199 = vmatprep.subr.bf16.mxu0 0
    %2200 = vmatpush2.bf16.msra.mxu0 %v2145
    %2201 = vmatprep.mubr.bf16.mxu0 %v615
    %2202 = vmatmul.mubr.bf16.gmra.mxu0 %v614
    %v2203 = vpop.f32.mrf.mxu0
    %v2204 = vadd.f32 0.0, %v2203
    %v2205 = vpop.f32.mrf.mxu0
    %v2206 = vpop.f32.mrf.mxu0
    %v2207 = vadd.f32 0.0, %v2206
    %v2208 = vpop.f32.mrf.mxu0
    %2209 = vmatprep.mubr.bf16.mxu0 %v619
    %2210 = vmatmul.mubr.bf16.gmra.mxu0 %v618
    %v2211 = vpop.f32.mrf.mxu0
    %v2212 = vadd.f32 0.0, %v2211
    %v2213 = vpop.f32.mrf.mxu0
    %v2214 = vpop.f32.mrf.mxu0
    %v2215 = vadd.f32 0.0, %v2214
    %v2216 = vpop.f32.mrf.mxu0
    %2217 = vmatprep.mubr.bf16.mxu0 %v623
    %2218 = vmatmul.mubr.bf16.gmra.mxu0 %v622
    %v2219 = vpop.f32.mrf.mxu0
    %v2220 = vadd.f32 0.0, %v2219
    %v2221 = vpop.f32.mrf.mxu0
    %v2222 = vpop.f32.mrf.mxu0
    %v2223 = vadd.f32 0.0, %v2222
    %v2224 = vpop.f32.mrf.mxu0
    %2225 = vmatprep.mubr.bf16.mxu0 %v627
    %2226 = vmatmul.mubr.bf16.gmra.mxu0 %v626
    %v2227 = vpop.f32.mrf.mxu0
    %v2228 = vadd.f32 0.0, %v2227
    %v2229 = vpop.f32.mrf.mxu0
    %v2230 = vpop.f32.mrf.mxu0
    %v2231 = vadd.f32 0.0, %v2230
    %v2232 = vpop.f32.mrf.mxu0
    %2233 = vmatprep.mubr.bf16.mxu0 %v631
    %2234 = vmatmul.mubr.bf16.gmra.mxu0 %v630
    %v2235 = vpop.f32.mrf.mxu0
    %v2236 = vadd.f32 0.0, %v2235
    %v2237 = vpop.f32.mrf.mxu0
    %v2238 = vpop.f32.mrf.mxu0
    %v2239 = vadd.f32 0.0, %v2238
    %v2240 = vpop.f32.mrf.mxu0
    %2241 = vmatprep.mubr.bf16.mxu0 %v635
    %2242 = vmatmul.mubr.bf16.gmra.mxu0 %v634
    %v2243 = vpop.f32.mrf.mxu0
    %v2244 = vadd.f32 0.0, %v2243
    %v2245 = vpop.f32.mrf.mxu0
    %v2246 = vpop.f32.mrf.mxu0
    %v2247 = vadd.f32 0.0, %v2246
    %v2248 = vpop.f32.mrf.mxu0
    %2249 = vmatprep.mubr.bf16.mxu0 %v639
    %2250 = vmatmul.mubr.bf16.gmra.mxu0 %v638
    %v2251 = vpop.f32.mrf.mxu0
    %v2252 = vadd.f32 0.0, %v2251
    %v2253 = vpop.f32.mrf.mxu0
    %v2254 = vpop.f32.mrf.mxu0
    %v2255 = vadd.f32 0.0, %v2254
    %v2256 = vpop.f32.mrf.mxu0
    %2257 = vmatprep.mubr.bf16.mxu0 %v643
    %2258 = vmatmul.mubr.bf16.gmra.mxu0 %v642
    %v2259 = vpop.f32.mrf.mxu0
    %v2260 = vadd.f32 0.0, %v2259
    %v2261 = vpop.f32.mrf.mxu0
    %v2262 = vpop.f32.mrf.mxu0
    %v2263 = vadd.f32 0.0, %v2262
    %v2264 = vpop.f32.mrf.mxu0
    %2265 = vmatprep.mubr.bf16.mxu0 %v647
    %2266 = vmatmul.mubr.bf16.gmra.mxu0 %v646
    %v2267 = vpop.f32.mrf.mxu0
    %v2268 = vadd.f32 0.0, %v2267
    %v2269 = vpop.f32.mrf.mxu0
    %v2270 = vpop.f32.mrf.mxu0
    %v2271 = vadd.f32 0.0, %v2270
    %v2272 = vpop.f32.mrf.mxu0
    %2273 = vmatprep.mubr.bf16.mxu0 %v651
    %2274 = vmatmul.mubr.bf16.gmra.mxu0 %v650
    %v2275 = vpop.f32.mrf.mxu0
    %v2276 = vadd.f32 0.0, %v2275
    %v2277 = vpop.f32.mrf.mxu0
    %v2278 = vpop.f32.mrf.mxu0
    %v2279 = vadd.f32 0.0, %v2278
    %v2280 = vpop.f32.mrf.mxu0
    %2281 = vmatprep.mubr.bf16.mxu0 %v655
    %2282 = vmatmul.mubr.bf16.gmra.mxu0 %v654
    %v2283 = vpop.f32.mrf.mxu0
    %v2284 = vadd.f32 0.0, %v2283
    %v2285 = vpop.f32.mrf.mxu0
    %v2286 = vpop.f32.mrf.mxu0
    %v2287 = vadd.f32 0.0, %v2286
    %v2288 = vpop.f32.mrf.mxu0
    %2289 = vmatprep.mubr.bf16.mxu0 %v659
    %2290 = vmatmul.mubr.bf16.gmra.mxu0 %v658
    %v2291 = vpop.f32.mrf.mxu0
    %v2292 = vadd.f32 0.0, %v2291
    %v2293 = vpop.f32.mrf.mxu0
    %v2294 = vpop.f32.mrf.mxu0
    %v2295 = vadd.f32 0.0, %v2294
    %v2296 = vpop.f32.mrf.mxu0
    %2297 = vmatprep.mubr.bf16.mxu0 %v663
    %2298 = vmatmul.mubr.bf16.gmra.mxu0 %v662
    %v2299 = vpop.f32.mrf.mxu0
    %v2300 = vadd.f32 0.0, %v2299
    %v2301 = vpop.f32.mrf.mxu0
    %v2302 = vpop.f32.mrf.mxu0
    %v2303 = vadd.f32 0.0, %v2302
    %v2304 = vpop.f32.mrf.mxu0
    %2305 = vmatprep.mubr.bf16.mxu0 %v667
    %2306 = vmatmul.mubr.bf16.gmra.mxu0 %v666
    %v2307 = vpop.f32.mrf.mxu0
    %v2308 = vadd.f32 0.0, %v2307
    %v2309 = vpop.f32.mrf.mxu0
    %v2310 = vpop.f32.mrf.mxu0
    %v2311 = vadd.f32 0.0, %v2310
    %v2312 = vpop.f32.mrf.mxu0
    %2313 = vmatprep.mubr.bf16.mxu0 %v671
    %2314 = vmatmul.mubr.bf16.gmra.mxu0 %v670
    %v2315 = vpop.f32.mrf.mxu0
    %v2316 = vadd.f32 0.0, %v2315
    %v2317 = vpop.f32.mrf.mxu0
    %v2318 = vpop.f32.mrf.mxu0
    %v2319 = vadd.f32 0.0, %v2318
    %v2320 = vpop.f32.mrf.mxu0
    %2321 = vmatprep.mubr.bf16.mxu0 %v675
    %2322 = vmatmul.mubr.bf16.gmra.mxu0 %v674
    %v2323 = vpop.f32.mrf.mxu0
    %v2324 = vadd.f32 0.0, %v2323
    %v2325 = vpop.f32.mrf.mxu0
    %v2326 = vpop.f32.mrf.mxu0
    %v2327 = vadd.f32 0.0, %v2326
    %v2328 = vpop.f32.mrf.mxu0
    %2329 = vmatprep.mubr.bf16.mxu0 %v679
    %2330 = vmatmul.mubr.bf16.gmra.mxu0 %v678
    %v2331 = vpop.f32.mrf.mxu0
    %v2332 = vadd.f32 0.0, %v2331
    %v2333 = vpop.f32.mrf.mxu0
    %v2334 = vpop.f32.mrf.mxu0
    %v2335 = vadd.f32 0.0, %v2334
    %v2336 = vpop.f32.mrf.mxu0
    %2337 = vmatprep.mubr.bf16.mxu0 %v683
    %2338 = vmatmul.mubr.bf16.gmra.mxu0 %v682
    %v2339 = vpop.f32.mrf.mxu0
    %v2340 = vadd.f32 0.0, %v2339
    %v2341 = vpop.f32.mrf.mxu0
    %v2342 = vpop.f32.mrf.mxu0
    %v2343 = vadd.f32 0.0, %v2342
    %v2344 = vpop.f32.mrf.mxu0
    %2345 = vmatprep.mubr.bf16.mxu0 %v687
    %2346 = vmatmul.mubr.bf16.gmra.mxu0 %v686
    %v2347 = vpop.f32.mrf.mxu0
    %v2348 = vadd.f32 0.0, %v2347
    %v2349 = vpop.f32.mrf.mxu0
    %v2350 = vpop.f32.mrf.mxu0
    %v2351 = vadd.f32 0.0, %v2350
    %v2352 = vpop.f32.mrf.mxu0
    %2353 = vmatprep.mubr.bf16.mxu0 %v691
    %2354 = vmatmul.mubr.bf16.gmra.mxu0 %v690
    %v2355 = vpop.f32.mrf.mxu0
    %v2356 = vadd.f32 0.0, %v2355
    %v2357 = vpop.f32.mrf.mxu0
    %v2358 = vpop.f32.mrf.mxu0
    %v2359 = vadd.f32 0.0, %v2358
    %v2360 = vpop.f32.mrf.mxu0
    %2361 = vmatprep.mubr.bf16.mxu0 %v695
    %2362 = vmatmul.mubr.bf16.gmra.mxu0 %v694
    %v2363 = vpop.f32.mrf.mxu0
    %v2364 = vadd.f32 0.0, %v2363
    %v2365 = vpop.f32.mrf.mxu0
    %v2366 = vpop.f32.mrf.mxu0
    %v2367 = vadd.f32 0.0, %v2366
    %v2368 = vpop.f32.mrf.mxu0
    %2369 = vmatprep.mubr.bf16.mxu0 %v699
    %2370 = vmatmul.mubr.bf16.gmra.mxu0 %v698
    %v2371 = vpop.f32.mrf.mxu0
    %v2372 = vadd.f32 0.0, %v2371
    %v2373 = vpop.f32.mrf.mxu0
    %v2374 = vpop.f32.mrf.mxu0
    %v2375 = vadd.f32 0.0, %v2374
    %v2376 = vpop.f32.mrf.mxu0
    %2377 = vmatprep.mubr.bf16.mxu0 %v703
    %2378 = vmatmul.mubr.bf16.gmra.mxu0 %v702
    %v2379 = vpop.f32.mrf.mxu0
    %v2380 = vadd.f32 0.0, %v2379
    %v2381 = vpop.f32.mrf.mxu0
    %v2382 = vpop.f32.mrf.mxu0
    %v2383 = vadd.f32 0.0, %v2382
    %v2384 = vpop.f32.mrf.mxu0
    %2385 = vmatprep.mubr.bf16.mxu0 %v707
    %2386 = vmatmul.mubr.bf16.gmra.mxu0 %v706
    %v2387 = vpop.f32.mrf.mxu0
    %v2388 = vadd.f32 0.0, %v2387
    %v2389 = vpop.f32.mrf.mxu0
    %v2390 = vpop.f32.mrf.mxu0
    %v2391 = vadd.f32 0.0, %v2390
    %v2392 = vpop.f32.mrf.mxu0
    %2393 = vmatprep.mubr.bf16.mxu0 %v711
    %2394 = vmatmul.mubr.bf16.gmra.mxu0 %v710
    %v2395 = vpop.f32.mrf.mxu0
    %v2396 = vadd.f32 0.0, %v2395
    %v2397 = vpop.f32.mrf.mxu0
    %v2398 = vpop.f32.mrf.mxu0
    %v2399 = vadd.f32 0.0, %v2398
    %v2400 = vpop.f32.mrf.mxu0
    %2401 = vmatprep.mubr.bf16.mxu0 %v715
    %2402 = vmatmul.mubr.bf16.gmra.mxu0 %v714
    %v2403 = vpop.f32.mrf.mxu0
    %v2404 = vadd.f32 0.0, %v2403
    %v2405 = vpop.f32.mrf.mxu0
    %v2406 = vpop.f32.mrf.mxu0
    %v2407 = vadd.f32 0.0, %v2406
    %v2408 = vpop.f32.mrf.mxu0
    %2409 = vmatprep.mubr.bf16.mxu0 %v719
    %2410 = vmatmul.mubr.bf16.gmra.mxu0 %v718
    %v2411 = vpop.f32.mrf.mxu0
    %v2412 = vadd.f32 0.0, %v2411
    %v2413 = vpop.f32.mrf.mxu0
    %v2414 = vpop.f32.mrf.mxu0
    %v2415 = vadd.f32 0.0, %v2414
    %v2416 = vpop.f32.mrf.mxu0
    %2417 = vmatprep.mubr.bf16.mxu0 %v723
    %2418 = vmatmul.mubr.bf16.gmra.mxu0 %v722
    %v2419 = vpop.f32.mrf.mxu0
    %v2420 = vadd.f32 0.0, %v2419
    %v2421 = vpop.f32.mrf.mxu0
    %v2422 = vpop.f32.mrf.mxu0
    %v2423 = vadd.f32 0.0, %v2422
    %v2424 = vpop.f32.mrf.mxu0
    %2425 = vmatprep.mubr.bf16.mxu0 %v727
    %2426 = vmatmul.mubr.bf16.gmra.mxu0 %v726
    %v2427 = vpop.f32.mrf.mxu0
    %v2428 = vadd.f32 0.0, %v2427
    %v2429 = vpop.f32.mrf.mxu0
    %v2430 = vpop.f32.mrf.mxu0
    %v2431 = vadd.f32 0.0, %v2430
    %v2432 = vpop.f32.mrf.mxu0
    %2433 = vmatprep.mubr.bf16.mxu0 %v731
    %2434 = vmatmul.mubr.bf16.gmra.mxu0 %v730
    %v2435 = vpop.f32.mrf.mxu0
    %v2436 = vadd.f32 0.0, %v2435
    %v2437 = vpop.f32.mrf.mxu0
    %v2438 = vpop.f32.mrf.mxu0
    %v2439 = vadd.f32 0.0, %v2438
    %v2440 = vpop.f32.mrf.mxu0
    %2441 = vmatprep.mubr.bf16.mxu0 %v735
    %2442 = vmatmul.mubr.bf16.gmra.mxu0 %v734
    %v2443 = vpop.f32.mrf.mxu0
    %v2444 = vadd.f32 0.0, %v2443
    %v2445 = vpop.f32.mrf.mxu0
    %v2446 = vpop.f32.mrf.mxu0
    %v2447 = vadd.f32 0.0, %v2446
    %v2448 = vpop.f32.mrf.mxu0
    %2449 = vmatprep.mubr.bf16.mxu0 %v739
    %2450 = vmatmul.mubr.bf16.gmra.mxu0 %v738
    %v2451 = vpop.f32.mrf.mxu0
    %v2452 = vadd.f32 0.0, %v2451
    %v2453 = vpop.f32.mrf.mxu0
    %v2454 = vpop.f32.mrf.mxu0
    %v2455 = vadd.f32 0.0, %v2454
    %v2456 = vpop.f32.mrf.mxu0
    %2457 = vdwg.mxu0
    %2458 = vmatprep.subr.bf16.mxu0 0
    %2459 = vmatpush1.bf16.msra.mxu0 %v2160
    %2460 = vmatprep.subr.bf16.mxu0 0
    %2461 = vmatpush1.bf16.msra.mxu0 %v2159
    %2462 = vmatprep.subr.bf16.mxu0 0
    %2463 = vmatpush1.bf16.msra.mxu0 %v2158
    %2464 = vmatprep.subr.bf16.mxu0 0
    %2465 = vmatpush1.bf16.msra.mxu0 %v2157
    %2466 = vmatprep.subr.bf16.mxu0 0
    %2467 = vmatpush1.bf16.msra.mxu0 %v2156
    %2468 = vmatprep.subr.bf16.mxu0 0
    %2469 = vmatpush1.bf16.msra.mxu0 %v2155
    %2470 = vmatprep.subr.bf16.mxu0 0
    %2471 = vmatpush1.bf16.msra.mxu0 %v2154
    %2472 = vmatprep.subr.bf16.mxu0 0
    %2473 = vmatpush1.bf16.msra.mxu0 %v2153
    %2474 = vmatprep.subr.bf16.mxu0 0
    %2475 = vmatpush2.bf16.msra.mxu0 %v2168
    %2476 = vmatprep.subr.bf16.mxu0 0
    %2477 = vmatpush2.bf16.msra.mxu0 %v2167
    %2478 = vmatprep.subr.bf16.mxu0 0
    %2479 = vmatpush2.bf16.msra.mxu0 %v2166
    %2480 = vmatprep.subr.bf16.mxu0 0
    %2481 = vmatpush2.bf16.msra.mxu0 %v2165
    %2482 = vmatprep.subr.bf16.mxu0 0
    %2483 = vmatpush2.bf16.msra.mxu0 %v2164
    %2484 = vmatprep.subr.bf16.mxu0 0
    %2485 = vmatpush2.bf16.msra.mxu0 %v2163
    %2486 = vmatprep.subr.bf16.mxu0 0
    %2487 = vmatpush2.bf16.msra.mxu0 %v2162
    %2488 = vmatprep.subr.bf16.mxu0 0
    %2489 = vmatpush2.bf16.msra.mxu0 %v2161
    %2490 = vmatprep.mubr.bf16.mxu0 %v617
    %2491 = vmatmul.mubr.bf16.gmra.mxu0 %v616
    %v2492 = vpop.f32.mrf.mxu0
    %v2493 = vadd.f32 %v2204, %v2492
    %v2494 = vpop.f32.mrf.mxu0
    %v2495 = vpop.f32.mrf.mxu0
    %v2496 = vadd.f32 %v2207, %v2495
    %v2497 = vpop.f32.mrf.mxu0
    %2498 = vmatprep.mubr.bf16.mxu0 %v621
    %2499 = vmatmul.mubr.bf16.gmra.mxu0 %v620
    %v2500 = vpop.f32.mrf.mxu0
    %v2501 = vadd.f32 %v2212, %v2500
    %v2502 = vpop.f32.mrf.mxu0
    %v2503 = vpop.f32.mrf.mxu0
    %v2504 = vadd.f32 %v2215, %v2503
    %v2505 = vpop.f32.mrf.mxu0
    %2506 = vmatprep.mubr.bf16.mxu0 %v625
    %2507 = vmatmul.mubr.bf16.gmra.mxu0 %v624
    %v2508 = vpop.f32.mrf.mxu0
    %v2509 = vadd.f32 %v2220, %v2508
    %v2510 = vpop.f32.mrf.mxu0
    %v2511 = vpop.f32.mrf.mxu0
    %v2512 = vadd.f32 %v2223, %v2511
    %v2513 = vpop.f32.mrf.mxu0
    %2514 = vmatprep.mubr.bf16.mxu0 %v629
    %2515 = vmatmul.mubr.bf16.gmra.mxu0 %v628
    %v2516 = vpop.f32.mrf.mxu0
    %v2517 = vadd.f32 %v2228, %v2516
    %v2518 = vpop.f32.mrf.mxu0
    %v2519 = vpop.f32.mrf.mxu0
    %v2520 = vadd.f32 %v2231, %v2519
    %v2521 = vpop.f32.mrf.mxu0
    %2522 = vmatprep.mubr.bf16.mxu0 %v633
    %2523 = vmatmul.mubr.bf16.gmra.mxu0 %v632
    %v2524 = vpop.f32.mrf.mxu0
    %v2525 = vadd.f32 %v2236, %v2524
    %v2526 = vpop.f32.mrf.mxu0
    %v2527 = vpop.f32.mrf.mxu0
    %v2528 = vadd.f32 %v2239, %v2527
    %v2529 = vpop.f32.mrf.mxu0
    %2530 = vmatprep.mubr.bf16.mxu0 %v637
    %2531 = vmatmul.mubr.bf16.gmra.mxu0 %v636
    %v2532 = vpop.f32.mrf.mxu0
    %v2533 = vadd.f32 %v2244, %v2532
    %v2534 = vpop.f32.mrf.mxu0
    %v2535 = vpop.f32.mrf.mxu0
    %v2536 = vadd.f32 %v2247, %v2535
    %v2537 = vpop.f32.mrf.mxu0
    %2538 = vmatprep.mubr.bf16.mxu0 %v641
    %2539 = vmatmul.mubr.bf16.gmra.mxu0 %v640
    %v2540 = vpop.f32.mrf.mxu0
    %v2541 = vadd.f32 %v2252, %v2540
    %v2542 = vpop.f32.mrf.mxu0
    %v2543 = vpop.f32.mrf.mxu0
    %v2544 = vadd.f32 %v2255, %v2543
    %v2545 = vpop.f32.mrf.mxu0
    %2546 = vmatprep.mubr.bf16.mxu0 %v645
    %2547 = vmatmul.mubr.bf16.gmra.mxu0 %v644
    %v2548 = vpop.f32.mrf.mxu0
    %v2549 = vadd.f32 %v2260, %v2548
    %v2550 = vpop.f32.mrf.mxu0
    %v2551 = vpop.f32.mrf.mxu0
    %v2552 = vadd.f32 %v2263, %v2551
    %v2553 = vpop.f32.mrf.mxu0
    %2554 = vmatprep.mubr.bf16.mxu0 %v649
    %2555 = vmatmul.mubr.bf16.gmra.mxu0 %v648
    %v2556 = vpop.f32.mrf.mxu0
    %v2557 = vadd.f32 %v2268, %v2556
    %v2558 = vpop.f32.mrf.mxu0
    %v2559 = vpop.f32.mrf.mxu0
    %v2560 = vadd.f32 %v2271, %v2559
    %v2561 = vpop.f32.mrf.mxu0
    %2562 = vmatprep.mubr.bf16.mxu0 %v653
    %2563 = vmatmul.mubr.bf16.gmra.mxu0 %v652
    %v2564 = vpop.f32.mrf.mxu0
    %v2565 = vadd.f32 %v2276, %v2564
    %v2566 = vpop.f32.mrf.mxu0
    %v2567 = vpop.f32.mrf.mxu0
    %v2568 = vadd.f32 %v2279, %v2567
    %v2569 = vpop.f32.mrf.mxu0
    %2570 = vmatprep.mubr.bf16.mxu0 %v657
    %2571 = vmatmul.mubr.bf16.gmra.mxu0 %v656
    %v2572 = vpop.f32.mrf.mxu0
    %v2573 = vadd.f32 %v2284, %v2572
    %v2574 = vpop.f32.mrf.mxu0
    %v2575 = vpop.f32.mrf.mxu0
    %v2576 = vadd.f32 %v2287, %v2575
    %v2577 = vpop.f32.mrf.mxu0
    %2578 = vmatprep.mubr.bf16.mxu0 %v661
    %2579 = vmatmul.mubr.bf16.gmra.mxu0 %v660
    %v2580 = vpop.f32.mrf.mxu0
    %v2581 = vadd.f32 %v2292, %v2580
    %v2582 = vpop.f32.mrf.mxu0
    %v2583 = vpop.f32.mrf.mxu0
    %v2584 = vadd.f32 %v2295, %v2583
    %v2585 = vpop.f32.mrf.mxu0
    %2586 = vmatprep.mubr.bf16.mxu0 %v665
    %2587 = vmatmul.mubr.bf16.gmra.mxu0 %v664
    %v2588 = vpop.f32.mrf.mxu0
    %v2589 = vadd.f32 %v2300, %v2588
    %v2590 = vpop.f32.mrf.mxu0
    %v2591 = vpop.f32.mrf.mxu0
    %v2592 = vadd.f32 %v2303, %v2591
    %v2593 = vpop.f32.mrf.mxu0
    %2594 = vmatprep.mubr.bf16.mxu0 %v669
    %2595 = vmatmul.mubr.bf16.gmra.mxu0 %v668
    %v2596 = vpop.f32.mrf.mxu0
    %v2597 = vadd.f32 %v2308, %v2596
    %v2598 = vpop.f32.mrf.mxu0
    %v2599 = vpop.f32.mrf.mxu0
    %v2600 = vadd.f32 %v2311, %v2599
    %v2601 = vpop.f32.mrf.mxu0
    %2602 = vmatprep.mubr.bf16.mxu0 %v673
    %2603 = vmatmul.mubr.bf16.gmra.mxu0 %v672
    %v2604 = vpop.f32.mrf.mxu0
    %v2605 = vadd.f32 %v2316, %v2604
    %v2606 = vpop.f32.mrf.mxu0
    %v2607 = vpop.f32.mrf.mxu0
    %v2608 = vadd.f32 %v2319, %v2607
    %v2609 = vpop.f32.mrf.mxu0
    %2610 = vmatprep.mubr.bf16.mxu0 %v677
    %2611 = vmatmul.mubr.bf16.gmra.mxu0 %v676
    %v2612 = vpop.f32.mrf.mxu0
    %v2613 = vadd.f32 %v2324, %v2612
    %v2614 = vpop.f32.mrf.mxu0
    %v2615 = vpop.f32.mrf.mxu0
    %v2616 = vadd.f32 %v2327, %v2615
    %v2617 = vpop.f32.mrf.mxu0
    %2618 = vmatprep.mubr.bf16.mxu0 %v681
    %2619 = vmatmul.mubr.bf16.gmra.mxu0 %v680
    %v2620 = vpop.f32.mrf.mxu0
    %v2621 = vadd.f32 %v2332, %v2620
    %v2622 = vpop.f32.mrf.mxu0
    %v2623 = vpop.f32.mrf.mxu0
    %v2624 = vadd.f32 %v2335, %v2623
    %v2625 = vpop.f32.mrf.mxu0
    %2626 = vmatprep.mubr.bf16.mxu0 %v685
    %2627 = vmatmul.mubr.bf16.gmra.mxu0 %v684
    %v2628 = vpop.f32.mrf.mxu0
    %v2629 = vadd.f32 %v2340, %v2628
    %v2630 = vpop.f32.mrf.mxu0
    %v2631 = vpop.f32.mrf.mxu0
    %v2632 = vadd.f32 %v2343, %v2631
    %v2633 = vpop.f32.mrf.mxu0
    %2634 = vmatprep.mubr.bf16.mxu0 %v689
    %2635 = vmatmul.mubr.bf16.gmra.mxu0 %v688
    %v2636 = vpop.f32.mrf.mxu0
    %v2637 = vadd.f32 %v2348, %v2636
    %v2638 = vpop.f32.mrf.mxu0
    %v2639 = vpop.f32.mrf.mxu0
    %v2640 = vadd.f32 %v2351, %v2639
    %v2641 = vpop.f32.mrf.mxu0
    %2642 = vmatprep.mubr.bf16.mxu0 %v693
    %2643 = vmatmul.mubr.bf16.gmra.mxu0 %v692
    %v2644 = vpop.f32.mrf.mxu0
    %v2645 = vadd.f32 %v2356, %v2644
    %v2646 = vpop.f32.mrf.mxu0
    %v2647 = vpop.f32.mrf.mxu0
    %v2648 = vadd.f32 %v2359, %v2647
    %v2649 = vpop.f32.mrf.mxu0
    %2650 = vmatprep.mubr.bf16.mxu0 %v697
    %2651 = vmatmul.mubr.bf16.gmra.mxu0 %v696
    %v2652 = vpop.f32.mrf.mxu0
    %v2653 = vadd.f32 %v2364, %v2652
    %v2654 = vpop.f32.mrf.mxu0
    %v2655 = vpop.f32.mrf.mxu0
    %v2656 = vadd.f32 %v2367, %v2655
    %v2657 = vpop.f32.mrf.mxu0
    %2658 = vmatprep.mubr.bf16.mxu0 %v701
    %2659 = vmatmul.mubr.bf16.gmra.mxu0 %v700
    %v2660 = vpop.f32.mrf.mxu0
    %v2661 = vadd.f32 %v2372, %v2660
    %v2662 = vpop.f32.mrf.mxu0
    %v2663 = vpop.f32.mrf.mxu0
    %v2664 = vadd.f32 %v2375, %v2663
    %v2665 = vpop.f32.mrf.mxu0
    %2666 = vmatprep.mubr.bf16.mxu0 %v705
    %2667 = vmatmul.mubr.bf16.gmra.mxu0 %v704
    %v2668 = vpop.f32.mrf.mxu0
    %v2669 = vadd.f32 %v2380, %v2668
    %v2670 = vpop.f32.mrf.mxu0
    %v2671 = vpop.f32.mrf.mxu0
    %v2672 = vadd.f32 %v2383, %v2671
    %v2673 = vpop.f32.mrf.mxu0
    %2674 = vmatprep.mubr.bf16.mxu0 %v709
    %2675 = vmatmul.mubr.bf16.gmra.mxu0 %v708
    %v2676 = vpop.f32.mrf.mxu0
    %v2677 = vadd.f32 %v2388, %v2676
    %v2678 = vpop.f32.mrf.mxu0
    %v2679 = vpop.f32.mrf.mxu0
    %v2680 = vadd.f32 %v2391, %v2679
    %v2681 = vpop.f32.mrf.mxu0
    %2682 = vmatprep.mubr.bf16.mxu0 %v713
    %2683 = vmatmul.mubr.bf16.gmra.mxu0 %v712
    %v2684 = vpop.f32.mrf.mxu0
    %v2685 = vadd.f32 %v2396, %v2684
    %v2686 = vpop.f32.mrf.mxu0
    %v2687 = vpop.f32.mrf.mxu0
    %v2688 = vadd.f32 %v2399, %v2687
    %v2689 = vpop.f32.mrf.mxu0
    %2690 = vmatprep.mubr.bf16.mxu0 %v717
    %2691 = vmatmul.mubr.bf16.gmra.mxu0 %v716
    %v2692 = vpop.f32.mrf.mxu0
    %v2693 = vadd.f32 %v2404, %v2692
    %v2694 = vpop.f32.mrf.mxu0
    %v2695 = vpop.f32.mrf.mxu0
    %v2696 = vadd.f32 %v2407, %v2695
    %v2697 = vpop.f32.mrf.mxu0
    %2698 = vmatprep.mubr.bf16.mxu0 %v721
    %2699 = vmatmul.mubr.bf16.gmra.mxu0 %v720
    %v2700 = vpop.f32.mrf.mxu0
    %v2701 = vadd.f32 %v2412, %v2700
    %v2702 = vpop.f32.mrf.mxu0
    %v2703 = vpop.f32.mrf.mxu0
    %v2704 = vadd.f32 %v2415, %v2703
    %v2705 = vpop.f32.mrf.mxu0
    %2706 = vmatprep.mubr.bf16.mxu0 %v725
    %2707 = vmatmul.mubr.bf16.gmra.mxu0 %v724
    %v2708 = vpop.f32.mrf.mxu0
    %v2709 = vadd.f32 %v2420, %v2708
    %v2710 = vpop.f32.mrf.mxu0
    %v2711 = vpop.f32.mrf.mxu0
    %v2712 = vadd.f32 %v2423, %v2711
    %v2713 = vpop.f32.mrf.mxu0
    %2714 = vmatprep.mubr.bf16.mxu0 %v729
    %2715 = vmatmul.mubr.bf16.gmra.mxu0 %v728
    %v2716 = vpop.f32.mrf.mxu0
    %v2717 = vadd.f32 %v2428, %v2716
    %v2718 = vpop.f32.mrf.mxu0
    %v2719 = vpop.f32.mrf.mxu0
    %v2720 = vadd.f32 %v2431, %v2719
    %v2721 = vpop.f32.mrf.mxu0
    %2722 = vmatprep.mubr.bf16.mxu0 %v733
    %2723 = vmatmul.mubr.bf16.gmra.mxu0 %v732
    %v2724 = vpop.f32.mrf.mxu0
    %v2725 = vadd.f32 %v2436, %v2724
    %v2726 = vpop.f32.mrf.mxu0
    %v2727 = vpop.f32.mrf.mxu0
    %v2728 = vadd.f32 %v2439, %v2727
    %v2729 = vpop.f32.mrf.mxu0
    %2730 = vmatprep.mubr.bf16.mxu0 %v737
    %2731 = vmatmul.mubr.bf16.gmra.mxu0 %v736
    %v2732 = vpop.f32.mrf.mxu0
    %v2733 = vadd.f32 %v2444, %v2732
    %v2734 = vpop.f32.mrf.mxu0
    %v2735 = vpop.f32.mrf.mxu0
    %v2736 = vadd.f32 %v2447, %v2735
    %v2737 = vpop.f32.mrf.mxu0
    %2738 = vmatprep.mubr.bf16.mxu0 %v741
    %2739 = vmatmul.mubr.bf16.gmra.mxu0 %v740
    %v2740 = vpop.f32.mrf.mxu0
    %v2741 = vadd.f32 %v2452, %v2740
    %v2742 = vpop.f32.mrf.mxu0
    %v2743 = vpop.f32.mrf.mxu0
    %v2744 = vadd.f32 %v2455, %v2743
    %v2745 = vpop.f32.mrf.mxu0
    %2746 = vdwg.mxu0
    %v2747 = vpack.c.bf16 %v2496, %v2493
    %v2748 = vpack.c.bf16 %v2504, %v2501
    %v2749 = vpack.c.bf16 %v2512, %v2509
    %v2750 = vpack.c.bf16 %v2520, %v2517
    %v2751 = vpack.c.bf16 %v2528, %v2525
    %v2752 = vpack.c.bf16 %v2536, %v2533
    %v2753 = vpack.c.bf16 %v2544, %v2541
    %v2754 = vpack.c.bf16 %v2552, %v2549
    %v2755 = vpack.c.bf16 %v2560, %v2557
    %v2756 = vpack.c.bf16 %v2568, %v2565
    %v2757 = vpack.c.bf16 %v2576, %v2573
    %v2758 = vpack.c.bf16 %v2584, %v2581
    %v2759 = vpack.c.bf16 %v2592, %v2589
    %v2760 = vpack.c.bf16 %v2600, %v2597
    %v2761 = vpack.c.bf16 %v2608, %v2605
    %v2762 = vpack.c.bf16 %v2616, %v2613
    %v2763 = vpack.c.bf16 %v2624, %v2621
    %v2764 = vpack.c.bf16 %v2632, %v2629
    %v2765 = vpack.c.bf16 %v2640, %v2637
    %v2766 = vpack.c.bf16 %v2648, %v2645
    %v2767 = vpack.c.bf16 %v2656, %v2653
    %v2768 = vpack.c.bf16 %v2664, %v2661
    %v2769 = vpack.c.bf16 %v2672, %v2669
    %v2770 = vpack.c.bf16 %v2680, %v2677
    %v2771 = vpack.c.bf16 %v2688, %v2685
    %v2772 = vpack.c.bf16 %v2696, %v2693
    %v2773 = vpack.c.bf16 %v2704, %v2701
    %v2774 = vpack.c.bf16 %v2712, %v2709
    %v2775 = vpack.c.bf16 %v2720, %v2717
    %v2776 = vpack.c.bf16 %v2728, %v2725
    %v2777 = vpack.c.bf16 %v2736, %v2733
    %v2778 = vpack.c.bf16 %v2744, %v2741
    %v2779 = vld [vmem:[%s4] sm:$0xf]
    %v2780 = vld [vmem:[%s4 + $0x4] sm:$0xf]
    %v2781 = vld [vmem:[%s4 + $0x8] sm:$0xf]
    %v2782 = vld [vmem:[%s4 + $0xc] sm:$0xf]
    %v2783 = vld [vmem:[%s5] sm:$0x1]
    %v2785 = vlaneseq
    %v2786 = vshrl.u32 %v2785, 7
    %v2787 = vsub.s32 0, %v2786
    %v2788 = vrot.slane %v2783, %v2787
    %v2794 = vunpack.c.l.b16 %v2779
    %v2795 = vunpack.c.l.b16 %v2780
    %v2796 = vunpack.c.l.b16 %v2781
    %v2797 = vunpack.c.l.b16 %v2782
    %v2798 = vpack.c.b16 %v2795, %v2794
    %v2799 = vpack.c.b16 %v2797, %v2796
    %vm2802 = vcmask 261120
    %v2804 = vsel %vm2802, %v2747, 0
    %v2807 = vsel %vm2802, %v2748, 0
    %v2810 = vsel %vm2802, %v2749, 0
    %v2813 = vsel %vm2802, %v2750, 0
    %v2816 = vsel %vm2802, %v2751, 0
    %v2819 = vsel %vm2802, %v2752, 0
    %v2822 = vsel %vm2802, %v2753, 0
    %v2825 = vsel %vm2802, %v2754, 0
    %v2828 = vsel %vm2802, %v2755, 0
    %v2831 = vsel %vm2802, %v2756, 0
    %v2834 = vsel %vm2802, %v2757, 0
    %v2837 = vsel %vm2802, %v2758, 0
    %v2840 = vsel %vm2802, %v2759, 0
    %v2843 = vsel %vm2802, %v2760, 0
    %v2846 = vsel %vm2802, %v2761, 0
    %v2849 = vsel %vm2802, %v2762, 0
    %v2852 = vsel %vm2802, %v2763, 0
    %v2855 = vsel %vm2802, %v2764, 0
    %v2858 = vsel %vm2802, %v2765, 0
    %v2861 = vsel %vm2802, %v2766, 0
    %v2864 = vsel %vm2802, %v2767, 0
    %v2867 = vsel %vm2802, %v2768, 0
    %v2870 = vsel %vm2802, %v2769, 0
    %v2873 = vsel %vm2802, %v2770, 0
    %v2876 = vsel %vm2802, %v2771, 0
    %v2879 = vsel %vm2802, %v2772, 0
    %v2882 = vsel %vm2802, %v2773, 0
    %v2885 = vsel %vm2802, %v2774, 0
    %v2888 = vsel %vm2802, %v2775, 0
    %v2891 = vsel %vm2802, %v2776, 0
    %v2894 = vsel %vm2802, %v2777, 0
    %v2897 = vsel %vm2802, %v2778, 0
    %2899 = vmatprep.subr.bf16.mxu0 0
    %2900 = vmatpush1.bf16.msra.mxu0 0
    %2901 = vmatprep.subr.bf16.mxu0 0
    %2902 = vmatpush1.bf16.msra.mxu0 0
    %2903 = vmatprep.subr.bf16.mxu0 0
    %2904 = vmatpush1.bf16.msra.mxu0 0
    %2905 = vmatprep.subr.bf16.mxu0 0
    %2906 = vmatpush1.bf16.msra.mxu0 0
    %2907 = vmatprep.subr.bf16.mxu0 0
    %2908 = vmatpush1.bf16.msra.mxu0 0
    %2909 = vmatprep.subr.bf16.mxu0 0
    %2910 = vmatpush1.bf16.msra.mxu0 0
    %2911 = vmatprep.subr.bf16.mxu0 0
    %2912 = vmatpush1.bf16.msra.mxu0 %v2799
    %2913 = vmatprep.subr.bf16.mxu0 0
    %2914 = vmatpush1.bf16.msra.mxu0 %v2798
    %2915 = vmatprep.subr.bf16.mxu0 0
    %2916 = vmatpush2.bf16.msra.mxu0 0
    %2917 = vmatprep.subr.bf16.mxu0 0
    %2918 = vmatpush2.bf16.msra.mxu0 0
    %2919 = vmatprep.subr.bf16.mxu0 0
    %2920 = vmatpush2.bf16.msra.mxu0 0
    %2921 = vmatprep.subr.bf16.mxu0 0
    %2922 = vmatpush2.bf16.msra.mxu0 0
    %2923 = vmatprep.subr.bf16.mxu0 0
    %2924 = vmatpush2.bf16.msra.mxu0 0
    %2925 = vmatprep.subr.bf16.mxu0 0
    %2926 = vmatpush2.bf16.msra.mxu0 0
    %2927 = vmatprep.subr.bf16.mxu0 0
    %2928 = vmatpush2.bf16.msra.mxu0 0
    %2929 = vmatprep.subr.bf16.mxu0 0
    %2930 = vmatpush2.bf16.msra.mxu0 0
    %2931 = vmatprep.mubr.bf16.mxu0 0
    %2932 = vmatmul.mubr.bf16.gmra.mxu0 %v2804
    %v2933 = vpop.f32.mrf.mxu0
    %v2934 = vadd.f32 %v2788, %v2933
    %v2935 = vpop.f32.mrf.mxu0
    %v2936 = vpop.f32.mrf.mxu0
    %v2937 = vadd.f32 %v2788, %v2936
    %v2938 = vpop.f32.mrf.mxu0
    %2939 = vmatprep.mubr.bf16.mxu0 0
    %2940 = vmatmul.mubr.bf16.gmra.mxu0 %v2807
    %v2941 = vpop.f32.mrf.mxu0
    %v2942 = vadd.f32 %v2788, %v2941
    %v2943 = vpop.f32.mrf.mxu0
    %v2944 = vpop.f32.mrf.mxu0
    %v2945 = vadd.f32 %v2788, %v2944
    %v2946 = vpop.f32.mrf.mxu0
    %2947 = vmatprep.mubr.bf16.mxu0 0
    %2948 = vmatmul.mubr.bf16.gmra.mxu0 %v2810
    %v2949 = vpop.f32.mrf.mxu0
    %v2950 = vadd.f32 %v2788, %v2949
    %v2951 = vpop.f32.mrf.mxu0
    %v2952 = vpop.f32.mrf.mxu0
    %v2953 = vadd.f32 %v2788, %v2952
    %v2954 = vpop.f32.mrf.mxu0
    %2955 = vmatprep.mubr.bf16.mxu0 0
    %2956 = vmatmul.mubr.bf16.gmra.mxu0 %v2813
    %v2957 = vpop.f32.mrf.mxu0
    %v2958 = vadd.f32 %v2788, %v2957
    %v2959 = vpop.f32.mrf.mxu0
    %v2960 = vpop.f32.mrf.mxu0
    %v2961 = vadd.f32 %v2788, %v2960
    %v2962 = vpop.f32.mrf.mxu0
    %2963 = vmatprep.mubr.bf16.mxu0 0
    %2964 = vmatmul.mubr.bf16.gmra.mxu0 %v2816
    %v2965 = vpop.f32.mrf.mxu0
    %v2966 = vadd.f32 %v2788, %v2965
    %v2967 = vpop.f32.mrf.mxu0
    %v2968 = vpop.f32.mrf.mxu0
    %v2969 = vadd.f32 %v2788, %v2968
    %v2970 = vpop.f32.mrf.mxu0
    %2971 = vmatprep.mubr.bf16.mxu0 0
    %2972 = vmatmul.mubr.bf16.gmra.mxu0 %v2819
    %v2973 = vpop.f32.mrf.mxu0
    %v2974 = vadd.f32 %v2788, %v2973
    %v2975 = vpop.f32.mrf.mxu0
    %v2976 = vpop.f32.mrf.mxu0
    %v2977 = vadd.f32 %v2788, %v2976
    %v2978 = vpop.f32.mrf.mxu0
    %2979 = vmatprep.mubr.bf16.mxu0 0
    %2980 = vmatmul.mubr.bf16.gmra.mxu0 %v2822
    %v2981 = vpop.f32.mrf.mxu0
    %v2982 = vadd.f32 %v2788, %v2981
    %v2983 = vpop.f32.mrf.mxu0
    %v2984 = vpop.f32.mrf.mxu0
    %v2985 = vadd.f32 %v2788, %v2984
    %v2986 = vpop.f32.mrf.mxu0
    %2987 = vmatprep.mubr.bf16.mxu0 0
    %2988 = vmatmul.mubr.bf16.gmra.mxu0 %v2825
    %v2989 = vpop.f32.mrf.mxu0
    %v2990 = vadd.f32 %v2788, %v2989
    %v2991 = vpop.f32.mrf.mxu0
    %v2992 = vpop.f32.mrf.mxu0
    %v2993 = vadd.f32 %v2788, %v2992
    %v2994 = vpop.f32.mrf.mxu0
    %2995 = vmatprep.mubr.bf16.mxu0 0
    %2996 = vmatmul.mubr.bf16.gmra.mxu0 %v2828
    %v2997 = vpop.f32.mrf.mxu0
    %v2998 = vadd.f32 %v2788, %v2997
    %v2999 = vpop.f32.mrf.mxu0
    %v3000 = vpop.f32.mrf.mxu0
    %v3001 = vadd.f32 %v2788, %v3000
    %v3002 = vpop.f32.mrf.mxu0
    %3003 = vmatprep.mubr.bf16.mxu0 0
    %3004 = vmatmul.mubr.bf16.gmra.mxu0 %v2831
    %v3005 = vpop.f32.mrf.mxu0
    %v3006 = vadd.f32 %v2788, %v3005
    %v3007 = vpop.f32.mrf.mxu0
    %v3008 = vpop.f32.mrf.mxu0
    %v3009 = vadd.f32 %v2788, %v3008
    %v3010 = vpop.f32.mrf.mxu0
    %3011 = vmatprep.mubr.bf16.mxu0 0
    %3012 = vmatmul.mubr.bf16.gmra.mxu0 %v2834
    %v3013 = vpop.f32.mrf.mxu0
    %v3014 = vadd.f32 %v2788, %v3013
    %v3015 = vpop.f32.mrf.mxu0
    %v3016 = vpop.f32.mrf.mxu0
    %v3017 = vadd.f32 %v2788, %v3016
    %v3018 = vpop.f32.mrf.mxu0
    %3019 = vmatprep.mubr.bf16.mxu0 0
    %3020 = vmatmul.mubr.bf16.gmra.mxu0 %v2837
    %v3021 = vpop.f32.mrf.mxu0
    %v3022 = vadd.f32 %v2788, %v3021
    %v3023 = vpop.f32.mrf.mxu0
    %v3024 = vpop.f32.mrf.mxu0
    %v3025 = vadd.f32 %v2788, %v3024
    %v3026 = vpop.f32.mrf.mxu0
    %3027 = vmatprep.mubr.bf16.mxu0 0
    %3028 = vmatmul.mubr.bf16.gmra.mxu0 %v2840
    %v3029 = vpop.f32.mrf.mxu0
    %v3030 = vadd.f32 %v2788, %v3029
    %v3031 = vpop.f32.mrf.mxu0
    %v3032 = vpop.f32.mrf.mxu0
    %v3033 = vadd.f32 %v2788, %v3032
    %v3034 = vpop.f32.mrf.mxu0
    %3035 = vmatprep.mubr.bf16.mxu0 0
    %3036 = vmatmul.mubr.bf16.gmra.mxu0 %v2843
    %v3037 = vpop.f32.mrf.mxu0
    %v3038 = vadd.f32 %v2788, %v3037
    %v3039 = vpop.f32.mrf.mxu0
    %v3040 = vpop.f32.mrf.mxu0
    %v3041 = vadd.f32 %v2788, %v3040
    %v3042 = vpop.f32.mrf.mxu0
    %3043 = vmatprep.mubr.bf16.mxu0 0
    %3044 = vmatmul.mubr.bf16.gmra.mxu0 %v2846
    %v3045 = vpop.f32.mrf.mxu0
    %v3046 = vadd.f32 %v2788, %v3045
    %v3047 = vpop.f32.mrf.mxu0
    %v3048 = vpop.f32.mrf.mxu0
    %v3049 = vadd.f32 %v2788, %v3048
    %v3050 = vpop.f32.mrf.mxu0
    %3051 = vmatprep.mubr.bf16.mxu0 0
    %3052 = vmatmul.mubr.bf16.gmra.mxu0 %v2849
    %v3053 = vpop.f32.mrf.mxu0
    %v3054 = vadd.f32 %v2788, %v3053
    %v3055 = vpop.f32.mrf.mxu0
    %v3056 = vpop.f32.mrf.mxu0
    %v3057 = vadd.f32 %v2788, %v3056
    %v3058 = vpop.f32.mrf.mxu0
    %3059 = vmatprep.mubr.bf16.mxu0 0
    %3060 = vmatmul.mubr.bf16.gmra.mxu0 %v2852
    %v3061 = vpop.f32.mrf.mxu0
    %v3062 = vadd.f32 %v2788, %v3061
    %v3063 = vpop.f32.mrf.mxu0
    %v3064 = vpop.f32.mrf.mxu0
    %v3065 = vadd.f32 %v2788, %v3064
    %v3066 = vpop.f32.mrf.mxu0
    %3067 = vmatprep.mubr.bf16.mxu0 0
    %3068 = vmatmul.mubr.bf16.gmra.mxu0 %v2855
    %v3069 = vpop.f32.mrf.mxu0
    %v3070 = vadd.f32 %v2788, %v3069
    %v3071 = vpop.f32.mrf.mxu0
    %v3072 = vpop.f32.mrf.mxu0
    %v3073 = vadd.f32 %v2788, %v3072
    %v3074 = vpop.f32.mrf.mxu0
    %3075 = vmatprep.mubr.bf16.mxu0 0
    %3076 = vmatmul.mubr.bf16.gmra.mxu0 %v2858
    %v3077 = vpop.f32.mrf.mxu0
    %v3078 = vadd.f32 %v2788, %v3077
    %v3079 = vpop.f32.mrf.mxu0
    %v3080 = vpop.f32.mrf.mxu0
    %v3081 = vadd.f32 %v2788, %v3080
    %v3082 = vpop.f32.mrf.mxu0
    %3083 = vmatprep.mubr.bf16.mxu0 0
    %3084 = vmatmul.mubr.bf16.gmra.mxu0 %v2861
    %v3085 = vpop.f32.mrf.mxu0
    %v3086 = vadd.f32 %v2788, %v3085
    %v3087 = vpop.f32.mrf.mxu0
    %v3088 = vpop.f32.mrf.mxu0
    %v3089 = vadd.f32 %v2788, %v3088
    %v3090 = vpop.f32.mrf.mxu0
    %3091 = vmatprep.mubr.bf16.mxu0 0
    %3092 = vmatmul.mubr.bf16.gmra.mxu0 %v2864
    %v3093 = vpop.f32.mrf.mxu0
    %v3094 = vadd.f32 %v2788, %v3093
    %v3095 = vpop.f32.mrf.mxu0
    %v3096 = vpop.f32.mrf.mxu0
    %v3097 = vadd.f32 %v2788, %v3096
    %v3098 = vpop.f32.mrf.mxu0
    %3099 = vmatprep.mubr.bf16.mxu0 0
    %3100 = vmatmul.mubr.bf16.gmra.mxu0 %v2867
    %v3101 = vpop.f32.mrf.mxu0
    %v3102 = vadd.f32 %v2788, %v3101
    %v3103 = vpop.f32.mrf.mxu0
    %v3104 = vpop.f32.mrf.mxu0
    %v3105 = vadd.f32 %v2788, %v3104
    %v3106 = vpop.f32.mrf.mxu0
    %3107 = vmatprep.mubr.bf16.mxu0 0
    %3108 = vmatmul.mubr.bf16.gmra.mxu0 %v2870
    %v3109 = vpop.f32.mrf.mxu0
    %v3110 = vadd.f32 %v2788, %v3109
    %v3111 = vpop.f32.mrf.mxu0
    %v3112 = vpop.f32.mrf.mxu0
    %v3113 = vadd.f32 %v2788, %v3112
    %v3114 = vpop.f32.mrf.mxu0
    %3115 = vmatprep.mubr.bf16.mxu0 0
    %3116 = vmatmul.mubr.bf16.gmra.mxu0 %v2873
    %v3117 = vpop.f32.mrf.mxu0
    %v3118 = vadd.f32 %v2788, %v3117
    %v3119 = vpop.f32.mrf.mxu0
    %v3120 = vpop.f32.mrf.mxu0
    %v3121 = vadd.f32 %v2788, %v3120
    %v3122 = vpop.f32.mrf.mxu0
    %3123 = vmatprep.mubr.bf16.mxu0 0
    %3124 = vmatmul.mubr.bf16.gmra.mxu0 %v2876
    %v3125 = vpop.f32.mrf.mxu0
    %v3126 = vadd.f32 %v2788, %v3125
    %v3127 = vpop.f32.mrf.mxu0
    %v3128 = vpop.f32.mrf.mxu0
    %v3129 = vadd.f32 %v2788, %v3128
    %v3130 = vpop.f32.mrf.mxu0
    %3131 = vmatprep.mubr.bf16.mxu0 0
    %3132 = vmatmul.mubr.bf16.gmra.mxu0 %v2879
    %v3133 = vpop.f32.mrf.mxu0
    %v3134 = vadd.f32 %v2788, %v3133
    %v3135 = vpop.f32.mrf.mxu0
    %v3136 = vpop.f32.mrf.mxu0
    %v3137 = vadd.f32 %v2788, %v3136
    %v3138 = vpop.f32.mrf.mxu0
    %3139 = vmatprep.mubr.bf16.mxu0 0
    %3140 = vmatmul.mubr.bf16.gmra.mxu0 %v2882
    %v3141 = vpop.f32.mrf.mxu0
    %v3142 = vadd.f32 %v2788, %v3141
    %v3143 = vpop.f32.mrf.mxu0
    %v3144 = vpop.f32.mrf.mxu0
    %v3145 = vadd.f32 %v2788, %v3144
    %v3146 = vpop.f32.mrf.mxu0
    %3147 = vmatprep.mubr.bf16.mxu0 0
    %3148 = vmatmul.mubr.bf16.gmra.mxu0 %v2885
    %v3149 = vpop.f32.mrf.mxu0
    %v3150 = vadd.f32 %v2788, %v3149
    %v3151 = vpop.f32.mrf.mxu0
    %v3152 = vpop.f32.mrf.mxu0
    %v3153 = vadd.f32 %v2788, %v3152
    %v3154 = vpop.f32.mrf.mxu0
    %3155 = vmatprep.mubr.bf16.mxu0 0
    %3156 = vmatmul.mubr.bf16.gmra.mxu0 %v2888
    %v3157 = vpop.f32.mrf.mxu0
    %v3158 = vadd.f32 %v2788, %v3157
    %v3159 = vpop.f32.mrf.mxu0
    %v3160 = vpop.f32.mrf.mxu0
    %v3161 = vadd.f32 %v2788, %v3160
    %v3162 = vpop.f32.mrf.mxu0
    %3163 = vmatprep.mubr.bf16.mxu0 0
    %3164 = vmatmul.mubr.bf16.gmra.mxu0 %v2891
    %v3165 = vpop.f32.mrf.mxu0
    %v3166 = vadd.f32 %v2788, %v3165
    %v3167 = vpop.f32.mrf.mxu0
    %v3168 = vpop.f32.mrf.mxu0
    %v3169 = vadd.f32 %v2788, %v3168
    %v3170 = vpop.f32.mrf.mxu0
    %3171 = vmatprep.mubr.bf16.mxu0 0
    %3172 = vmatmul.mubr.bf16.gmra.mxu0 %v2894
    %v3173 = vpop.f32.mrf.mxu0
    %v3174 = vadd.f32 %v2788, %v3173
    %v3175 = vpop.f32.mrf.mxu0
    %v3176 = vpop.f32.mrf.mxu0
    %v3177 = vadd.f32 %v2788, %v3176
    %v3178 = vpop.f32.mrf.mxu0
    %3179 = vmatprep.mubr.bf16.mxu0 0
    %3180 = vmatmul.mubr.bf16.gmra.mxu0 %v2897
    %v3181 = vpop.f32.mrf.mxu0
    %v3182 = vadd.f32 %v2788, %v3181
    %v3183 = vpop.f32.mrf.mxu0
    %v3184 = vpop.f32.mrf.mxu0
    %v3185 = vadd.f32 %v2788, %v3184
    %v3186 = vpop.f32.mrf.mxu0
    %3187 = vdwg.mxu0
    %v3188 = vpack.c.bf16 %v2937, %v2934
    %v3189 = vpack.c.bf16 %v2945, %v2942
    %v3190 = vpack.c.bf16 %v2953, %v2950
    %v3191 = vpack.c.bf16 %v2961, %v2958
    %v3192 = vpack.c.bf16 %v2969, %v2966
    %v3193 = vpack.c.bf16 %v2977, %v2974
    %v3194 = vpack.c.bf16 %v2985, %v2982
    %v3195 = vpack.c.bf16 %v2993, %v2990
    %v3196 = vpack.c.bf16 %v3001, %v2998
    %v3197 = vpack.c.bf16 %v3009, %v3006
    %v3198 = vpack.c.bf16 %v3017, %v3014
    %v3199 = vpack.c.bf16 %v3025, %v3022
    %v3200 = vpack.c.bf16 %v3033, %v3030
    %v3201 = vpack.c.bf16 %v3041, %v3038
    %v3202 = vpack.c.bf16 %v3049, %v3046
    %v3203 = vpack.c.bf16 %v3057, %v3054
    %v3204 = vpack.c.bf16 %v3065, %v3062
    %v3205 = vpack.c.bf16 %v3073, %v3070
    %v3206 = vpack.c.bf16 %v3081, %v3078
    %v3207 = vpack.c.bf16 %v3089, %v3086
    %v3208 = vpack.c.bf16 %v3097, %v3094
    %v3209 = vpack.c.bf16 %v3105, %v3102
    %v3210 = vpack.c.bf16 %v3113, %v3110
    %v3211 = vpack.c.bf16 %v3121, %v3118
    %v3212 = vpack.c.bf16 %v3129, %v3126
    %v3213 = vpack.c.bf16 %v3137, %v3134
    %v3214 = vpack.c.bf16 %v3145, %v3142
    %v3215 = vpack.c.bf16 %v3153, %v3150
    %v3216 = vpack.c.bf16 %v3161, %v3158
    %v3217 = vpack.c.bf16 %v3169, %v3166
    %v3218 = vpack.c.bf16 %v3177, %v3174
    %v3219 = vpack.c.bf16 %v3185, %v3182
    %v3252 = vunpack.c.l.b16 %v3188
    %v3253 = vunpack.c.h.b16 %v3188
    %v3254 = vunpack.c.l.b16 %v3189
    %v3255 = vunpack.c.h.b16 %v3189
    %v3256 = vunpack.c.l.b16 %v3190
    %v3257 = vunpack.c.h.b16 %v3190
    %v3258 = vunpack.c.l.b16 %v3191
    %v3259 = vunpack.c.h.b16 %v3191
    %v3260 = vunpack.c.l.b16 %v3192
    %v3261 = vunpack.c.h.b16 %v3192
    %v3262 = vunpack.c.l.b16 %v3193
    %v3263 = vunpack.c.h.b16 %v3193
    %v3264 = vunpack.c.l.b16 %v3194
    %v3265 = vunpack.c.h.b16 %v3194
    %v3266 = vunpack.c.l.b16 %v3195
    %v3267 = vunpack.c.h.b16 %v3195
    %v3268 = vunpack.c.l.b16 %v3196
    %v3269 = vunpack.c.h.b16 %v3196
    %v3270 = vunpack.c.l.b16 %v3197
    %v3271 = vunpack.c.h.b16 %v3197
    %v3272 = vunpack.c.l.b16 %v3198
    %v3273 = vunpack.c.h.b16 %v3198
    %v3274 = vunpack.c.l.b16 %v3199
    %v3275 = vunpack.c.h.b16 %v3199
    %v3276 = vunpack.c.l.b16 %v3200
    %v3277 = vunpack.c.h.b16 %v3200
    %v3278 = vunpack.c.l.b16 %v3201
    %v3279 = vunpack.c.h.b16 %v3201
    %v3280 = vunpack.c.l.b16 %v3202
    %v3281 = vunpack.c.h.b16 %v3202
    %v3282 = vunpack.c.l.b16 %v3203
    %v3283 = vunpack.c.h.b16 %v3203
    %v3284 = vunpack.c.l.b16 %v3204
    %v3285 = vunpack.c.h.b16 %v3204
    %v3286 = vunpack.c.l.b16 %v3205
    %v3287 = vunpack.c.h.b16 %v3205
    %v3288 = vunpack.c.l.b16 %v3206
    %v3289 = vunpack.c.h.b16 %v3206
    %v3290 = vunpack.c.l.b16 %v3207
    %v3291 = vunpack.c.h.b16 %v3207
    %v3292 = vunpack.c.l.b16 %v3208
    %v3293 = vunpack.c.h.b16 %v3208
    %v3294 = vunpack.c.l.b16 %v3209
    %v3295 = vunpack.c.h.b16 %v3209
    %v3296 = vunpack.c.l.b16 %v3210
    %v3297 = vunpack.c.h.b16 %v3210
    %v3298 = vunpack.c.l.b16 %v3211
    %v3299 = vunpack.c.h.b16 %v3211
    %v3300 = vunpack.c.l.b16 %v3212
    %v3301 = vunpack.c.h.b16 %v3212
    %v3302 = vunpack.c.l.b16 %v3213
    %v3303 = vunpack.c.h.b16 %v3213
    %v3304 = vunpack.c.l.b16 %v3214
    %v3305 = vunpack.c.h.b16 %v3214
    %v3306 = vunpack.c.l.b16 %v3215
    %v3307 = vunpack.c.h.b16 %v3215
    %v3308 = vunpack.c.l.b16 %v3216
    %v3309 = vunpack.c.h.b16 %v3216
    %v3310 = vunpack.c.l.b16 %v3217
    %v3311 = vunpack.c.h.b16 %v3217
    %v3312 = vunpack.c.l.b16 %v3218
    %v3313 = vunpack.c.h.b16 %v3218
    %v3314 = vunpack.c.l.b16 %v3219
    %v3315 = vunpack.c.h.b16 %v3219
    %v3316 = vpack.c.b16 %v3252, %v3252
    %v3317 = vpack.c.b16 %v3253, %v3253
    %v3318 = vpack.c.b16 %v3254, %v3254
    %v3319 = vpack.c.b16 %v3255, %v3255
    %v3320 = vpack.c.b16 %v3256, %v3256
    %v3321 = vpack.c.b16 %v3257, %v3257
    %v3322 = vpack.c.b16 %v3258, %v3258
    %v3323 = vpack.c.b16 %v3259, %v3259
    %v3324 = vpack.c.b16 %v3260, %v3260
    %v3325 = vpack.c.b16 %v3261, %v3261
    %v3326 = vpack.c.b16 %v3262, %v3262
    %v3327 = vpack.c.b16 %v3263, %v3263
    %v3328 = vpack.c.b16 %v3264, %v3264
    %v3329 = vpack.c.b16 %v3265, %v3265
    %v3330 = vpack.c.b16 %v3266, %v3266
    %v3331 = vpack.c.b16 %v3267, %v3267
    %v3332 = vpack.c.b16 %v3268, %v3268
    %v3333 = vpack.c.b16 %v3269, %v3269
    %v3334 = vpack.c.b16 %v3270, %v3270
    %v3335 = vpack.c.b16 %v3271, %v3271
    %v3336 = vpack.c.b16 %v3272, %v3272
    %v3337 = vpack.c.b16 %v3273, %v3273
    %v3338 = vpack.c.b16 %v3274, %v3274
    %v3339 = vpack.c.b16 %v3275, %v3275
    %v3340 = vpack.c.b16 %v3276, %v3276
    %v3341 = vpack.c.b16 %v3277, %v3277
    %v3342 = vpack.c.b16 %v3278, %v3278
    %v3343 = vpack.c.b16 %v3279, %v3279
    %v3344 = vpack.c.b16 %v3280, %v3280
    %v3345 = vpack.c.b16 %v3281, %v3281
    %v3346 = vpack.c.b16 %v3282, %v3282
    %v3347 = vpack.c.b16 %v3283, %v3283
    %v3348 = vpack.c.b16 %v3284, %v3284
    %v3349 = vpack.c.b16 %v3285, %v3285
    %v3350 = vpack.c.b16 %v3286, %v3286
    %v3351 = vpack.c.b16 %v3287, %v3287
    %v3352 = vpack.c.b16 %v3288, %v3288
    %v3353 = vpack.c.b16 %v3289, %v3289
    %v3354 = vpack.c.b16 %v3290, %v3290
    %v3355 = vpack.c.b16 %v3291, %v3291
    %v3356 = vpack.c.b16 %v3292, %v3292
    %v3357 = vpack.c.b16 %v3293, %v3293
    %v3358 = vpack.c.b16 %v3294, %v3294
    %v3359 = vpack.c.b16 %v3295, %v3295
    %v3360 = vpack.c.b16 %v3296, %v3296
    %v3361 = vpack.c.b16 %v3297, %v3297
    %v3362 = vpack.c.b16 %v3298, %v3298
    %v3363 = vpack.c.b16 %v3299, %v3299
    %v3364 = vpack.c.b16 %v3300, %v3300
    %v3365 = vpack.c.b16 %v3301, %v3301
    %v3366 = vpack.c.b16 %v3302, %v3302
    %v3367 = vpack.c.b16 %v3303, %v3303
    %v3368 = vpack.c.b16 %v3304, %v3304
    %v3369 = vpack.c.b16 %v3305, %v3305
    %v3370 = vpack.c.b16 %v3306, %v3306
    %v3371 = vpack.c.b16 %v3307, %v3307
    %v3372 = vpack.c.b16 %v3308, %v3308
    %v3373 = vpack.c.b16 %v3309, %v3309
    %v3374 = vpack.c.b16 %v3310, %v3310
    %v3375 = vpack.c.b16 %v3311, %v3311
    %v3376 = vpack.c.b16 %v3312, %v3312
    %v3377 = vpack.c.b16 %v3313, %v3313
    %v3378 = vpack.c.b16 %v3314, %v3314
    %v3379 = vpack.c.b16 %v3315, %v3315
    %3444 = vst [vmem:[%s6] sm:$0xf] %v3316
    %3445 = vst [vmem:[%s6 + $0x4] sm:$0xf] %v3317
    %3446 = vst [vmem:[%s6 + $0x8] sm:$0xf] %v3318
    %3447 = vst [vmem:[%s6 + $0xc] sm:$0xf] %v3319
    %3448 = vst [vmem:[%s6 + $0x10] sm:$0xf] %v3320
    %3449 = vst [vmem:[%s6 + $0x14] sm:$0xf] %v3321
    %3450 = vst [vmem:[%s6 + $0x18] sm:$0xf] %v3322
    %3451 = vst [vmem:[%s6 + $0x1c] sm:$0xf] %v3323
    %3452 = vst [vmem:[%s6 + $0x20] sm:$0xf] %v3324
    %3453 = vst [vmem:[%s6 + $0x24] sm:$0xf] %v3325
    %3454 = vst [vmem:[%s6 + $0x28] sm:$0xf] %v3326
    %3455 = vst [vmem:[%s6 + $0x2c] sm:$0xf] %v3327
    %3456 = vst [vmem:[%s6 + $0x30] sm:$0xf] %v3328
    %3457 = vst [vmem:[%s6 + $0x34] sm:$0xf] %v3329
    %3458 = vst [vmem:[%s6 + $0x38] sm:$0xf] %v3330
    %3459 = vst [vmem:[%s6 + $0x3c] sm:$0xf] %v3331
    %3460 = vst [vmem:[%s6 + $0x40] sm:$0xf] %v3332
    %3461 = vst [vmem:[%s6 + $0x44] sm:$0xf] %v3333
    %3462 = vst [vmem:[%s6 + $0x48] sm:$0xf] %v3334
    %3463 = vst [vmem:[%s6 + $0x4c] sm:$0xf] %v3335
    %3464 = vst [vmem:[%s6 + $0x50] sm:$0xf] %v3336
    %3465 = vst [vmem:[%s6 + $0x54] sm:$0xf] %v3337
    %3466 = vst [vmem:[%s6 + $0x58] sm:$0xf] %v3338
    %3467 = vst [vmem:[%s6 + $0x5c] sm:$0xf] %v3339
    %3468 = vst [vmem:[%s6 + $0x60] sm:$0xf] %v3340
    %3469 = vst [vmem:[%s6 + $0x64] sm:$0xf] %v3341
    %3470 = vst [vmem:[%s6 + $0x68] sm:$0xf] %v3342
    %3471 = vst [vmem:[%s6 + $0x6c] sm:$0xf] %v3343
    %3472 = vst [vmem:[%s6 + $0x70] sm:$0xf] %v3344
    %3473 = vst [vmem:[%s6 + $0x74] sm:$0xf] %v3345
    %3474 = vst [vmem:[%s6 + $0x78] sm:$0xf] %v3346
    %3475 = vst [vmem:[%s6 + $0x7c] sm:$0xf] %v3347
    %3476 = vst [vmem:[%s6 + $0x80] sm:$0xf] %v3348
    %3477 = vst [vmem:[%s6 + $0x84] sm:$0xf] %v3349
    %3478 = vst [vmem:[%s6 + $0x88] sm:$0xf] %v3350
    %3479 = vst [vmem:[%s6 + $0x8c] sm:$0xf] %v3351
    %3480 = vst [vmem:[%s6 + $0x90] sm:$0xf] %v3352
    %3481 = vst [vmem:[%s6 + $0x94] sm:$0xf] %v3353
    %3482 = vst [vmem:[%s6 + $0x98] sm:$0xf] %v3354
    %3483 = vst [vmem:[%s6 + $0x9c] sm:$0xf] %v3355
    %3484 = vst [vmem:[%s6 + $0xa0] sm:$0xf] %v3356
    %3485 = vst [vmem:[%s6 + $0xa4] sm:$0xf] %v3357
    %3486 = vst [vmem:[%s6 + $0xa8] sm:$0xf] %v3358
    %3487 = vst [vmem:[%s6 + $0xac] sm:$0xf] %v3359
    %3488 = vst [vmem:[%s6 + $0xb0] sm:$0xf] %v3360
    %3489 = vst [vmem:[%s6 + $0xb4] sm:$0xf] %v3361
    %3490 = vst [vmem:[%s6 + $0xb8] sm:$0xf] %v3362
    %3491 = vst [vmem:[%s6 + $0xbc] sm:$0xf] %v3363
    %3492 = vst [vmem:[%s6 + $0xc0] sm:$0xf] %v3364
    %3493 = vst [vmem:[%s6 + $0xc4] sm:$0xf] %v3365
    %3494 = vst [vmem:[%s6 + $0xc8] sm:$0xf] %v3366
    %3495 = vst [vmem:[%s6 + $0xcc] sm:$0xf] %v3367
    %3496 = vst [vmem:[%s6 + $0xd0] sm:$0xf] %v3368
    %3497 = vst [vmem:[%s6 + $0xd4] sm:$0xf] %v3369
    %3498 = vst [vmem:[%s6 + $0xd8] sm:$0xf] %v3370
    %3499 = vst [vmem:[%s6 + $0xdc] sm:$0xf] %v3371
    %3500 = vst [vmem:[%s6 + $0xe0] sm:$0xf] %v3372
    %3501 = vst [vmem:[%s6 + $0xe4] sm:$0xf] %v3373
    %3502 = vst [vmem:[%s6 + $0xe8] sm:$0xf] %v3374
    %3503 = vst [vmem:[%s6 + $0xec] sm:$0xf] %v3375
    %3504 = vst [vmem:[%s6 + $0xf0] sm:$0xf] %v3376
    %3505 = vst [vmem:[%s6 + $0xf4] sm:$0xf] %v3377
    %3506 = vst [vmem:[%s6 + $0xf8] sm:$0xf] %v3378
    %3507 = vst [vmem:[%s6 + $0xfc] sm:$0xf] %v3379
    // Predicated region
    $region30: #{gcn_forward.1} parent=1 // pred_check
      _
    $region31: #{gcn_forward.1} parent=1 // pred_check_branch
      %3509 = sbr.rel (0) target = $region33
    $region32: #{gcn_forward.1} parent=1 // pred_region
      _
    $region33: #{gcn_forward.1} parent=1 // pred_fallthru
      _
    // Predicated region
    $region34: #{gcn_forward.1} parent=1 // pred_check
      _
    $region35: #{gcn_forward.1} parent=1 // pred_check_branch
      %3511 = sbr.rel (0) target = $region37
    $region36: #{gcn_forward.1} parent=1 // pred_region
      _
    $region37: #{gcn_forward.1} parent=1 // pred_fallthru
      _
    %3512 = vsyncpa [#allocation3], 1

</llo_original>
